<compile_context>
chip_gen: v5e
topology: v5e:2x2
jax: 0.10.0
libtpu: 0.0.40
codegen_flags: <defaults>
</compile_context>

<pallas_src>
import jax
import jax.numpy as jnp
from jax.experimental import pallas as pl
from jax.experimental.pallas import tpu as pltpu


CHANNELS = [1, 4, 8, 8, 8, 4, 1]
LATENT_DIM = 16
HIDDEN_DIM = CHANNELS[3] * 4 * 4  # 128
BN_EPS = 1e-5


def _gelu(x):
    # TODO(synk): source module references a custom `GELU()` class that is not
    # defined in the snippet; using the standard tanh-approximate GELU.
    c = 0.7978845608028654  # sqrt(2/pi)
    return 0.5 * x * (1.0 + jnp.tanh(c * (x + 0.044715 * x * x * x)))


def _sigmoid(x):
    # numerically-stable sigmoid via tanh (single EUP op)
    return 0.5 * (jnp.tanh(0.5 * x) + 1.0)


# ----------------------------------------------------------------------------
# The single fused kernel
# ----------------------------------------------------------------------------
def _vae_kernel(x_ref,
                we1, be1, pe1, ge1, oe1,
                we2, be2, pe2, ge2, oe2,
                we3, be3, pe3, ge3, oe3,
                wfc, bfc,
                wdf, bdf,
                wd1, bd1, pd1, gd1, od1,
                wd2, bd2, pd2, gd2, od2,
                wd3, bd3,
                xrec_ref, zt_ref,
                d3_scr):
    f32 = jnp.float32
    nb = zt_ref.shape[1]      # batch size B
    c3 = CHANNELS[3]          # 8 bottleneck channels

    def affine(w, b, x):
        # conv / conv-transpose / linear as a single matmul + per-row bias
        return jnp.dot(w[...], x, preferred_element_type=f32) + b[...]

    def bnorm(p, g, o, x):
        # Training-mode BatchNorm2d (biased variance).  `p` is the host-built
        # per-row channel-averaging matrix (already divided by the per-channel
        # element count); `g`/`o` are gamma/beta expanded to per-row vectors.
        mean = jnp.dot(p[...], jnp.sum(x, axis=1, keepdims=True),
                       preferred_element_type=f32)
        d = x - mean
        var = jnp.dot(p[...], jnp.sum(d * d, axis=1, keepdims=True),
                      preferred_element_type=f32)
        return d * jax.lax.rsqrt(var + BN_EPS) * g[...] + o[...]

    # ---------------- inference network (encoder) ----------------
    a = x_ref[...]                                           # (64, 16*B)
    a = bnorm(pe1, ge1, oe1, _gelu(affine(we1, be1, a)))     # (64, 16*B)
    a = bnorm(pe2, ge2, oe2, _gelu(affine(we2, be2, a)))     # (32, 16*B)
    a = bnorm(pe3, ge3, oe3, _gelu(affine(we3, be3, a)))     # (8,  16*B)

    # fc_latent: PyTorch's (c3, h3, w3) flatten is absorbed into the column
    # layout; contract per-p3 column block against the regrouped weight.
    wfc_v = wfc[...]                                         # (16, 128)
    acc = jnp.zeros((zt_ref.shape[0], nb), f32)
    for p3 in range(16):
        acc = acc + jnp.dot(wfc_v[:, p3 * c3:(p3 + 1) * c3],
                            a[:, p3 * nb:(p3 + 1) * nb],
                            preferred_element_type=f32)
    zt = _gelu(acc + bfc[...])                               # (16, B)
    zt_ref[...] = zt

    # ---------------- generative network (decoder) ----------------
    h = _gelu(jnp.dot(wdf[...], zt, preferred_element_type=f32) + bdf[...])  # (128, B)
    # UnFlatten: scatter (p3, c) rows into the (c, (p3, b)) column layout.
    for p3 in range(16):
        d3_scr[:, p3 * nb:(p3 + 1) * nb] = h[p3 * c3:(p3 + 1) * c3, :]
    d = d3_scr[...]                                          # (8,  16*B)
    d = bnorm(pd1, gd1, od1, _gelu(affine(wd1, bd1, d)))     # (32, 16*B)
    d = bnorm(pd2, gd2, od2, _gelu(affine(wd2, bd2, d)))     # (64, 16*B)
    xrec_ref[...] = _sigmoid(affine(wd3, bd3, d))            # (64, 16*B)


# ----------------------------------------------------------------------------
# Host-side parameter repacking (tiny layout plumbing, done once per call)
# ----------------------------------------------------------------------------
def _conv_matrix(w, s_out):
    """Conv2d(k=2,s=2) weight (Cout,Cin,2,2) -> (S_out*Cout, 4*S_out*Cin)."""
    co, ci = w.shape[0], w.shape[1]
    blk = jnp.transpose(w.astype(jnp.float32), (0, 2, 3, 1)).reshape(co, 4 * ci)
    return jnp.kron(jnp.eye(s_out, dtype=jnp.float32), blk)


def _convT_matrix(w, s_in):
    """ConvTranspose2d(k=2,s=2) weight (Cin,Cout,2,2) -> (4*S_in*Cout, S_in*Cin)."""
    ci, co = w.shape[0], w.shape[1]
    blk = jnp.transpose(w.astype(jnp.float32).reshape(ci, co, 4), (2, 1, 0))
    blk = blk.reshape(4 * co, ci)
    return jnp.kron(jnp.eye(s_in, dtype=jnp.float32), blk)


def _rowvec(v, s):
    """Per-channel vector (C,) -> per-row column vector (S*C, 1)."""
    return jnp.tile(v.astype(jnp.float32), s).reshape(-1, 1)


def _bn_avg(c, s, ncols):
    """Per-row channel-averaging matrix (S*C, S*C), divided by element count."""
    m = jnp.kron(jnp.ones((s, s), jnp.float32), jnp.eye(c, dtype=jnp.float32))
    return m / float(s * ncols)


def vae_forward(x_nchw, p):
    B = x_nchw.shape[0]
    M = 16 * B                 # lane width inside the kernel
    c = CHANNELS

    # input NCHW -> rows = Morton index within 8x8 block, cols = (h3, w3, b)
    xr = x_nchw.reshape(B, 4, 2, 2, 2, 4, 2, 2, 2)   # b h3 dh2 dh1 dh0 w3 dw2 dw1 dw0
    xk = jnp.transpose(xr, (2, 6, 3, 7, 4, 8, 1, 5, 0)).reshape(64, M)
    xk = xk.astype(jnp.float32)

    ins = [xk]
    # encoder conv layers (S_out = 16, 4, 1)
    ins += [_conv_matrix(p["enc_w1"], 16), _rowvec(p["enc_b1"], 16),
            _bn_avg(c[1], 16, M), _rowvec(p["enc_g1"], 16), _rowvec(p["enc_be1"], 16)]
    ins += [_conv_matrix(p["enc_w2"], 4), _rowvec(p["enc_b2"], 4),
            _bn_avg(c[2], 4, M), _rowvec(p["enc_g2"], 4), _rowvec(p["enc_be2"], 4)]
    ins += [_conv_matrix(p["enc_w3"], 1), _rowvec(p["enc_b3"], 1),
            _bn_avg(c[3], 1, M), _rowvec(p["enc_g3"], 1), _rowvec(p["enc_be3"], 1)]
    # fc_latent: regroup columns from (c3, p3) to (p3, c3)
    wfc = jnp.transpose(p["fc_w"].reshape(LATENT_DIM, c[3], 16), (0, 2, 1))
    ins += [wfc.reshape(LATENT_DIM, HIDDEN_DIM).astype(jnp.float32),
            p["fc_b"].astype(jnp.float32).reshape(LATENT_DIM, 1)]
    # decoder fc: regroup rows from (c3, p3) to (p3, c3)
    wdf = jnp.transpose(p["dec_fc_w"].reshape(c[3], 16, LATENT_DIM), (1, 0, 2))
    bdf = jnp.transpose(p["dec_fc_b"].reshape(c[3], 16), (1, 0))
    ins += [wdf.reshape(HIDDEN_DIM, LATENT_DIM).astype(jnp.float32),
            bdf.reshape(HIDDEN_DIM, 1).astype(jnp.float32)]
    # decoder conv-transpose layers (S_in = 1, 4, 16)
    ins += [_convT_matrix(p["dec_w1"], 1), _rowvec(p["dec_b1"], 4),
            _bn_avg(c[4], 4, M), _rowvec(p["dec_g1"], 4), _rowvec(p["dec_be1"], 4)]
    ins += [_convT_matrix(p["dec_w2"], 4), _rowvec(p["dec_b2"], 16),
            _bn_avg(c[5], 16, M), _rowvec(p["dec_g2"], 16), _rowvec(p["dec_be2"], 16)]
    ins += [_convT_matrix(p["dec_w3"], 16), _rowvec(p["dec_b3"], 64)]

    vmem = pl.BlockSpec(memory_space=pltpu.MemorySpace.VMEM)
    xrec_k, zt = pl.pallas_call(
        _vae_kernel,
        out_shape=(jax.ShapeDtypeStruct((64, M), jnp.float32),
                   jax.ShapeDtypeStruct((LATENT_DIM, B), jnp.float32)),
        in_specs=[vmem] * len(ins),
        out_specs=(vmem, vmem),
        scratch_shapes=[pltpu.VMEM((c[3], M), jnp.float32)],
    )(*ins)

    # Morton layout back to NCHW
    xo = xrec_k.reshape(2, 2, 2, 2, 2, 2, 4, 4, B)   # dh2 dw2 dh1 dw1 dh0 dw0 h3 w3 b
    x_rec = jnp.transpose(xo, (8, 6, 0, 2, 4, 7, 1, 3, 5)).reshape(B, 1, 32, 32)
    z = jnp.transpose(zt, (1, 0))                    # (B, latent_dim)
    return x_rec, z


# ----------------------------------------------------------------------------
# Deterministic parameter initialization (synthetic, PyTorch layouts)
# ----------------------------------------------------------------------------
def init_params(key):
    ks = jax.random.split(key, 16)
    c = CHANNELS

    def n(k, shape, scale=0.1):
        return scale * jax.random.normal(k, shape, dtype=jnp.float32)

    return {
        # encoder convs: Conv2d weight (Cout, Cin, 2, 2)
        "enc_w1": n(ks[0], (c[1], c[0], 2, 2)), "enc_b1": jnp.zeros((c[1],), jnp.float32),
        "enc_g1": jnp.ones((c[1],), jnp.float32), "enc_be1": jnp.zeros((c[1],), jnp.float32),
        "enc_w2": n(ks[1], (c[2], c[1], 2, 2)), "enc_b2": jnp.zeros((c[2],), jnp.float32),
        "enc_g2": jnp.ones((c[2],), jnp.float32), "enc_be2": jnp.zeros((c[2],), jnp.float32),
        "enc_w3": n(ks[2], (c[3], c[2], 2, 2)), "enc_b3": jnp.zeros((c[3],), jnp.float32),
        "enc_g3": jnp.ones((c[3],), jnp.float32), "enc_be3": jnp.zeros((c[3],), jnp.float32),
        # fc_latent: Linear(hidden_dim -> latent_dim), weight (out, in)
        "fc_w": n(ks[3], (LATENT_DIM, HIDDEN_DIM)), "fc_b": jnp.zeros((LATENT_DIM,), jnp.float32),
        # decoder fc: Linear(latent_dim -> hidden_dim)
        "dec_fc_w": n(ks[4], (HIDDEN_DIM, LATENT_DIM)), "dec_fc_b": jnp.zeros((HIDDEN_DIM,), jnp.float32),
        # decoder conv-transposes: weight (Cin, Cout, 2, 2)
        "dec_w1": n(ks[5], (c[3], c[4], 2, 2)), "dec_b1": jnp.zeros((c[4],), jnp.float32),
        "dec_g1": jnp.ones((c[4],), jnp.float32), "dec_be1": jnp.zeros((c[4],), jnp.float32),
        "dec_w2": n(ks[6], (c[4], c[5], 2, 2)), "dec_b2": jnp.zeros((c[5],), jnp.float32),
        "dec_g2": jnp.ones((c[5],), jnp.float32), "dec_be2": jnp.zeros((c[5],), jnp.float32),
        "dec_w3": n(ks[7], (c[5], c[6], 2, 2)), "dec_b3": jnp.zeros((c[6],), jnp.float32),
    }


if __name__ == "__main__":
    key = jax.random.PRNGKey(0)
    k_x, k_p = jax.random.split(key)
    x = jax.random.normal(k_x, (2, 1, 32, 32), dtype=jnp.float32)  # NCHW like PyTorch
    params = init_params(k_p)

    fwd = jax.jit(vae_forward)
    x_rec, z = fwd(x, params)
    jax.block_until_ready((x_rec, z))

    assert x_rec.shape == (2, 1, 32, 32), x_rec.shape
    assert z.shape == (2, LATENT_DIM), z.shape
    assert bool(jnp.all(jnp.isfinite(x_rec))) and bool(jnp.all(jnp.isfinite(z)))
    assert bool(jnp.all(x_rec >= 0.0)) and bool(jnp.all(x_rec <= 1.0))  # sigmoid output
    print("KERNEL_OK")
</pallas_src>

<mosaic_0001>
module attributes {stable_mosaic.version = 11 : i64} {
  func.func @_vae_kernel(%arg0: memref<64x32xf32, #tpu.memory_space<vmem>>, %arg1: memref<64x64xf32, #tpu.memory_space<vmem>>, %arg2: memref<64x1xf32, #tpu.memory_space<vmem>>, %arg3: memref<64x64xf32, #tpu.memory_space<vmem>>, %arg4: memref<64x1xf32, #tpu.memory_space<vmem>>, %arg5: memref<64x1xf32, #tpu.memory_space<vmem>>, %arg6: memref<32x64xf32, #tpu.memory_space<vmem>>, %arg7: memref<32x1xf32, #tpu.memory_space<vmem>>, %arg8: memref<32x32xf32, #tpu.memory_space<vmem>>, %arg9: memref<32x1xf32, #tpu.memory_space<vmem>>, %arg10: memref<32x1xf32, #tpu.memory_space<vmem>>, %arg11: memref<8x32xf32, #tpu.memory_space<vmem>>, %arg12: memref<8x1xf32, #tpu.memory_space<vmem>>, %arg13: memref<8x8xf32, #tpu.memory_space<vmem>>, %arg14: memref<8x1xf32, #tpu.memory_space<vmem>>, %arg15: memref<8x1xf32, #tpu.memory_space<vmem>>, %arg16: memref<16x128xf32, #tpu.memory_space<vmem>>, %arg17: memref<16x1xf32, #tpu.memory_space<vmem>>, %arg18: memref<128x16xf32, #tpu.memory_space<vmem>>, %arg19: memref<128x1xf32, #tpu.memory_space<vmem>>, %arg20: memref<32x8xf32, #tpu.memory_space<vmem>>, %arg21: memref<32x1xf32, #tpu.memory_space<vmem>>, %arg22: memref<32x32xf32, #tpu.memory_space<vmem>>, %arg23: memref<32x1xf32, #tpu.memory_space<vmem>>, %arg24: memref<32x1xf32, #tpu.memory_space<vmem>>, %arg25: memref<64x32xf32, #tpu.memory_space<vmem>>, %arg26: memref<64x1xf32, #tpu.memory_space<vmem>>, %arg27: memref<64x64xf32, #tpu.memory_space<vmem>>, %arg28: memref<64x1xf32, #tpu.memory_space<vmem>>, %arg29: memref<64x1xf32, #tpu.memory_space<vmem>>, %arg30: memref<64x64xf32, #tpu.memory_space<vmem>>, %arg31: memref<64x1xf32, #tpu.memory_space<vmem>>, %arg32: memref<64x32xf32, #tpu.memory_space<vmem>>, %arg33: memref<16x2xf32, #tpu.memory_space<vmem>>, %arg34: memref<8x32xf32, #tpu.memory_space<vmem>>) attributes {dimension_semantics = [], scalar_prefetch = 0 : i64, scratch_operands = 1 : i64, tpu.core_type = #tpu.core_type<tc>} {
    %c0 = arith.constant 0 : index
    %c0_0 = arith.constant 0 : index
    %0 = vector.load %arg0[%c0, %c0_0] : memref<64x32xf32, #tpu.memory_space<vmem>>, vector<64x32xf32>
    %c0_1 = arith.constant 0 : index
    %c0_2 = arith.constant 0 : index
    %1 = vector.load %arg1[%c0_1, %c0_2] : memref<64x64xf32, #tpu.memory_space<vmem>>, vector<64x64xf32>
    %cst = arith.constant dense<0.000000e+00> : vector<64x32xf32>
    %2 = tpu.matmul %1, %0, %cst {dimension_numbers = #tpu.dot_dimension_numbers<[1], [0], [0], [1], [0, 0, 1, 1], [], []>} : vector<64x64xf32>, vector<64x32xf32>, vector<64x32xf32> -> vector<64x32xf32>
    %c0_3 = arith.constant 0 : index
    %c0_4 = arith.constant 0 : index
    %3 = vector.load %arg2[%c0_3, %c0_4] : memref<64x1xf32, #tpu.memory_space<vmem>>, vector<64x1xf32>
    %4 = vector.broadcast %3 : vector<64x1xf32> to vector<64x32xf32>
    %5 = arith.addf %2, %4 : vector<64x32xf32>
    %cst_5 = arith.constant 5.000000e-01 : f32
    %6 = vector.broadcast %cst_5 : f32 to vector<64x32xf32>
    %7 = arith.mulf %6, %5 : vector<64x32xf32>
    %cst_6 = arith.constant 4.471500e-02 : f32
    %8 = vector.broadcast %cst_6 : f32 to vector<64x32xf32>
    %9 = arith.mulf %8, %5 : vector<64x32xf32>
    %10 = arith.mulf %9, %5 : vector<64x32xf32>
    %11 = arith.mulf %10, %5 : vector<64x32xf32>
    %12 = arith.addf %5, %11 : vector<64x32xf32>
    %cst_7 = arith.constant 0.797884583 : f32
    %13 = vector.broadcast %cst_7 : f32 to vector<64x32xf32>
    %14 = arith.mulf %13, %12 : vector<64x32xf32>
    %15 = math.tanh %14 : vector<64x32xf32>
    %cst_8 = arith.constant 1.000000e+00 : f32
    %16 = vector.broadcast %cst_8 : f32 to vector<64x32xf32>
    %17 = arith.addf %16, %15 : vector<64x32xf32>
    %18 = arith.mulf %7, %17 : vector<64x32xf32>
    %c0_9 = arith.constant 0 : index
    %c0_10 = arith.constant 0 : index
    %19 = vector.load %arg3[%c0_9, %c0_10] : memref<64x64xf32, #tpu.memory_space<vmem>>, vector<64x64xf32>
    %cst_11 = arith.constant dense<0.000000e+00> : vector<64xf32>
    %20 = vector.multi_reduction <add>, %18, %cst_11 [1] : vector<64x32xf32> to vector<64xf32>
    %21 = vector.shape_cast %20 : vector<64xf32> to vector<64x1xf32>
    %cst_12 = arith.constant dense<0.000000e+00> : vector<64x1xf32>
    %22 = tpu.matmul %19, %21, %cst_12 {dimension_numbers = #tpu.dot_dimension_numbers<[1], [0], [0], [1], [0, 0, 1, 1], [], []>} : vector<64x64xf32>, vector<64x1xf32>, vector<64x1xf32> -> vector<64x1xf32>
    %23 = vector.broadcast %22 : vector<64x1xf32> to vector<64x32xf32>
    %24 = arith.subf %18, %23 : vector<64x32xf32>
    %c0_13 = arith.constant 0 : index
    %c0_14 = arith.constant 0 : index
    %25 = vector.load %arg3[%c0_13, %c0_14] : memref<64x64xf32, #tpu.memory_space<vmem>>, vector<64x64xf32>
    %26 = arith.mulf %24, %24 : vector<64x32xf32>
    %cst_15 = arith.constant dense<0.000000e+00> : vector<64xf32>
    %27 = vector.multi_reduction <add>, %26, %cst_15 [1] : vector<64x32xf32> to vector<64xf32>
    %28 = vector.shape_cast %27 : vector<64xf32> to vector<64x1xf32>
    %cst_16 = arith.constant dense<0.000000e+00> : vector<64x1xf32>
    %29 = tpu.matmul %25, %28, %cst_16 {dimension_numbers = #tpu.dot_dimension_numbers<[1], [0], [0], [1], [0, 0, 1, 1], [], []>} : vector<64x64xf32>, vector<64x1xf32>, vector<64x1xf32> -> vector<64x1xf32>
    %cst_17 = arith.constant 9.99999974E-6 : f32
    %30 = vector.broadcast %cst_17 : f32 to vector<64x1xf32>
    %31 = arith.addf %29, %30 : vector<64x1xf32>
    %32 = math.rsqrt %31 : vector<64x1xf32>
    %33 = vector.broadcast %32 : vector<64x1xf32> to vector<64x32xf32>
    %34 = arith.mulf %24, %33 : vector<64x32xf32>
    %c0_18 = arith.constant 0 : index
    %c0_19 = arith.constant 0 : index
    %35 = vector.load %arg4[%c0_18, %c0_19] : memref<64x1xf32, #tpu.memory_space<vmem>>, vector<64x1xf32>
    %36 = vector.broadcast %35 : vector<64x1xf32> to vector<64x32xf32>
    %37 = arith.mulf %34, %36 : vector<64x32xf32>
    %c0_20 = arith.constant 0 : index
    %c0_21 = arith.constant 0 : index
    %38 = vector.load %arg5[%c0_20, %c0_21] : memref<64x1xf32, #tpu.memory_space<vmem>>, vector<64x1xf32>
    %39 = vector.broadcast %38 : vector<64x1xf32> to vector<64x32xf32>
    %40 = arith.addf %37, %39 : vector<64x32xf32>
    %c0_22 = arith.constant 0 : index
    %c0_23 = arith.constant 0 : index
    %41 = vector.load %arg6[%c0_22, %c0_23] : memref<32x64xf32, #tpu.memory_space<vmem>>, vector<32x64xf32>
    %cst_24 = arith.constant dense<0.000000e+00> : vector<32x32xf32>
    %42 = tpu.matmul %41, %40, %cst_24 {dimension_numbers = #tpu.dot_dimension_numbers<[1], [0], [0], [1], [0, 0, 1, 1], [], []>} : vector<32x64xf32>, vector<64x32xf32>, vector<32x32xf32> -> vector<32x32xf32>
    %c0_25 = arith.constant 0 : index
    %c0_26 = arith.constant 0 : index
    %43 = vector.load %arg7[%c0_25, %c0_26] : memref<32x1xf32, #tpu.memory_space<vmem>>, vector<32x1xf32>
    %44 = vector.broadcast %43 : vector<32x1xf32> to vector<32x32xf32>
    %45 = arith.addf %42, %44 : vector<32x32xf32>
    %cst_27 = arith.constant 5.000000e-01 : f32
    %46 = vector.broadcast %cst_27 : f32 to vector<32x32xf32>
    %47 = arith.mulf %46, %45 : vector<32x32xf32>
    %cst_28 = arith.constant 4.471500e-02 : f32
    %48 = vector.broadcast %cst_28 : f32 to vector<32x32xf32>
    %49 = arith.mulf %48, %45 : vector<32x32xf32>
    %50 = arith.mulf %49, %45 : vector<32x32xf32>
    %51 = arith.mulf %50, %45 : vector<32x32xf32>
    %52 = arith.addf %45, %51 : vector<32x32xf32>
    %cst_29 = arith.constant 0.797884583 : f32
    %53 = vector.broadcast %cst_29 : f32 to vector<32x32xf32>
    %54 = arith.mulf %53, %52 : vector<32x32xf32>
    %55 = math.tanh %54 : vector<32x32xf32>
    %cst_30 = arith.constant 1.000000e+00 : f32
    %56 = vector.broadcast %cst_30 : f32 to vector<32x32xf32>
    %57 = arith.addf %56, %55 : vector<32x32xf32>
    %58 = arith.mulf %47, %57 : vector<32x32xf32>
    %c0_31 = arith.constant 0 : index
    %c0_32 = arith.constant 0 : index
    %59 = vector.load %arg8[%c0_31, %c0_32] : memref<32x32xf32, #tpu.memory_space<vmem>>, vector<32x32xf32>
    %cst_33 = arith.constant dense<0.000000e+00> : vector<32xf32>
    %60 = vector.multi_reduction <add>, %58, %cst_33 [1] : vector<32x32xf32> to vector<32xf32>
    %61 = vector.shape_cast %60 : vector<32xf32> to vector<32x1xf32>
    %cst_34 = arith.constant dense<0.000000e+00> : vector<32x1xf32>
    %62 = tpu.matmul %59, %61, %cst_34 {dimension_numbers = #tpu.dot_dimension_numbers<[1], [0], [0], [1], [0, 0, 1, 1], [], []>} : vector<32x32xf32>, vector<32x1xf32>, vector<32x1xf32> -> vector<32x1xf32>
    %63 = vector.broadcast %62 : vector<32x1xf32> to vector<32x32xf32>
    %64 = arith.subf %58, %63 : vector<32x32xf32>
    %c0_35 = arith.constant 0 : index
    %c0_36 = arith.constant 0 : index
    %65 = vector.load %arg8[%c0_35, %c0_36] : memref<32x32xf32, #tpu.memory_space<vmem>>, vector<32x32xf32>
    %66 = arith.mulf %64, %64 : vector<32x32xf32>
    %cst_37 = arith.constant dense<0.000000e+00> : vector<32xf32>
    %67 = vector.multi_reduction <add>, %66, %cst_37 [1] : vector<32x32xf32> to vector<32xf32>
    %68 = vector.shape_cast %67 : vector<32xf32> to vector<32x1xf32>
    %cst_38 = arith.constant dense<0.000000e+00> : vector<32x1xf32>
    %69 = tpu.matmul %65, %68, %cst_38 {dimension_numbers = #tpu.dot_dimension_numbers<[1], [0], [0], [1], [0, 0, 1, 1], [], []>} : vector<32x32xf32>, vector<32x1xf32>, vector<32x1xf32> -> vector<32x1xf32>
    %cst_39 = arith.constant 9.99999974E-6 : f32
    %70 = vector.broadcast %cst_39 : f32 to vector<32x1xf32>
    %71 = arith.addf %69, %70 : vector<32x1xf32>
    %72 = math.rsqrt %71 : vector<32x1xf32>
    %73 = vector.broadcast %72 : vector<32x1xf32> to vector<32x32xf32>
    %74 = arith.mulf %64, %73 : vector<32x32xf32>
    %c0_40 = arith.constant 0 : index
    %c0_41 = arith.constant 0 : index
    %75 = vector.load %arg9[%c0_40, %c0_41] : memref<32x1xf32, #tpu.memory_space<vmem>>, vector<32x1xf32>
    %76 = vector.broadcast %75 : vector<32x1xf32> to vector<32x32xf32>
    %77 = arith.mulf %74, %76 : vector<32x32xf32>
    %c0_42 = arith.constant 0 : index
    %c0_43 = arith.constant 0 : index
    %78 = vector.load %arg10[%c0_42, %c0_43] : memref<32x1xf32, #tpu.memory_space<vmem>>, vector<32x1xf32>
    %79 = vector.broadcast %78 : vector<32x1xf32> to vector<32x32xf32>
    %80 = arith.addf %77, %79 : vector<32x32xf32>
    %c0_44 = arith.constant 0 : index
    %c0_45 = arith.constant 0 : index
    %81 = vector.load %arg11[%c0_44, %c0_45] : memref<8x32xf32, #tpu.memory_space<vmem>>, vector<8x32xf32>
    %cst_46 = arith.constant dense<0.000000e+00> : vector<8x32xf32>
    %82 = tpu.matmul %81, %80, %cst_46 {dimension_numbers = #tpu.dot_dimension_numbers<[1], [0], [0], [1], [0, 0, 1, 1], [], []>} : vector<8x32xf32>, vector<32x32xf32>, vector<8x32xf32> -> vector<8x32xf32>
    %c0_47 = arith.constant 0 : index
    %c0_48 = arith.constant 0 : index
    %83 = vector.load %arg12[%c0_47, %c0_48] : memref<8x1xf32, #tpu.memory_space<vmem>>, vector<8x1xf32>
    %84 = vector.broadcast %83 : vector<8x1xf32> to vector<8x32xf32>
    %85 = arith.addf %82, %84 : vector<8x32xf32>
    %cst_49 = arith.constant 5.000000e-01 : f32
    %86 = vector.broadcast %cst_49 : f32 to vector<8x32xf32>
    %87 = arith.mulf %86, %85 : vector<8x32xf32>
    %cst_50 = arith.constant 4.471500e-02 : f32
    %88 = vector.broadcast %cst_50 : f32 to vector<8x32xf32>
    %89 = arith.mulf %88, %85 : vector<8x32xf32>
    %90 = arith.mulf %89, %85 : vector<8x32xf32>
    %91 = arith.mulf %90, %85 : vector<8x32xf32>
    %92 = arith.addf %85, %91 : vector<8x32xf32>
    %cst_51 = arith.constant 0.797884583 : f32
    %93 = vector.broadcast %cst_51 : f32 to vector<8x32xf32>
    %94 = arith.mulf %93, %92 : vector<8x32xf32>
    %95 = math.tanh %94 : vector<8x32xf32>
    %cst_52 = arith.constant 1.000000e+00 : f32
    %96 = vector.broadcast %cst_52 : f32 to vector<8x32xf32>
    %97 = arith.addf %96, %95 : vector<8x32xf32>
    %98 = arith.mulf %87, %97 : vector<8x32xf32>
    %c0_53 = arith.constant 0 : index
    %c0_54 = arith.constant 0 : index
    %99 = vector.load %arg13[%c0_53, %c0_54] : memref<8x8xf32, #tpu.memory_space<vmem>>, vector<8x8xf32>
    %cst_55 = arith.constant dense<0.000000e+00> : vector<8xf32>
    %100 = vector.multi_reduction <add>, %98, %cst_55 [1] : vector<8x32xf32> to vector<8xf32>
    %101 = vector.shape_cast %100 : vector<8xf32> to vector<8x1xf32>
    %cst_56 = arith.constant dense<0.000000e+00> : vector<8x1xf32>
    %102 = tpu.matmul %99, %101, %cst_56 {dimension_numbers = #tpu.dot_dimension_numbers<[1], [0], [0], [1], [0, 0, 1, 1], [], []>} : vector<8x8xf32>, vector<8x1xf32>, vector<8x1xf32> -> vector<8x1xf32>
    %103 = vector.broadcast %102 : vector<8x1xf32> to vector<8x32xf32>
    %104 = arith.subf %98, %103 : vector<8x32xf32>
    %c0_57 = arith.constant 0 : index
    %c0_58 = arith.constant 0 : index
    %105 = vector.load %arg13[%c0_57, %c0_58] : memref<8x8xf32, #tpu.memory_space<vmem>>, vector<8x8xf32>
    %106 = arith.mulf %104, %104 : vector<8x32xf32>
    %cst_59 = arith.constant dense<0.000000e+00> : vector<8xf32>
    %107 = vector.multi_reduction <add>, %106, %cst_59 [1] : vector<8x32xf32> to vector<8xf32>
    %108 = vector.shape_cast %107 : vector<8xf32> to vector<8x1xf32>
    %cst_60 = arith.constant dense<0.000000e+00> : vector<8x1xf32>
    %109 = tpu.matmul %105, %108, %cst_60 {dimension_numbers = #tpu.dot_dimension_numbers<[1], [0], [0], [1], [0, 0, 1, 1], [], []>} : vector<8x8xf32>, vector<8x1xf32>, vector<8x1xf32> -> vector<8x1xf32>
    %cst_61 = arith.constant 9.99999974E-6 : f32
    %110 = vector.broadcast %cst_61 : f32 to vector<8x1xf32>
    %111 = arith.addf %109, %110 : vector<8x1xf32>
    %112 = math.rsqrt %111 : vector<8x1xf32>
    %113 = vector.broadcast %112 : vector<8x1xf32> to vector<8x32xf32>
    %114 = arith.mulf %104, %113 : vector<8x32xf32>
    %c0_62 = arith.constant 0 : index
    %c0_63 = arith.constant 0 : index
    %115 = vector.load %arg14[%c0_62, %c0_63] : memref<8x1xf32, #tpu.memory_space<vmem>>, vector<8x1xf32>
    %116 = vector.broadcast %115 : vector<8x1xf32> to vector<8x32xf32>
    %117 = arith.mulf %114, %116 : vector<8x32xf32>
    %c0_64 = arith.constant 0 : index
    %c0_65 = arith.constant 0 : index
    %118 = vector.load %arg15[%c0_64, %c0_65] : memref<8x1xf32, #tpu.memory_space<vmem>>, vector<8x1xf32>
    %119 = vector.broadcast %118 : vector<8x1xf32> to vector<8x32xf32>
    %120 = arith.addf %117, %119 : vector<8x32xf32>
    %c0_66 = arith.constant 0 : index
    %c0_67 = arith.constant 0 : index
    %121 = vector.load %arg16[%c0_66, %c0_67] : memref<16x128xf32, #tpu.memory_space<vmem>>, vector<16x128xf32>
    %cst_68 = arith.constant 0.000000e+00 : f32
    %122 = vector.broadcast %cst_68 : f32 to vector<16x2xf32>
    %123 = vector.extract_strided_slice %121 {offsets = [0, 0], sizes = [16, 8], strides = [1, 1]} : vector<16x128xf32> to vector<16x8xf32>
    %124 = vector.extract_strided_slice %120 {offsets = [0, 0], sizes = [8, 2], strides = [1, 1]} : vector<8x32xf32> to vector<8x2xf32>
    %cst_69 = arith.constant dense<0.000000e+00> : vector<16x2xf32>
    %125 = tpu.matmul %123, %124, %cst_69 {dimension_numbers = #tpu.dot_dimension_numbers<[1], [0], [0], [1], [0, 0, 1, 1], [], []>} : vector<16x8xf32>, vector<8x2xf32>, vector<16x2xf32> -> vector<16x2xf32>
    %126 = arith.addf %122, %125 : vector<16x2xf32>
    %127 = vector.extract_strided_slice %121 {offsets = [0, 8], sizes = [16, 8], strides = [1, 1]} : vector<16x128xf32> to vector<16x8xf32>
    %128 = vector.extract_strided_slice %120 {offsets = [0, 2], sizes = [8, 2], strides = [1, 1]} : vector<8x32xf32> to vector<8x2xf32>
    %cst_70 = arith.constant dense<0.000000e+00> : vector<16x2xf32>
    %129 = tpu.matmul %127, %128, %cst_70 {dimension_numbers = #tpu.dot_dimension_numbers<[1], [0], [0], [1], [0, 0, 1, 1], [], []>} : vector<16x8xf32>, vector<8x2xf32>, vector<16x2xf32> -> vector<16x2xf32>
    %130 = arith.addf %126, %129 : vector<16x2xf32>
    %131 = vector.extract_strided_slice %121 {offsets = [0, 16], sizes = [16, 8], strides = [1, 1]} : vector<16x128xf32> to vector<16x8xf32>
    %132 = vector.extract_strided_slice %120 {offsets = [0, 4], sizes = [8, 2], strides = [1, 1]} : vector<8x32xf32> to vector<8x2xf32>
    %cst_71 = arith.constant dense<0.000000e+00> : vector<16x2xf32>
    %133 = tpu.matmul %131, %132, %cst_71 {dimension_numbers = #tpu.dot_dimension_numbers<[1], [0], [0], [1], [0, 0, 1, 1], [], []>} : vector<16x8xf32>, vector<8x2xf32>, vector<16x2xf32> -> vector<16x2xf32>
    %134 = arith.addf %130, %133 : vector<16x2xf32>
    %135 = vector.extract_strided_slice %121 {offsets = [0, 24], sizes = [16, 8], strides = [1, 1]} : vector<16x128xf32> to vector<16x8xf32>
    %136 = vector.extract_strided_slice %120 {offsets = [0, 6], sizes = [8, 2], strides = [1, 1]} : vector<8x32xf32> to vector<8x2xf32>
    %cst_72 = arith.constant dense<0.000000e+00> : vector<16x2xf32>
    %137 = tpu.matmul %135, %136, %cst_72 {dimension_numbers = #tpu.dot_dimension_numbers<[1], [0], [0], [1], [0, 0, 1, 1], [], []>} : vector<16x8xf32>, vector<8x2xf32>, vector<16x2xf32> -> vector<16x2xf32>
    %138 = arith.addf %134, %137 : vector<16x2xf32>
    %139 = vector.extract_strided_slice %121 {offsets = [0, 32], sizes = [16, 8], strides = [1, 1]} : vector<16x128xf32> to vector<16x8xf32>
    %140 = vector.extract_strided_slice %120 {offsets = [0, 8], sizes = [8, 2], strides = [1, 1]} : vector<8x32xf32> to vector<8x2xf32>
    %cst_73 = arith.constant dense<0.000000e+00> : vector<16x2xf32>
    %141 = tpu.matmul %139, %140, %cst_73 {dimension_numbers = #tpu.dot_dimension_numbers<[1], [0], [0], [1], [0, 0, 1, 1], [], []>} : vector<16x8xf32>, vector<8x2xf32>, vector<16x2xf32> -> vector<16x2xf32>
    %142 = arith.addf %138, %141 : vector<16x2xf32>
    %143 = vector.extract_strided_slice %121 {offsets = [0, 40], sizes = [16, 8], strides = [1, 1]} : vector<16x128xf32> to vector<16x8xf32>
    %144 = vector.extract_strided_slice %120 {offsets = [0, 10], sizes = [8, 2], strides = [1, 1]} : vector<8x32xf32> to vector<8x2xf32>
    %cst_74 = arith.constant dense<0.000000e+00> : vector<16x2xf32>
    %145 = tpu.matmul %143, %144, %cst_74 {dimension_numbers = #tpu.dot_dimension_numbers<[1], [0], [0], [1], [0, 0, 1, 1], [], []>} : vector<16x8xf32>, vector<8x2xf32>, vector<16x2xf32> -> vector<16x2xf32>
    %146 = arith.addf %142, %145 : vector<16x2xf32>
    %147 = vector.extract_strided_slice %121 {offsets = [0, 48], sizes = [16, 8], strides = [1, 1]} : vector<16x128xf32> to vector<16x8xf32>
    %148 = vector.extract_strided_slice %120 {offsets = [0, 12], sizes = [8, 2], strides = [1, 1]} : vector<8x32xf32> to vector<8x2xf32>
    %cst_75 = arith.constant dense<0.000000e+00> : vector<16x2xf32>
    %149 = tpu.matmul %147, %148, %cst_75 {dimension_numbers = #tpu.dot_dimension_numbers<[1], [0], [0], [1], [0, 0, 1, 1], [], []>} : vector<16x8xf32>, vector<8x2xf32>, vector<16x2xf32> -> vector<16x2xf32>
    %150 = arith.addf %146, %149 : vector<16x2xf32>
    %151 = vector.extract_strided_slice %121 {offsets = [0, 56], sizes = [16, 8], strides = [1, 1]} : vector<16x128xf32> to vector<16x8xf32>
    %152 = vector.extract_strided_slice %120 {offsets = [0, 14], sizes = [8, 2], strides = [1, 1]} : vector<8x32xf32> to vector<8x2xf32>
    %cst_76 = arith.constant dense<0.000000e+00> : vector<16x2xf32>
    %153 = tpu.matmul %151, %152, %cst_76 {dimension_numbers = #tpu.dot_dimension_numbers<[1], [0], [0], [1], [0, 0, 1, 1], [], []>} : vector<16x8xf32>, vector<8x2xf32>, vector<16x2xf32> -> vector<16x2xf32>
    %154 = arith.addf %150, %153 : vector<16x2xf32>
    %155 = vector.extract_strided_slice %121 {offsets = [0, 64], sizes = [16, 8], strides = [1, 1]} : vector<16x128xf32> to vector<16x8xf32>
    %156 = vector.extract_strided_slice %120 {offsets = [0, 16], sizes = [8, 2], strides = [1, 1]} : vector<8x32xf32> to vector<8x2xf32>
    %cst_77 = arith.constant dense<0.000000e+00> : vector<16x2xf32>
    %157 = tpu.matmul %155, %156, %cst_77 {dimension_numbers = #tpu.dot_dimension_numbers<[1], [0], [0], [1], [0, 0, 1, 1], [], []>} : vector<16x8xf32>, vector<8x2xf32>, vector<16x2xf32> -> vector<16x2xf32>
    %158 = arith.addf %154, %157 : vector<16x2xf32>
    %159 = vector.extract_strided_slice %121 {offsets = [0, 72], sizes = [16, 8], strides = [1, 1]} : vector<16x128xf32> to vector<16x8xf32>
    %160 = vector.extract_strided_slice %120 {offsets = [0, 18], sizes = [8, 2], strides = [1, 1]} : vector<8x32xf32> to vector<8x2xf32>
    %cst_78 = arith.constant dense<0.000000e+00> : vector<16x2xf32>
    %161 = tpu.matmul %159, %160, %cst_78 {dimension_numbers = #tpu.dot_dimension_numbers<[1], [0], [0], [1], [0, 0, 1, 1], [], []>} : vector<16x8xf32>, vector<8x2xf32>, vector<16x2xf32> -> vector<16x2xf32>
    %162 = arith.addf %158, %161 : vector<16x2xf32>
    %163 = vector.extract_strided_slice %121 {offsets = [0, 80], sizes = [16, 8], strides = [1, 1]} : vector<16x128xf32> to vector<16x8xf32>
    %164 = vector.extract_strided_slice %120 {offsets = [0, 20], sizes = [8, 2], strides = [1, 1]} : vector<8x32xf32> to vector<8x2xf32>
    %cst_79 = arith.constant dense<0.000000e+00> : vector<16x2xf32>
    %165 = tpu.matmul %163, %164, %cst_79 {dimension_numbers = #tpu.dot_dimension_numbers<[1], [0], [0], [1], [0, 0, 1, 1], [], []>} : vector<16x8xf32>, vector<8x2xf32>, vector<16x2xf32> -> vector<16x2xf32>
    %166 = arith.addf %162, %165 : vector<16x2xf32>
    %167 = vector.extract_strided_slice %121 {offsets = [0, 88], sizes = [16, 8], strides = [1, 1]} : vector<16x128xf32> to vector<16x8xf32>
    %168 = vector.extract_strided_slice %120 {offsets = [0, 22], sizes = [8, 2], strides = [1, 1]} : vector<8x32xf32> to vector<8x2xf32>
    %cst_80 = arith.constant dense<0.000000e+00> : vector<16x2xf32>
    %169 = tpu.matmul %167, %168, %cst_80 {dimension_numbers = #tpu.dot_dimension_numbers<[1], [0], [0], [1], [0, 0, 1, 1], [], []>} : vector<16x8xf32>, vector<8x2xf32>, vector<16x2xf32> -> vector<16x2xf32>
    %170 = arith.addf %166, %169 : vector<16x2xf32>
    %171 = vector.extract_strided_slice %121 {offsets = [0, 96], sizes = [16, 8], strides = [1, 1]} : vector<16x128xf32> to vector<16x8xf32>
    %172 = vector.extract_strided_slice %120 {offsets = [0, 24], sizes = [8, 2], strides = [1, 1]} : vector<8x32xf32> to vector<8x2xf32>
    %cst_81 = arith.constant dense<0.000000e+00> : vector<16x2xf32>
    %173 = tpu.matmul %171, %172, %cst_81 {dimension_numbers = #tpu.dot_dimension_numbers<[1], [0], [0], [1], [0, 0, 1, 1], [], []>} : vector<16x8xf32>, vector<8x2xf32>, vector<16x2xf32> -> vector<16x2xf32>
    %174 = arith.addf %170, %173 : vector<16x2xf32>
    %175 = vector.extract_strided_slice %121 {offsets = [0, 104], sizes = [16, 8], strides = [1, 1]} : vector<16x128xf32> to vector<16x8xf32>
    %176 = vector.extract_strided_slice %120 {offsets = [0, 26], sizes = [8, 2], strides = [1, 1]} : vector<8x32xf32> to vector<8x2xf32>
    %cst_82 = arith.constant dense<0.000000e+00> : vector<16x2xf32>
    %177 = tpu.matmul %175, %176, %cst_82 {dimension_numbers = #tpu.dot_dimension_numbers<[1], [0], [0], [1], [0, 0, 1, 1], [], []>} : vector<16x8xf32>, vector<8x2xf32>, vector<16x2xf32> -> vector<16x2xf32>
    %178 = arith.addf %174, %177 : vector<16x2xf32>
    %179 = vector.extract_strided_slice %121 {offsets = [0, 112], sizes = [16, 8], strides = [1, 1]} : vector<16x128xf32> to vector<16x8xf32>
    %180 = vector.extract_strided_slice %120 {offsets = [0, 28], sizes = [8, 2], strides = [1, 1]} : vector<8x32xf32> to vector<8x2xf32>
    %cst_83 = arith.constant dense<0.000000e+00> : vector<16x2xf32>
    %181 = tpu.matmul %179, %180, %cst_83 {dimension_numbers = #tpu.dot_dimension_numbers<[1], [0], [0], [1], [0, 0, 1, 1], [], []>} : vector<16x8xf32>, vector<8x2xf32>, vector<16x2xf32> -> vector<16x2xf32>
    %182 = arith.addf %178, %181 : vector<16x2xf32>
    %183 = vector.extract_strided_slice %121 {offsets = [0, 120], sizes = [16, 8], strides = [1, 1]} : vector<16x128xf32> to vector<16x8xf32>
    %184 = vector.extract_strided_slice %120 {offsets = [0, 30], sizes = [8, 2], strides = [1, 1]} : vector<8x32xf32> to vector<8x2xf32>
    %cst_84 = arith.constant dense<0.000000e+00> : vector<16x2xf32>
    %185 = tpu.matmul %183, %184, %cst_84 {dimension_numbers = #tpu.dot_dimension_numbers<[1], [0], [0], [1], [0, 0, 1, 1], [], []>} : vector<16x8xf32>, vector<8x2xf32>, vector<16x2xf32> -> vector<16x2xf32>
    %186 = arith.addf %182, %185 : vector<16x2xf32>
    %c0_85 = arith.constant 0 : index
    %c0_86 = arith.constant 0 : index
    %187 = vector.load %arg17[%c0_85, %c0_86] : memref<16x1xf32, #tpu.memory_space<vmem>>, vector<16x1xf32>
    %188 = vector.broadcast %187 : vector<16x1xf32> to vector<16x2xf32>
    %189 = arith.addf %186, %188 : vector<16x2xf32>
    %cst_87 = arith.constant 5.000000e-01 : f32
    %190 = vector.broadcast %cst_87 : f32 to vector<16x2xf32>
    %191 = arith.mulf %190, %189 : vector<16x2xf32>
    %cst_88 = arith.constant 4.471500e-02 : f32
    %192 = vector.broadcast %cst_88 : f32 to vector<16x2xf32>
    %193 = arith.mulf %192, %189 : vector<16x2xf32>
    %194 = arith.mulf %193, %189 : vector<16x2xf32>
    %195 = arith.mulf %194, %189 : vector<16x2xf32>
    %196 = arith.addf %189, %195 : vector<16x2xf32>
    %cst_89 = arith.constant 0.797884583 : f32
    %197 = vector.broadcast %cst_89 : f32 to vector<16x2xf32>
    %198 = arith.mulf %197, %196 : vector<16x2xf32>
    %199 = math.tanh %198 : vector<16x2xf32>
    %cst_90 = arith.constant 1.000000e+00 : f32
    %200 = vector.broadcast %cst_90 : f32 to vector<16x2xf32>
    %201 = arith.addf %200, %199 : vector<16x2xf32>
    %202 = arith.mulf %191, %201 : vector<16x2xf32>
    %c0_91 = arith.constant 0 : index
    %c0_92 = arith.constant 0 : index
    %203 = vector.load %arg33[%c0_91, %c0_92] : memref<16x2xf32, #tpu.memory_space<vmem>>, vector<16x2xf32>
    tpu.vector_store %arg33[%c0_91, %c0_92], %202 {strides = array<i32>} : memref<16x2xf32, #tpu.memory_space<vmem>>, vector<16x2xf32>,
    %c0_93 = arith.constant 0 : index
    %c0_94 = arith.constant 0 : index
    %204 = vector.load %arg18[%c0_93, %c0_94] : memref<128x16xf32, #tpu.memory_space<vmem>>, vector<128x16xf32>
    %cst_95 = arith.constant dense<0.000000e+00> : vector<128x2xf32>
    %205 = tpu.matmul %204, %202, %cst_95 {dimension_numbers = #tpu.dot_dimension_numbers<[1], [0], [0], [1], [0, 0, 1, 1], [], []>} : vector<128x16xf32>, vector<16x2xf32>, vector<128x2xf32> -> vector<128x2xf32>
    %c0_96 = arith.constant 0 : index
    %c0_97 = arith.constant 0 : index
    %206 = vector.load %arg19[%c0_96, %c0_97] : memref<128x1xf32, #tpu.memory_space<vmem>>, vector<128x1xf32>
    %207 = vector.broadcast %206 : vector<128x1xf32> to vector<128x2xf32>
    %208 = arith.addf %205, %207 : vector<128x2xf32>
    %cst_98 = arith.constant 5.000000e-01 : f32
    %209 = vector.broadcast %cst_98 : f32 to vector<128x2xf32>
    %210 = arith.mulf %209, %208 : vector<128x2xf32>
    %cst_99 = arith.constant 4.471500e-02 : f32
    %211 = vector.broadcast %cst_99 : f32 to vector<128x2xf32>
    %212 = arith.mulf %211, %208 : vector<128x2xf32>
    %213 = arith.mulf %212, %208 : vector<128x2xf32>
    %214 = arith.mulf %213, %208 : vector<128x2xf32>
    %215 = arith.addf %208, %214 : vector<128x2xf32>
    %cst_100 = arith.constant 0.797884583 : f32
    %216 = vector.broadcast %cst_100 : f32 to vector<128x2xf32>
    %217 = arith.mulf %216, %215 : vector<128x2xf32>
    %218 = math.tanh %217 : vector<128x2xf32>
    %cst_101 = arith.constant 1.000000e+00 : f32
    %219 = vector.broadcast %cst_101 : f32 to vector<128x2xf32>
    %220 = arith.addf %219, %218 : vector<128x2xf32>
    %221 = arith.mulf %210, %220 : vector<128x2xf32>
    %222 = vector.extract_strided_slice %221 {offsets = [0, 0], sizes = [8, 2], strides = [1, 1]} : vector<128x2xf32> to vector<8x2xf32>
    %c0_102 = arith.constant 0 : index
    %c0_103 = arith.constant 0 : index
    %223 = vector.load %arg34[%c0_102, %c0_103] : memref<8x32xf32, #tpu.memory_space<vmem>>, vector<8x2xf32>
    tpu.vector_store %arg34[%c0_102, %c0_103], %222 {strides = array<i32>} : memref<8x32xf32, #tpu.memory_space<vmem>>, vector<8x2xf32>,
    %224 = vector.extract_strided_slice %221 {offsets = [8, 0], sizes = [8, 2], strides = [1, 1]} : vector<128x2xf32> to vector<8x2xf32>
    %c0_104 = arith.constant 0 : index
    %c2 = arith.constant 2 : index
    %225 = vector.load %arg34[%c0_104, %c2] : memref<8x32xf32, #tpu.memory_space<vmem>>, vector<8x2xf32>
    tpu.vector_store %arg34[%c0_104, %c2], %224 {strides = array<i32>} : memref<8x32xf32, #tpu.memory_space<vmem>>, vector<8x2xf32>,
    %226 = vector.extract_strided_slice %221 {offsets = [16, 0], sizes = [8, 2], strides = [1, 1]} : vector<128x2xf32> to vector<8x2xf32>
    %c0_105 = arith.constant 0 : index
    %c4 = arith.constant 4 : index
    %227 = vector.load %arg34[%c0_105, %c4] : memref<8x32xf32, #tpu.memory_space<vmem>>, vector<8x2xf32>
    tpu.vector_store %arg34[%c0_105, %c4], %226 {strides = array<i32>} : memref<8x32xf32, #tpu.memory_space<vmem>>, vector<8x2xf32>,
    %228 = vector.extract_strided_slice %221 {offsets = [24, 0], sizes = [8, 2], strides = [1, 1]} : vector<128x2xf32> to vector<8x2xf32>
    %c0_106 = arith.constant 0 : index
    %c6 = arith.constant 6 : index
    %229 = vector.load %arg34[%c0_106, %c6] : memref<8x32xf32, #tpu.memory_space<vmem>>, vector<8x2xf32>
    tpu.vector_store %arg34[%c0_106, %c6], %228 {strides = array<i32>} : memref<8x32xf32, #tpu.memory_space<vmem>>, vector<8x2xf32>,
    %230 = vector.extract_strided_slice %221 {offsets = [32, 0], sizes = [8, 2], strides = [1, 1]} : vector<128x2xf32> to vector<8x2xf32>
    %c0_107 = arith.constant 0 : index
    %c8 = arith.constant 8 : index
    %231 = vector.load %arg34[%c0_107, %c8] : memref<8x32xf32, #tpu.memory_space<vmem>>, vector<8x2xf32>
    tpu.vector_store %arg34[%c0_107, %c8], %230 {strides = array<i32>} : memref<8x32xf32, #tpu.memory_space<vmem>>, vector<8x2xf32>,
    %232 = vector.extract_strided_slice %221 {offsets = [40, 0], sizes = [8, 2], strides = [1, 1]} : vector<128x2xf32> to vector<8x2xf32>
    %c0_108 = arith.constant 0 : index
    %c10 = arith.constant 10 : index
    %233 = vector.load %arg34[%c0_108, %c10] : memref<8x32xf32, #tpu.memory_space<vmem>>, vector<8x2xf32>
    tpu.vector_store %arg34[%c0_108, %c10], %232 {strides = array<i32>} : memref<8x32xf32, #tpu.memory_space<vmem>>, vector<8x2xf32>,
    %234 = vector.extract_strided_slice %221 {offsets = [48, 0], sizes = [8, 2], strides = [1, 1]} : vector<128x2xf32> to vector<8x2xf32>
    %c0_109 = arith.constant 0 : index
    %c12 = arith.constant 12 : index
    %235 = vector.load %arg34[%c0_109, %c12] : memref<8x32xf32, #tpu.memory_space<vmem>>, vector<8x2xf32>
    tpu.vector_store %arg34[%c0_109, %c12], %234 {strides = array<i32>} : memref<8x32xf32, #tpu.memory_space<vmem>>, vector<8x2xf32>,
    %236 = vector.extract_strided_slice %221 {offsets = [56, 0], sizes = [8, 2], strides = [1, 1]} : vector<128x2xf32> to vector<8x2xf32>
    %c0_110 = arith.constant 0 : index
    %c14 = arith.constant 14 : index
    %237 = vector.load %arg34[%c0_110, %c14] : memref<8x32xf32, #tpu.memory_space<vmem>>, vector<8x2xf32>
    tpu.vector_store %arg34[%c0_110, %c14], %236 {strides = array<i32>} : memref<8x32xf32, #tpu.memory_space<vmem>>, vector<8x2xf32>,
    %238 = vector.extract_strided_slice %221 {offsets = [64, 0], sizes = [8, 2], strides = [1, 1]} : vector<128x2xf32> to vector<8x2xf32>
    %c0_111 = arith.constant 0 : index
    %c16 = arith.constant 16 : index
    %239 = vector.load %arg34[%c0_111, %c16] : memref<8x32xf32, #tpu.memory_space<vmem>>, vector<8x2xf32>
    tpu.vector_store %arg34[%c0_111, %c16], %238 {strides = array<i32>} : memref<8x32xf32, #tpu.memory_space<vmem>>, vector<8x2xf32>,
    %240 = vector.extract_strided_slice %221 {offsets = [72, 0], sizes = [8, 2], strides = [1, 1]} : vector<128x2xf32> to vector<8x2xf32>
    %c0_112 = arith.constant 0 : index
    %c18 = arith.constant 18 : index
    %241 = vector.load %arg34[%c0_112, %c18] : memref<8x32xf32, #tpu.memory_space<vmem>>, vector<8x2xf32>
    tpu.vector_store %arg34[%c0_112, %c18], %240 {strides = array<i32>} : memref<8x32xf32, #tpu.memory_space<vmem>>, vector<8x2xf32>,
    %242 = vector.extract_strided_slice %221 {offsets = [80, 0], sizes = [8, 2], strides = [1, 1]} : vector<128x2xf32> to vector<8x2xf32>
    %c0_113 = arith.constant 0 : index
    %c20 = arith.constant 20 : index
    %243 = vector.load %arg34[%c0_113, %c20] : memref<8x32xf32, #tpu.memory_space<vmem>>, vector<8x2xf32>
    tpu.vector_store %arg34[%c0_113, %c20], %242 {strides = array<i32>} : memref<8x32xf32, #tpu.memory_space<vmem>>, vector<8x2xf32>,
    %244 = vector.extract_strided_slice %221 {offsets = [88, 0], sizes = [8, 2], strides = [1, 1]} : vector<128x2xf32> to vector<8x2xf32>
    %c0_114 = arith.constant 0 : index
    %c22 = arith.constant 22 : index
    %245 = vector.load %arg34[%c0_114, %c22] : memref<8x32xf32, #tpu.memory_space<vmem>>, vector<8x2xf32>
    tpu.vector_store %arg34[%c0_114, %c22], %244 {strides = array<i32>} : memref<8x32xf32, #tpu.memory_space<vmem>>, vector<8x2xf32>,
    %246 = vector.extract_strided_slice %221 {offsets = [96, 0], sizes = [8, 2], strides = [1, 1]} : vector<128x2xf32> to vector<8x2xf32>
    %c0_115 = arith.constant 0 : index
    %c24 = arith.constant 24 : index
    %247 = vector.load %arg34[%c0_115, %c24] : memref<8x32xf32, #tpu.memory_space<vmem>>, vector<8x2xf32>
    tpu.vector_store %arg34[%c0_115, %c24], %246 {strides = array<i32>} : memref<8x32xf32, #tpu.memory_space<vmem>>, vector<8x2xf32>,
    %248 = vector.extract_strided_slice %221 {offsets = [104, 0], sizes = [8, 2], strides = [1, 1]} : vector<128x2xf32> to vector<8x2xf32>
    %c0_116 = arith.constant 0 : index
    %c26 = arith.constant 26 : index
    %249 = vector.load %arg34[%c0_116, %c26] : memref<8x32xf32, #tpu.memory_space<vmem>>, vector<8x2xf32>
    tpu.vector_store %arg34[%c0_116, %c26], %248 {strides = array<i32>} : memref<8x32xf32, #tpu.memory_space<vmem>>, vector<8x2xf32>,
    %250 = vector.extract_strided_slice %221 {offsets = [112, 0], sizes = [8, 2], strides = [1, 1]} : vector<128x2xf32> to vector<8x2xf32>
    %c0_117 = arith.constant 0 : index
    %c28 = arith.constant 28 : index
    %251 = vector.load %arg34[%c0_117, %c28] : memref<8x32xf32, #tpu.memory_space<vmem>>, vector<8x2xf32>
    tpu.vector_store %arg34[%c0_117, %c28], %250 {strides = array<i32>} : memref<8x32xf32, #tpu.memory_space<vmem>>, vector<8x2xf32>,
    %252 = vector.extract_strided_slice %221 {offsets = [120, 0], sizes = [8, 2], strides = [1, 1]} : vector<128x2xf32> to vector<8x2xf32>
    %c0_118 = arith.constant 0 : index
    %c30 = arith.constant 30 : index
    %253 = vector.load %arg34[%c0_118, %c30] : memref<8x32xf32, #tpu.memory_space<vmem>>, vector<8x2xf32>
    tpu.vector_store %arg34[%c0_118, %c30], %252 {strides = array<i32>} : memref<8x32xf32, #tpu.memory_space<vmem>>, vector<8x2xf32>,
    %c0_119 = arith.constant 0 : index
    %c0_120 = arith.constant 0 : index
    %254 = vector.load %arg34[%c0_119, %c0_120] : memref<8x32xf32, #tpu.memory_space<vmem>>, vector<8x32xf32>
    %c0_121 = arith.constant 0 : index
    %c0_122 = arith.constant 0 : index
    %255 = vector.load %arg20[%c0_121, %c0_122] : memref<32x8xf32, #tpu.memory_space<vmem>>, vector<32x8xf32>
    %cst_123 = arith.constant dense<0.000000e+00> : vector<32x32xf32>
    %256 = tpu.matmul %255, %254, %cst_123 {dimension_numbers = #tpu.dot_dimension_numbers<[1], [0], [0], [1], [0, 0, 1, 1], [], []>} : vector<32x8xf32>, vector<8x32xf32>, vector<32x32xf32> -> vector<32x32xf32>
    %c0_124 = arith.constant 0 : index
    %c0_125 = arith.constant 0 : index
    %257 = vector.load %arg21[%c0_124, %c0_125] : memref<32x1xf32, #tpu.memory_space<vmem>>, vector<32x1xf32>
    %258 = vector.broadcast %257 : vector<32x1xf32> to vector<32x32xf32>
    %259 = arith.addf %256, %258 : vector<32x32xf32>
    %cst_126 = arith.constant 5.000000e-01 : f32
    %260 = vector.broadcast %cst_126 : f32 to vector<32x32xf32>
    %261 = arith.mulf %260, %259 : vector<32x32xf32>
    %cst_127 = arith.constant 4.471500e-02 : f32
    %262 = vector.broadcast %cst_127 : f32 to vector<32x32xf32>
    %263 = arith.mulf %262, %259 : vector<32x32xf32>
    %264 = arith.mulf %263, %259 : vector<32x32xf32>
    %265 = arith.mulf %264, %259 : vector<32x32xf32>
    %266 = arith.addf %259, %265 : vector<32x32xf32>
    %cst_128 = arith.constant 0.797884583 : f32
    %267 = vector.broadcast %cst_128 : f32 to vector<32x32xf32>
    %268 = arith.mulf %267, %266 : vector<32x32xf32>
    %269 = math.tanh %268 : vector<32x32xf32>
    %cst_129 = arith.constant 1.000000e+00 : f32
    %270 = vector.broadcast %cst_129 : f32 to vector<32x32xf32>
    %271 = arith.addf %270, %269 : vector<32x32xf32>
    %272 = arith.mulf %261, %271 : vector<32x32xf32>
    %c0_130 = arith.constant 0 : index
    %c0_131 = arith.constant 0 : index
    %273 = vector.load %arg22[%c0_130, %c0_131] : memref<32x32xf32, #tpu.memory_space<vmem>>, vector<32x32xf32>
    %cst_132 = arith.constant dense<0.000000e+00> : vector<32xf32>
    %274 = vector.multi_reduction <add>, %272, %cst_132 [1] : vector<32x32xf32> to vector<32xf32>
    %275 = vector.shape_cast %274 : vector<32xf32> to vector<32x1xf32>
    %cst_133 = arith.constant dense<0.000000e+00> : vector<32x1xf32>
    %276 = tpu.matmul %273, %275, %cst_133 {dimension_numbers = #tpu.dot_dimension_numbers<[1], [0], [0], [1], [0, 0, 1, 1], [], []>} : vector<32x32xf32>, vector<32x1xf32>, vector<32x1xf32> -> vector<32x1xf32>
    %277 = vector.broadcast %276 : vector<32x1xf32> to vector<32x32xf32>
    %278 = arith.subf %272, %277 : vector<32x32xf32>
    %c0_134 = arith.constant 0 : index
    %c0_135 = arith.constant 0 : index
    %279 = vector.load %arg22[%c0_134, %c0_135] : memref<32x32xf32, #tpu.memory_space<vmem>>, vector<32x32xf32>
    %280 = arith.mulf %278, %278 : vector<32x32xf32>
    %cst_136 = arith.constant dense<0.000000e+00> : vector<32xf32>
    %281 = vector.multi_reduction <add>, %280, %cst_136 [1] : vector<32x32xf32> to vector<32xf32>
    %282 = vector.shape_cast %281 : vector<32xf32> to vector<32x1xf32>
    %cst_137 = arith.constant dense<0.000000e+00> : vector<32x1xf32>
    %283 = tpu.matmul %279, %282, %cst_137 {dimension_numbers = #tpu.dot_dimension_numbers<[1], [0], [0], [1], [0, 0, 1, 1], [], []>} : vector<32x32xf32>, vector<32x1xf32>, vector<32x1xf32> -> vector<32x1xf32>
    %cst_138 = arith.constant 9.99999974E-6 : f32
    %284 = vector.broadcast %cst_138 : f32 to vector<32x1xf32>
    %285 = arith.addf %283, %284 : vector<32x1xf32>
    %286 = math.rsqrt %285 : vector<32x1xf32>
    %287 = vector.broadcast %286 : vector<32x1xf32> to vector<32x32xf32>
    %288 = arith.mulf %278, %287 : vector<32x32xf32>
    %c0_139 = arith.constant 0 : index
    %c0_140 = arith.constant 0 : index
    %289 = vector.load %arg23[%c0_139, %c0_140] : memref<32x1xf32, #tpu.memory_space<vmem>>, vector<32x1xf32>
    %290 = vector.broadcast %289 : vector<32x1xf32> to vector<32x32xf32>
    %291 = arith.mulf %288, %290 : vector<32x32xf32>
    %c0_141 = arith.constant 0 : index
    %c0_142 = arith.constant 0 : index
    %292 = vector.load %arg24[%c0_141, %c0_142] : memref<32x1xf32, #tpu.memory_space<vmem>>, vector<32x1xf32>
    %293 = vector.broadcast %292 : vector<32x1xf32> to vector<32x32xf32>
    %294 = arith.addf %291, %293 : vector<32x32xf32>
    %c0_143 = arith.constant 0 : index
    %c0_144 = arith.constant 0 : index
    %295 = vector.load %arg25[%c0_143, %c0_144] : memref<64x32xf32, #tpu.memory_space<vmem>>, vector<64x32xf32>
    %cst_145 = arith.constant dense<0.000000e+00> : vector<64x32xf32>
    %296 = tpu.matmul %295, %294, %cst_145 {dimension_numbers = #tpu.dot_dimension_numbers<[1], [0], [0], [1], [0, 0, 1, 1], [], []>} : vector<64x32xf32>, vector<32x32xf32>, vector<64x32xf32> -> vector<64x32xf32>
    %c0_146 = arith.constant 0 : index
    %c0_147 = arith.constant 0 : index
    %297 = vector.load %arg26[%c0_146, %c0_147] : memref<64x1xf32, #tpu.memory_space<vmem>>, vector<64x1xf32>
    %298 = vector.broadcast %297 : vector<64x1xf32> to vector<64x32xf32>
    %299 = arith.addf %296, %298 : vector<64x32xf32>
    %cst_148 = arith.constant 5.000000e-01 : f32
    %300 = vector.broadcast %cst_148 : f32 to vector<64x32xf32>
    %301 = arith.mulf %300, %299 : vector<64x32xf32>
    %cst_149 = arith.constant 4.471500e-02 : f32
    %302 = vector.broadcast %cst_149 : f32 to vector<64x32xf32>
    %303 = arith.mulf %302, %299 : vector<64x32xf32>
    %304 = arith.mulf %303, %299 : vector<64x32xf32>
    %305 = arith.mulf %304, %299 : vector<64x32xf32>
    %306 = arith.addf %299, %305 : vector<64x32xf32>
    %cst_150 = arith.constant 0.797884583 : f32
    %307 = vector.broadcast %cst_150 : f32 to vector<64x32xf32>
    %308 = arith.mulf %307, %306 : vector<64x32xf32>
    %309 = math.tanh %308 : vector<64x32xf32>
    %cst_151 = arith.constant 1.000000e+00 : f32
    %310 = vector.broadcast %cst_151 : f32 to vector<64x32xf32>
    %311 = arith.addf %310, %309 : vector<64x32xf32>
    %312 = arith.mulf %301, %311 : vector<64x32xf32>
    %c0_152 = arith.constant 0 : index
    %c0_153 = arith.constant 0 : index
    %313 = vector.load %arg27[%c0_152, %c0_153] : memref<64x64xf32, #tpu.memory_space<vmem>>, vector<64x64xf32>
    %cst_154 = arith.constant dense<0.000000e+00> : vector<64xf32>
    %314 = vector.multi_reduction <add>, %312, %cst_154 [1] : vector<64x32xf32> to vector<64xf32>
    %315 = vector.shape_cast %314 : vector<64xf32> to vector<64x1xf32>
    %cst_155 = arith.constant dense<0.000000e+00> : vector<64x1xf32>
    %316 = tpu.matmul %313, %315, %cst_155 {dimension_numbers = #tpu.dot_dimension_numbers<[1], [0], [0], [1], [0, 0, 1, 1], [], []>} : vector<64x64xf32>, vector<64x1xf32>, vector<64x1xf32> -> vector<64x1xf32>
    %317 = vector.broadcast %316 : vector<64x1xf32> to vector<64x32xf32>
    %318 = arith.subf %312, %317 : vector<64x32xf32>
    %c0_156 = arith.constant 0 : index
    %c0_157 = arith.constant 0 : index
    %319 = vector.load %arg27[%c0_156, %c0_157] : memref<64x64xf32, #tpu.memory_space<vmem>>, vector<64x64xf32>
    %320 = arith.mulf %318, %318 : vector<64x32xf32>
    %cst_158 = arith.constant dense<0.000000e+00> : vector<64xf32>
    %321 = vector.multi_reduction <add>, %320, %cst_158 [1] : vector<64x32xf32> to vector<64xf32>
    %322 = vector.shape_cast %321 : vector<64xf32> to vector<64x1xf32>
    %cst_159 = arith.constant dense<0.000000e+00> : vector<64x1xf32>
    %323 = tpu.matmul %319, %322, %cst_159 {dimension_numbers = #tpu.dot_dimension_numbers<[1], [0], [0], [1], [0, 0, 1, 1], [], []>} : vector<64x64xf32>, vector<64x1xf32>, vector<64x1xf32> -> vector<64x1xf32>
    %cst_160 = arith.constant 9.99999974E-6 : f32
    %324 = vector.broadcast %cst_160 : f32 to vector<64x1xf32>
    %325 = arith.addf %323, %324 : vector<64x1xf32>
    %326 = math.rsqrt %325 : vector<64x1xf32>
    %327 = vector.broadcast %326 : vector<64x1xf32> to vector<64x32xf32>
    %328 = arith.mulf %318, %327 : vector<64x32xf32>
    %c0_161 = arith.constant 0 : index
    %c0_162 = arith.constant 0 : index
    %329 = vector.load %arg28[%c0_161, %c0_162] : memref<64x1xf32, #tpu.memory_space<vmem>>, vector<64x1xf32>
    %330 = vector.broadcast %329 : vector<64x1xf32> to vector<64x32xf32>
    %331 = arith.mulf %328, %330 : vector<64x32xf32>
    %c0_163 = arith.constant 0 : index
    %c0_164 = arith.constant 0 : index
    %332 = vector.load %arg29[%c0_163, %c0_164] : memref<64x1xf32, #tpu.memory_space<vmem>>, vector<64x1xf32>
    %333 = vector.broadcast %332 : vector<64x1xf32> to vector<64x32xf32>
    %334 = arith.addf %331, %333 : vector<64x32xf32>
    %c0_165 = arith.constant 0 : index
    %c0_166 = arith.constant 0 : index
    %335 = vector.load %arg30[%c0_165, %c0_166] : memref<64x64xf32, #tpu.memory_space<vmem>>, vector<64x64xf32>
    %cst_167 = arith.constant dense<0.000000e+00> : vector<64x32xf32>
    %336 = tpu.matmul %335, %334, %cst_167 {dimension_numbers = #tpu.dot_dimension_numbers<[1], [0], [0], [1], [0, 0, 1, 1], [], []>} : vector<64x64xf32>, vector<64x32xf32>, vector<64x32xf32> -> vector<64x32xf32>
    %c0_168 = arith.constant 0 : index
    %c0_169 = arith.constant 0 : index
    %337 = vector.load %arg31[%c0_168, %c0_169] : memref<64x1xf32, #tpu.memory_space<vmem>>, vector<64x1xf32>
    %338 = vector.broadcast %337 : vector<64x1xf32> to vector<64x32xf32>
    %339 = arith.addf %336, %338 : vector<64x32xf32>
    %cst_170 = arith.constant 5.000000e-01 : f32
    %340 = vector.broadcast %cst_170 : f32 to vector<64x32xf32>
    %341 = arith.mulf %340, %339 : vector<64x32xf32>
    %342 = math.tanh %341 : vector<64x32xf32>
    %cst_171 = arith.constant 1.000000e+00 : f32
    %343 = vector.broadcast %cst_171 : f32 to vector<64x32xf32>
    %344 = arith.addf %342, %343 : vector<64x32xf32>
    %cst_172 = arith.constant 5.000000e-01 : f32
    %345 = vector.broadcast %cst_172 : f32 to vector<64x32xf32>
    %346 = arith.mulf %345, %344 : vector<64x32xf32>
    %c0_173 = arith.constant 0 : index
    %c0_174 = arith.constant 0 : index
    %347 = vector.load %arg32[%c0_173, %c0_174] : memref<64x32xf32, #tpu.memory_space<vmem>>, vector<64x32xf32>
    tpu.vector_store %arg32[%c0_173, %c0_174], %346 {strides = array<i32>} : memref<64x32xf32, #tpu.memory_space<vmem>>, vector<64x32xf32>,
    return
  }
}

</mosaic_0001>

<llo_original>
// kernel: tile.70
$region0: #{tile.70}
  #allocation0 [shape = 's32[1]{0}', space=sflag, size = 0x4, scoped, tag = 'scoped memory for tile.70']
  %s0 = inlined_call_operand.vmem [shape: f32[4], index: 0, kind: input, shape index: {}]
  %s1 = inlined_call_operand.vmem [shape: f32[16,4], index: 1, kind: output, shape index: {}]
  // Predicated region
  $region2: #{tile.70} parent=0 // pred_check
    _
  $region3: #{tile.70} parent=0 // pred_check_branch
    %3 = sbr.rel (0) target = $region5
  $region4: #{tile.70} parent=0 // pred_region
    _
  $region5: #{tile.70} parent=0 // pred_fallthru
    _
  %v4 = vld [vmem:[%s0] ss:$0 sm:$0xff]
  %5 = vst [vmem:[%s1] sm:$0xff] %v4
  %s6 = scalar_lea.vmem %s1, 8
  %7 = vst [vmem:[%s6] sm:$0xff] %v4

// kernel: tile.0
$region0: #{tile.0}
  %s0 = inlined_call_operand.vmem [shape: f32[16,4], index: 0, kind: input, shape index: {}]
  %s1 = inlined_call_operand.vmem [shape: f32[64,1], index: 1, kind: output, shape index: {}]
  %v2 = vld [vmem:[%s0] sm:$0xff]
  %vm3 = vcmask 7168
  %4 = vst.msk [vmem:[%s1] ss:$4 sm:$0xff] %vm3, %v2
  %s5 = scalar_lea.vmem %s0, 8
  %v6 = vld [vmem:[%s5] sm:$0xff]
  %vm7 = vcmask 7168
  %s8 = scalar_lea.vmem %s1, 32
  %9 = vst.msk [vmem:[%s8] ss:$4 sm:$0xff] %vm7, %v6
  %v10 = vld [vmem:[%s0] sm:$0xff]
  %11 = vrot.lane.b32.xlu0 %v10, 127
  %v12 = vpop.permute.xlu0 %11
  %vm13 = vcmask 7168
  %s14 = scalar_lea.vmem %s1, 1
  %15 = vst.msk [vmem:[%s14] ss:$4 sm:$0xff] %vm13, %v12
  %s16 = scalar_lea.vmem %s0, 8
  %v17 = vld [vmem:[%s16] sm:$0xff]
  %18 = vrot.lane.b32.xlu0 %v17, 127
  %v19 = vpop.permute.xlu0 %18
  %vm20 = vcmask 7168
  %s21 = scalar_lea.vmem %s1, 33
  %22 = vst.msk [vmem:[%s21] ss:$4 sm:$0xff] %vm20, %v19
  %v23 = vld [vmem:[%s0] sm:$0xff]
  %24 = vrot.lane.b32.xlu0 %v23, 126
  %v25 = vpop.permute.xlu0 %24
  %vm26 = vcmask 7168
  %s27 = scalar_lea.vmem %s1, 2
  %28 = vst.msk [vmem:[%s27] ss:$4 sm:$0xff] %vm26, %v25
  %s29 = scalar_lea.vmem %s0, 8
  %v30 = vld [vmem:[%s29] sm:$0xff]
  %31 = vrot.lane.b32.xlu0 %v30, 126
  %v32 = vpop.permute.xlu0 %31
  %vm33 = vcmask 7168
  %s34 = scalar_lea.vmem %s1, 34
  %35 = vst.msk [vmem:[%s34] ss:$4 sm:$0xff] %vm33, %v32
  %v36 = vld [vmem:[%s0] sm:$0xff]
  %37 = vrot.lane.b32.xlu0 %v36, 125
  %v38 = vpop.permute.xlu0 %37
  %vm39 = vcmask 7168
  %s40 = scalar_lea.vmem %s1, 3
  %41 = vst.msk [vmem:[%s40] ss:$4 sm:$0xff] %vm39, %v38
  %s42 = scalar_lea.vmem %s0, 8
  %v43 = vld [vmem:[%s42] sm:$0xff]
  %44 = vrot.lane.b32.xlu0 %v43, 125
  %v45 = vpop.permute.xlu0 %44
  %vm46 = vcmask 7168
  %s47 = scalar_lea.vmem %s1, 35
  %48 = vst.msk [vmem:[%s47] ss:$4 sm:$0xff] %vm46, %v45

// kernel: tile.133
$region0: #{tile.133}
  #allocation0 [shape = 's32[1]{0}', space=sflag, size = 0x4, scoped, tag = 'scoped memory for tile.133']
  %s0 = inlined_call_operand.<no memory space> [shape: f32[], index: 0, kind: input, shape index: {}]
  %s1 = inlined_call_operand.vmem [shape: f32[64,1], index: 1, kind: output, shape index: {}]
  %v2 = vstv %s0
  %3 = vst [vmem:[%s1] sm:$0xff] %v2
  %s4 = scalar_lea.vmem %s1, 8
  %5 = vst [vmem:[%s4] sm:$0xff] %v2
  %s6 = scalar_lea.vmem %s1, 16
  %7 = vst [vmem:[%s6] sm:$0xff] %v2
  %s8 = scalar_lea.vmem %s1, 24
  %9 = vst [vmem:[%s8] sm:$0xff] %v2
  %s10 = scalar_lea.vmem %s1, 32
  %11 = vst [vmem:[%s10] sm:$0xff] %v2
  %s12 = scalar_lea.vmem %s1, 40
  %13 = vst [vmem:[%s12] sm:$0xff] %v2
  %s14 = scalar_lea.vmem %s1, 48
  %15 = vst [vmem:[%s14] sm:$0xff] %v2
  %s16 = scalar_lea.vmem %s1, 56
  %17 = vst [vmem:[%s16] sm:$0xff] %v2

// kernel: tile.85
$region0: #{tile.85}
  #allocation0 [shape = 's32[1]{0}', space=sflag, size = 0x4, scoped, tag = 'scoped memory for tile.85']
  %s0 = inlined_call_operand.vmem [shape: f32[8], index: 0, kind: input, shape index: {}]
  %s1 = inlined_call_operand.vmem [shape: f32[4,8], index: 1, kind: output, shape index: {}]
  // Predicated region
  $region2: #{tile.85} parent=0 // pred_check
    _
  $region3: #{tile.85} parent=0 // pred_check_branch
    %3 = sbr.rel (0) target = $region5
  $region4: #{tile.85} parent=0 // pred_region
    _
  $region5: #{tile.85} parent=0 // pred_fallthru
    _
  %v4 = vld [vmem:[%s0] ss:$0 sm:$0xff]
  %5 = vst [vmem:[%s1] sm:$0xf] %v4

// kernel: tile.3
$region0: #{tile.3}
  %s0 = inlined_call_operand.vmem [shape: f32[4,8], index: 0, kind: input, shape index: {}]
  %s1 = inlined_call_operand.vmem [shape: f32[32,1], index: 1, kind: output, shape index: {}]
  $region1: #{tile.3} parent=0
    #allocation0 [shape = 'u8[4096]{0}', space=vmem, size = 0x1000, scoped, tag = 'scoped mem for input reshape']
    %s3 = ssub.s32 16, 1
    %v4 = vld [vmem:[%s0] sm:%s3]
    %5 = vst [vmem:[#allocation0] sm:%s3] %v4
    %v6 = vld [vmem:[#allocation0] sm:$0xf]
    %vm7 = vcmask 7168
    %8 = vst.msk [vmem:[%s1] ss:$8 sm:$0xf] %vm7, %v6
    %v9 = vld [vmem:[#allocation0] sm:$0xf]
    %10 = vrot.lane.b32.xlu0 %v9, 127
    %v11 = vpop.permute.xlu0 %10
    %vm12 = vcmask 7168
    %s13 = scalar_lea.vmem %s1, 1
    %14 = vst.msk [vmem:[%s13] ss:$8 sm:$0xf] %vm12, %v11
    %v15 = vld [vmem:[#allocation0] sm:$0xf]
    %16 = vrot.lane.b32.xlu0 %v15, 126
    %v17 = vpop.permute.xlu0 %16
    %vm18 = vcmask 7168
    %s19 = scalar_lea.vmem %s1, 2
    %20 = vst.msk [vmem:[%s19] ss:$8 sm:$0xf] %vm18, %v17
    %v21 = vld [vmem:[#allocation0] sm:$0xf]
    %22 = vrot.lane.b32.xlu0 %v21, 125
    %v23 = vpop.permute.xlu0 %22
    %vm24 = vcmask 7168
    %s25 = scalar_lea.vmem %s1, 3
    %26 = vst.msk [vmem:[%s25] ss:$8 sm:$0xf] %vm24, %v23
    %v27 = vld [vmem:[#allocation0] sm:$0xf]
    %28 = vrot.lane.b32.xlu0 %v27, 124
    %v29 = vpop.permute.xlu0 %28
    %vm30 = vcmask 7168
    %s31 = scalar_lea.vmem %s1, 4
    %32 = vst.msk [vmem:[%s31] ss:$8 sm:$0xf] %vm30, %v29
    %v33 = vld [vmem:[#allocation0] sm:$0xf]
    %34 = vrot.lane.b32.xlu0 %v33, 123
    %v35 = vpop.permute.xlu0 %34
    %vm36 = vcmask 7168
    %s37 = scalar_lea.vmem %s1, 5
    %38 = vst.msk [vmem:[%s37] ss:$8 sm:$0xf] %vm36, %v35
    %v39 = vld [vmem:[#allocation0] sm:$0xf]
    %40 = vrot.lane.b32.xlu0 %v39, 122
    %v41 = vpop.permute.xlu0 %40
    %vm42 = vcmask 7168
    %s43 = scalar_lea.vmem %s1, 6
    %44 = vst.msk [vmem:[%s43] ss:$8 sm:$0xf] %vm42, %v41
    %v45 = vld [vmem:[#allocation0] sm:$0xf]
    %46 = vrot.lane.b32.xlu0 %v45, 121
    %v47 = vpop.permute.xlu0 %46
    %vm48 = vcmask 7168
    %s49 = scalar_lea.vmem %s1, 7
    %50 = vst.msk [vmem:[%s49] ss:$8 sm:$0xf] %vm48, %v47

// kernel: vae_forward.1
$region0: #{vae_forward.1}
  #allocation0 [shape = 'u32[]', space=smem, size = 0x4, offset = 0x4, fixed_abs, tag = 'smem constant byte address 0x4 - core index']
  #allocation1 [shape = 'u32[72,128]{1,0:T(1,128)}', space=vmem, size = 0x9000, scoped, tag = 'internal scratch']
  #allocation2 [shape = 'f32[8,32]{1,0:T(8,128)}', space=vmem, size = 0x1000, scoped, tag = 'scratch operand']
  %s0 = inlined_call_operand.smem [shape: u32[34], index: -1, kind: input, shape index: {}]
  %s1 = sld [smem:[%s0]]
  %s2 = scalar_lea.smem %s0, 1
  %s3 = sld [smem:[%s2]]
  %s4 = scalar_lea.smem %s0, 2
  %s5 = sld [smem:[%s4]]
  %s6 = scalar_lea.smem %s0, 3
  %s7 = sld [smem:[%s6]]
  %s8 = scalar_lea.smem %s0, 4
  %s9 = sld [smem:[%s8]]
  %s10 = scalar_lea.smem %s0, 5
  %s11 = sld [smem:[%s10]]
  %s12 = scalar_lea.smem %s0, 6
  %s13 = sld [smem:[%s12]]
  %s14 = scalar_lea.smem %s0, 7
  %s15 = sld [smem:[%s14]]
  %s16 = scalar_lea.smem %s0, 8
  %s17 = sld [smem:[%s16]]
  %s18 = scalar_lea.smem %s0, 9
  %s19 = sld [smem:[%s18]]
  %s20 = scalar_lea.smem %s0, 10
  %s21 = sld [smem:[%s20]]
  %s22 = scalar_lea.smem %s0, 11
  %s23 = sld [smem:[%s22]]
  %s24 = scalar_lea.smem %s0, 12
  %s25 = sld [smem:[%s24]]
  %s26 = scalar_lea.smem %s0, 13
  %s27 = sld [smem:[%s26]]
  %s28 = scalar_lea.smem %s0, 14
  %s29 = sld [smem:[%s28]]
  %s30 = scalar_lea.smem %s0, 15
  %s31 = sld [smem:[%s30]]
  %s32 = scalar_lea.smem %s0, 16
  %s33 = sld [smem:[%s32]]
  %s34 = scalar_lea.smem %s0, 17
  %s35 = sld [smem:[%s34]]
  %s36 = scalar_lea.smem %s0, 18
  %s37 = sld [smem:[%s36]]
  %s38 = scalar_lea.smem %s0, 19
  %s39 = sld [smem:[%s38]]
  %s40 = scalar_lea.smem %s0, 20
  %s41 = sld [smem:[%s40]]
  %s42 = scalar_lea.smem %s0, 21
  %s43 = sld [smem:[%s42]]
  %s44 = scalar_lea.smem %s0, 22
  %s45 = sld [smem:[%s44]]
  %s46 = scalar_lea.smem %s0, 23
  %s47 = sld [smem:[%s46]]
  %s48 = scalar_lea.smem %s0, 24
  %s49 = sld [smem:[%s48]]
  %s50 = scalar_lea.smem %s0, 25
  %s51 = sld [smem:[%s50]]
  %s52 = scalar_lea.smem %s0, 26
  %s53 = sld [smem:[%s52]]
  %s54 = scalar_lea.smem %s0, 27
  %s55 = sld [smem:[%s54]]
  %s56 = scalar_lea.smem %s0, 28
  %s57 = sld [smem:[%s56]]
  %s58 = scalar_lea.smem %s0, 29
  %s59 = sld [smem:[%s58]]
  %s60 = scalar_lea.smem %s0, 30
  %s61 = sld [smem:[%s60]]
  %s62 = scalar_lea.smem %s0, 31
  %s63 = sld [smem:[%s62]]
  %s64 = scalar_lea.smem %s0, 32
  %s65 = sld [smem:[%s64]]
  %s66 = scalar_lea.smem %s0, 33
  %s67 = sld [smem:[%s66]]
  %68 = xla_tuple %s65, %s67
  %s69 = sld [smem:[#allocation0]]
  $region146: #{vae_forward.1} parent=0
    _
  %s71 = ssub.s32 1, %s69
  %s72 = scalar_select 0, %s71, %s69
  // Predicated region
  $region2: #{vae_forward.1} parent=0 // pred_check
    _
  $region3: #{vae_forward.1} parent=0 // pred_check_branch
    %74 = sbr.rel (0) target = $region5
  $region4: #{vae_forward.1} parent=0 // pred_region
    _
  $region5: #{vae_forward.1} parent=0 // pred_fallthru
    _
  // Predicated region
  $region6: #{vae_forward.1} parent=0 // pred_check
    _
  $region7: #{vae_forward.1} parent=0 // pred_check_branch
    %76 = sbr.rel (0) target = $region9
  $region8: #{vae_forward.1} parent=0 // pred_region
    _
  $region9: #{vae_forward.1} parent=0 // pred_fallthru
    _
  // Predicated region
  $region10: #{vae_forward.1} parent=0 // pred_check
    _
  $region11: #{vae_forward.1} parent=0 // pred_check_branch
    %78 = sbr.rel (0) target = $region13
  $region12: #{vae_forward.1} parent=0 // pred_region
    _
  $region13: #{vae_forward.1} parent=0 // pred_fallthru
    _
  // Predicated region
  $region14: #{vae_forward.1} parent=0 // pred_check
    _
  $region15: #{vae_forward.1} parent=0 // pred_check_branch
    %80 = sbr.rel (0) target = $region17
  $region16: #{vae_forward.1} parent=0 // pred_region
    _
  $region17: #{vae_forward.1} parent=0 // pred_fallthru
    _
  // Predicated region
  $region18: #{vae_forward.1} parent=0 // pred_check
    _
  $region19: #{vae_forward.1} parent=0 // pred_check_branch
    %82 = sbr.rel (0) target = $region21
  $region20: #{vae_forward.1} parent=0 // pred_region
    _
  $region21: #{vae_forward.1} parent=0 // pred_fallthru
    _
  // Predicated region
  $region22: #{vae_forward.1} parent=0 // pred_check
    _
  $region23: #{vae_forward.1} parent=0 // pred_check_branch
    %84 = sbr.rel (0) target = $region25
  $region24: #{vae_forward.1} parent=0 // pred_region
    _
  $region25: #{vae_forward.1} parent=0 // pred_fallthru
    _
  // Predicated region
  $region26: #{vae_forward.1} parent=0 // pred_check
    _
  $region27: #{vae_forward.1} parent=0 // pred_check_branch
    %86 = sbr.rel (0) target = $region29
  $region28: #{vae_forward.1} parent=0 // pred_region
    _
  $region29: #{vae_forward.1} parent=0 // pred_fallthru
    _
  // Predicated region
  $region30: #{vae_forward.1} parent=0 // pred_check
    _
  $region31: #{vae_forward.1} parent=0 // pred_check_branch
    %88 = sbr.rel (0) target = $region33
  $region32: #{vae_forward.1} parent=0 // pred_region
    _
  $region33: #{vae_forward.1} parent=0 // pred_fallthru
    _
  // Predicated region
  $region34: #{vae_forward.1} parent=0 // pred_check
    _
  $region35: #{vae_forward.1} parent=0 // pred_check_branch
    %90 = sbr.rel (0) target = $region37
  $region36: #{vae_forward.1} parent=0 // pred_region
    _
  $region37: #{vae_forward.1} parent=0 // pred_fallthru
    _
  // Predicated region
  $region38: #{vae_forward.1} parent=0 // pred_check
    _
  $region39: #{vae_forward.1} parent=0 // pred_check_branch
    %92 = sbr.rel (0) target = $region41
  $region40: #{vae_forward.1} parent=0 // pred_region
    _
  $region41: #{vae_forward.1} parent=0 // pred_fallthru
    _
  // Predicated region
  $region42: #{vae_forward.1} parent=0 // pred_check
    _
  $region43: #{vae_forward.1} parent=0 // pred_check_branch
    %94 = sbr.rel (0) target = $region45
  $region44: #{vae_forward.1} parent=0 // pred_region
    _
  $region45: #{vae_forward.1} parent=0 // pred_fallthru
    _
  // Predicated region
  $region46: #{vae_forward.1} parent=0 // pred_check
    _
  $region47: #{vae_forward.1} parent=0 // pred_check_branch
    %96 = sbr.rel (0) target = $region49
  $region48: #{vae_forward.1} parent=0 // pred_region
    _
  $region49: #{vae_forward.1} parent=0 // pred_fallthru
    _
  // Predicated region
  $region50: #{vae_forward.1} parent=0 // pred_check
    _
  $region51: #{vae_forward.1} parent=0 // pred_check_branch
    %98 = sbr.rel (0) target = $region53
  $region52: #{vae_forward.1} parent=0 // pred_region
    _
  $region53: #{vae_forward.1} parent=0 // pred_fallthru
    _
  // Predicated region
  $region54: #{vae_forward.1} parent=0 // pred_check
    _
  $region55: #{vae_forward.1} parent=0 // pred_check_branch
    %100 = sbr.rel (0) target = $region57
  $region56: #{vae_forward.1} parent=0 // pred_region
    _
  $region57: #{vae_forward.1} parent=0 // pred_fallthru
    _
  // Predicated region
  $region58: #{vae_forward.1} parent=0 // pred_check
    _
  $region59: #{vae_forward.1} parent=0 // pred_check_branch
    %102 = sbr.rel (0) target = $region61
  $region60: #{vae_forward.1} parent=0 // pred_region
    _
  $region61: #{vae_forward.1} parent=0 // pred_fallthru
    _
  // Predicated region
  $region62: #{vae_forward.1} parent=0 // pred_check
    _
  $region63: #{vae_forward.1} parent=0 // pred_check_branch
    %104 = sbr.rel (0) target = $region65
  $region64: #{vae_forward.1} parent=0 // pred_region
    _
  $region65: #{vae_forward.1} parent=0 // pred_fallthru
    _
  // Predicated region
  $region66: #{vae_forward.1} parent=0 // pred_check
    _
  $region67: #{vae_forward.1} parent=0 // pred_check_branch
    %106 = sbr.rel (0) target = $region69
  $region68: #{vae_forward.1} parent=0 // pred_region
    _
  $region69: #{vae_forward.1} parent=0 // pred_fallthru
    _
  // Predicated region
  $region70: #{vae_forward.1} parent=0 // pred_check
    _
  $region71: #{vae_forward.1} parent=0 // pred_check_branch
    %108 = sbr.rel (0) target = $region73
  $region72: #{vae_forward.1} parent=0 // pred_region
    _
  $region73: #{vae_forward.1} parent=0 // pred_fallthru
    _
  // Predicated region
  $region74: #{vae_forward.1} parent=0 // pred_check
    _
  $region75: #{vae_forward.1} parent=0 // pred_check_branch
    %110 = sbr.rel (0) target = $region77
  $region76: #{vae_forward.1} parent=0 // pred_region
    _
  $region77: #{vae_forward.1} parent=0 // pred_fallthru
    _
  // Predicated region
  $region78: #{vae_forward.1} parent=0 // pred_check
    _
  $region79: #{vae_forward.1} parent=0 // pred_check_branch
    %112 = sbr.rel (0) target = $region81
  $region80: #{vae_forward.1} parent=0 // pred_region
    _
  $region81: #{vae_forward.1} parent=0 // pred_fallthru
    _
  // Predicated region
  $region82: #{vae_forward.1} parent=0 // pred_check
    _
  $region83: #{vae_forward.1} parent=0 // pred_check_branch
    %114 = sbr.rel (0) target = $region85
  $region84: #{vae_forward.1} parent=0 // pred_region
    _
  $region85: #{vae_forward.1} parent=0 // pred_fallthru
    _
  // Predicated region
  $region86: #{vae_forward.1} parent=0 // pred_check
    _
  $region87: #{vae_forward.1} parent=0 // pred_check_branch
    %116 = sbr.rel (0) target = $region89
  $region88: #{vae_forward.1} parent=0 // pred_region
    _
  $region89: #{vae_forward.1} parent=0 // pred_fallthru
    _
  // Predicated region
  $region90: #{vae_forward.1} parent=0 // pred_check
    _
  $region91: #{vae_forward.1} parent=0 // pred_check_branch
    %118 = sbr.rel (0) target = $region93
  $region92: #{vae_forward.1} parent=0 // pred_region
    _
  $region93: #{vae_forward.1} parent=0 // pred_fallthru
    _
  // Predicated region
  $region94: #{vae_forward.1} parent=0 // pred_check
    _
  $region95: #{vae_forward.1} parent=0 // pred_check_branch
    %120 = sbr.rel (0) target = $region97
  $region96: #{vae_forward.1} parent=0 // pred_region
    _
  $region97: #{vae_forward.1} parent=0 // pred_fallthru
    _
  // Predicated region
  $region98: #{vae_forward.1} parent=0 // pred_check
    _
  $region99: #{vae_forward.1} parent=0 // pred_check_branch
    %122 = sbr.rel (0) target = $region101
  $region100: #{vae_forward.1} parent=0 // pred_region
    _
  $region101: #{vae_forward.1} parent=0 // pred_fallthru
    _
  // Predicated region
  $region102: #{vae_forward.1} parent=0 // pred_check
    _
  $region103: #{vae_forward.1} parent=0 // pred_check_branch
    %124 = sbr.rel (0) target = $region105
  $region104: #{vae_forward.1} parent=0 // pred_region
    _
  $region105: #{vae_forward.1} parent=0 // pred_fallthru
    _
  // Predicated region
  $region106: #{vae_forward.1} parent=0 // pred_check
    _
  $region107: #{vae_forward.1} parent=0 // pred_check_branch
    %126 = sbr.rel (0) target = $region109
  $region108: #{vae_forward.1} parent=0 // pred_region
    _
  $region109: #{vae_forward.1} parent=0 // pred_fallthru
    _
  // Predicated region
  $region110: #{vae_forward.1} parent=0 // pred_check
    _
  $region111: #{vae_forward.1} parent=0 // pred_check_branch
    %128 = sbr.rel (0) target = $region113
  $region112: #{vae_forward.1} parent=0 // pred_region
    _
  $region113: #{vae_forward.1} parent=0 // pred_fallthru
    _
  // Predicated region
  $region114: #{vae_forward.1} parent=0 // pred_check
    _
  $region115: #{vae_forward.1} parent=0 // pred_check_branch
    %130 = sbr.rel (0) target = $region117
  $region116: #{vae_forward.1} parent=0 // pred_region
    _
  $region117: #{vae_forward.1} parent=0 // pred_fallthru
    _
  // Predicated region
  $region118: #{vae_forward.1} parent=0 // pred_check
    _
  $region119: #{vae_forward.1} parent=0 // pred_check_branch
    %132 = sbr.rel (0) target = $region121
  $region120: #{vae_forward.1} parent=0 // pred_region
    _
  $region121: #{vae_forward.1} parent=0 // pred_fallthru
    _
  // Predicated region
  $region122: #{vae_forward.1} parent=0 // pred_check
    _
  $region123: #{vae_forward.1} parent=0 // pred_check_branch
    %134 = sbr.rel (0) target = $region125
  $region124: #{vae_forward.1} parent=0 // pred_region
    _
  $region125: #{vae_forward.1} parent=0 // pred_fallthru
    _
  // Predicated region
  $region126: #{vae_forward.1} parent=0 // pred_check
    _
  $region127: #{vae_forward.1} parent=0 // pred_check_branch
    %136 = sbr.rel (0) target = $region129
  $region128: #{vae_forward.1} parent=0 // pred_region
    _
  $region129: #{vae_forward.1} parent=0 // pred_fallthru
    _
  %v137 = vld [vmem:[%s1] sm:$0xff]
  %v138 = vld [vmem:[%s1 + $0x8] sm:$0xff]
  %v139 = vld [vmem:[%s1 + $0x10] sm:$0xff]
  %v140 = vld [vmem:[%s1 + $0x18] sm:$0xff]
  %v141 = vld [vmem:[%s1 + $0x20] sm:$0xff]
  %v142 = vld [vmem:[%s1 + $0x28] sm:$0xff]
  %v143 = vld [vmem:[%s1 + $0x30] sm:$0xff]
  %v144 = vld [vmem:[%s1 + $0x38] sm:$0xff]
  %v145 = vld [vmem:[%s3] sm:$0xff]
  %v146 = vld [vmem:[%s3 + $0x8] sm:$0xff]
  %v147 = vld [vmem:[%s3 + $0x10] sm:$0xff]
  %v148 = vld [vmem:[%s3 + $0x18] sm:$0xff]
  %v149 = vld [vmem:[%s3 + $0x20] sm:$0xff]
  %v150 = vld [vmem:[%s3 + $0x28] sm:$0xff]
  %v151 = vld [vmem:[%s3 + $0x30] sm:$0xff]
  %v152 = vld [vmem:[%s3 + $0x38] sm:$0xff]
  %v153 = vld [vmem:[%s5] sm:$0xff]
  %v154 = vld [vmem:[%s5 + $0x8] sm:$0xff]
  %v155 = vld [vmem:[%s5 + $0x10] sm:$0xff]
  %v156 = vld [vmem:[%s5 + $0x18] sm:$0xff]
  %v157 = vld [vmem:[%s5 + $0x20] sm:$0xff]
  %v158 = vld [vmem:[%s5 + $0x28] sm:$0xff]
  %v159 = vld [vmem:[%s5 + $0x30] sm:$0xff]
  %v160 = vld [vmem:[%s5 + $0x38] sm:$0xff]
  %162 = vset.pattern.permute.xlu0 0
  %163 = vperm.xlu0 %162, %v153
  %v164 = vpop.permute.xlu0 %163
  %167 = vset.pattern.permute.xlu0 0
  %168 = vperm.xlu0 %167, %v154
  %v169 = vpop.permute.xlu0 %168
  %172 = vset.pattern.permute.xlu0 0
  %173 = vperm.xlu0 %172, %v155
  %v174 = vpop.permute.xlu0 %173
  %177 = vset.pattern.permute.xlu0 0
  %178 = vperm.xlu0 %177, %v156
  %v179 = vpop.permute.xlu0 %178
  %182 = vset.pattern.permute.xlu0 0
  %183 = vperm.xlu0 %182, %v157
  %v184 = vpop.permute.xlu0 %183
  %187 = vset.pattern.permute.xlu0 0
  %188 = vperm.xlu0 %187, %v158
  %v189 = vpop.permute.xlu0 %188
  %192 = vset.pattern.permute.xlu0 0
  %193 = vperm.xlu0 %192, %v159
  %v194 = vpop.permute.xlu0 %193
  %197 = vset.pattern.permute.xlu0 0
  %198 = vperm.xlu0 %197, %v160
  %v199 = vpop.permute.xlu0 %198
  %vm201 = vcmask 523264
  %v203 = vsel %vm201, %v145, 0
  %v206 = vsel %vm201, %v146, 0
  %v209 = vsel %vm201, %v147, 0
  %v212 = vsel %vm201, %v148, 0
  %v215 = vsel %vm201, %v149, 0
  %v218 = vsel %vm201, %v150, 0
  %v221 = vsel %vm201, %v151, 0
  %v224 = vsel %vm201, %v152, 0
  %226 = vmatpush.msra.mxu0 0.0
  %227 = vmatpush.msra.mxu0 0.0
  %228 = vmatpush.msra.mxu0 0.0
  %229 = vmatpush.msra.mxu0 0.0
  %230 = vmatpush.msra.mxu0 0.0
  %231 = vmatpush.msra.mxu0 0.0
  %232 = vmatpush.msra.mxu0 0.0
  %233 = vmatpush.msra.mxu0 0.0
  %234 = vmatpush.msra.mxu0 %v144
  %235 = vmatpush.msra.mxu0 %v143
  %236 = vmatpush.msra.mxu0 %v142
  %237 = vmatpush.msra.mxu0 %v141
  %238 = vmatpush.msra.mxu0 %v140
  %239 = vmatpush.msra.mxu0 %v139
  %240 = vmatpush.msra.mxu0 %v138
  %241 = vmatpush.msra.mxu0 %v137
  %242 = vmatmul.f32.gmra.mxu0 %v203
  %v243 = vpop.f32.mrf.mxu0
  %v244 = vadd.f32 %v164, %v243
  %245 = vmatmul.f32.gmra.mxu0 %v206
  %v246 = vpop.f32.mrf.mxu0
  %v247 = vadd.f32 %v169, %v246
  %248 = vmatmul.f32.gmra.mxu0 %v209
  %v249 = vpop.f32.mrf.mxu0
  %v250 = vadd.f32 %v174, %v249
  %251 = vmatmul.f32.gmra.mxu0 %v212
  %v252 = vpop.f32.mrf.mxu0
  %v253 = vadd.f32 %v179, %v252
  %254 = vmatmul.f32.gmra.mxu0 %v215
  %v255 = vpop.f32.mrf.mxu0
  %v256 = vadd.f32 %v184, %v255
  %257 = vmatmul.f32.gmra.mxu0 %v218
  %v258 = vpop.f32.mrf.mxu0
  %v259 = vadd.f32 %v189, %v258
  %260 = vmatmul.f32.gmra.mxu0 %v221
  %v261 = vpop.f32.mrf.mxu0
  %v262 = vadd.f32 %v194, %v261
  %263 = vmatmul.f32.gmra.mxu0 %v224
  %v264 = vpop.f32.mrf.mxu0
  %v265 = vadd.f32 %v199, %v264
  %266 = vdwg.mxu0
  %v267 = vmul.f32 %v244, 0.5
  %v268 = vmul.f32 %v247, 0.5
  %v269 = vmul.f32 %v250, 0.5
  %v270 = vmul.f32 %v253, 0.5
  %v271 = vmul.f32 %v256, 0.5
  %v272 = vmul.f32 %v259, 0.5
  %v273 = vmul.f32 %v262, 0.5
  %v274 = vmul.f32 %v265, 0.5
  %v275 = vmul.f32 %v244, 0.044715
  %v276 = vmul.f32 %v247, 0.044715
  %v277 = vmul.f32 %v250, 0.044715
  %v278 = vmul.f32 %v253, 0.044715
  %v279 = vmul.f32 %v256, 0.044715
  %v280 = vmul.f32 %v259, 0.044715
  %v281 = vmul.f32 %v262, 0.044715
  %v282 = vmul.f32 %v265, 0.044715
  %v283 = vmul.f32 %v275, %v244
  %v284 = vmul.f32 %v276, %v247
  %v285 = vmul.f32 %v277, %v250
  %v286 = vmul.f32 %v278, %v253
  %v287 = vmul.f32 %v279, %v256
  %v288 = vmul.f32 %v280, %v259
  %v289 = vmul.f32 %v281, %v262
  %v290 = vmul.f32 %v282, %v265
  %v291 = vmul.f32 %v283, %v244
  %v292 = vmul.f32 %v284, %v247
  %v293 = vmul.f32 %v285, %v250
  %v294 = vmul.f32 %v286, %v253
  %v295 = vmul.f32 %v287, %v256
  %v296 = vmul.f32 %v288, %v259
  %v297 = vmul.f32 %v289, %v262
  %v298 = vmul.f32 %v290, %v265
  %v299 = vadd.f32 %v244, %v291
  %v300 = vadd.f32 %v247, %v292
  %v301 = vadd.f32 %v250, %v293
  %v302 = vadd.f32 %v253, %v294
  %v303 = vadd.f32 %v256, %v295
  %v304 = vadd.f32 %v259, %v296
  %v305 = vadd.f32 %v262, %v297
  %v306 = vadd.f32 %v265, %v298
  %v307 = vmul.f32 %v299, 0.7978846
  %v308 = vmul.f32 %v300, 0.7978846
  %v309 = vmul.f32 %v301, 0.7978846
  %v310 = vmul.f32 %v302, 0.7978846
  %v311 = vmul.f32 %v303, 0.7978846
  %v312 = vmul.f32 %v304, 0.7978846
  %v313 = vmul.f32 %v305, 0.7978846
  %v314 = vmul.f32 %v306, 0.7978846
  %v315 = vtanh.pop %v307
  %v316 = vtanh.pop %v308
  %v317 = vtanh.pop %v309
  %v318 = vtanh.pop %v310
  %v319 = vtanh.pop %v311
  %v320 = vtanh.pop %v312
  %v321 = vtanh.pop %v313
  %v322 = vtanh.pop %v314
  %v323 = vadd.f32 %v315, 1.0
  %v324 = vadd.f32 %v316, 1.0
  %v325 = vadd.f32 %v317, 1.0
  %v326 = vadd.f32 %v318, 1.0
  %v327 = vadd.f32 %v319, 1.0
  %v328 = vadd.f32 %v320, 1.0
  %v329 = vadd.f32 %v321, 1.0
  %v330 = vadd.f32 %v322, 1.0
  %v331 = vmul.f32 %v267, %v323
  %v332 = vmul.f32 %v268, %v324
  %v333 = vmul.f32 %v269, %v325
  %v334 = vmul.f32 %v270, %v326
  %v335 = vmul.f32 %v271, %v327
  %v336 = vmul.f32 %v272, %v328
  %v337 = vmul.f32 %v273, %v329
  %v338 = vmul.f32 %v274, %v330
  %v339 = vld [vmem:[%s7] sm:$0xff]
  %v340 = vld [vmem:[%s7 + $0x8] sm:$0xff]
  %v341 = vld [vmem:[%s7 + $0x10] sm:$0xff]
  %v342 = vld [vmem:[%s7 + $0x18] sm:$0xff]
  %v343 = vld [vmem:[%s7 + $0x20] sm:$0xff]
  %v344 = vld [vmem:[%s7 + $0x28] sm:$0xff]
  %v345 = vld [vmem:[%s7 + $0x30] sm:$0xff]
  %v346 = vld [vmem:[%s7 + $0x38] sm:$0xff]
  %vm347 = vcmask 261120
  %v348 = vsel %vm347, %v331, 0.0
  %349 = vadd.xlane.f32.xlu0 %v348
  %v350 = vpop.xlane.xlu0 %349
  %v351 = vsel %vm347, %v332, 0.0
  %352 = vadd.xlane.f32.xlu0 %v351
  %v353 = vpop.xlane.xlu0 %352
  %v354 = vsel %vm347, %v333, 0.0
  %355 = vadd.xlane.f32.xlu0 %v354
  %v356 = vpop.xlane.xlu0 %355
  %v357 = vsel %vm347, %v334, 0.0
  %358 = vadd.xlane.f32.xlu0 %v357
  %v359 = vpop.xlane.xlu0 %358
  %v360 = vsel %vm347, %v335, 0.0
  %361 = vadd.xlane.f32.xlu0 %v360
  %v362 = vpop.xlane.xlu0 %361
  %v363 = vsel %vm347, %v336, 0.0
  %364 = vadd.xlane.f32.xlu0 %v363
  %v365 = vpop.xlane.xlu0 %364
  %v366 = vsel %vm347, %v337, 0.0
  %367 = vadd.xlane.f32.xlu0 %v366
  %v368 = vpop.xlane.xlu0 %367
  %v369 = vsel %vm347, %v338, 0.0
  %370 = vadd.xlane.f32.xlu0 %v369
  %v371 = vpop.xlane.xlu0 %370
  %v373 = vsel %vm201, %v339, 0
  %v376 = vsel %vm201, %v340, 0
  %v379 = vsel %vm201, %v341, 0
  %v382 = vsel %vm201, %v342, 0
  %v385 = vsel %vm201, %v343, 0
  %v388 = vsel %vm201, %v344, 0
  %v391 = vsel %vm201, %v345, 0
  %v394 = vsel %vm201, %v346, 0
  %396 = vmatpush.msra.mxu0 0.0
  %397 = vmatpush.msra.mxu0 0.0
  %398 = vmatpush.msra.mxu0 0.0
  %399 = vmatpush.msra.mxu0 0.0
  %400 = vmatpush.msra.mxu0 0.0
  %401 = vmatpush.msra.mxu0 0.0
  %402 = vmatpush.msra.mxu0 0.0
  %403 = vmatpush.msra.mxu0 0.0
  %404 = vmatpush.msra.mxu0 %v371
  %405 = vmatpush.msra.mxu0 %v368
  %406 = vmatpush.msra.mxu0 %v365
  %407 = vmatpush.msra.mxu0 %v362
  %408 = vmatpush.msra.mxu0 %v359
  %409 = vmatpush.msra.mxu0 %v356
  %410 = vmatpush.msra.mxu0 %v353
  %411 = vmatpush.msra.mxu0 %v350
  %412 = vmatmul.f32.gmra.mxu0 %v373
  %v413 = vpop.f32.mrf.mxu0
  %v414 = vadd.f32 0.0, %v413
  %415 = vmatmul.f32.gmra.mxu0 %v376
  %v416 = vpop.f32.mrf.mxu0
  %v417 = vadd.f32 0.0, %v416
  %418 = vmatmul.f32.gmra.mxu0 %v379
  %v419 = vpop.f32.mrf.mxu0
  %v420 = vadd.f32 0.0, %v419
  %421 = vmatmul.f32.gmra.mxu0 %v382
  %v422 = vpop.f32.mrf.mxu0
  %v423 = vadd.f32 0.0, %v422
  %424 = vmatmul.f32.gmra.mxu0 %v385
  %v425 = vpop.f32.mrf.mxu0
  %v426 = vadd.f32 0.0, %v425
  %427 = vmatmul.f32.gmra.mxu0 %v388
  %v428 = vpop.f32.mrf.mxu0
  %v429 = vadd.f32 0.0, %v428
  %430 = vmatmul.f32.gmra.mxu0 %v391
  %v431 = vpop.f32.mrf.mxu0
  %v432 = vadd.f32 0.0, %v431
  %433 = vmatmul.f32.gmra.mxu0 %v394
  %v434 = vpop.f32.mrf.mxu0
  %v435 = vadd.f32 0.0, %v434
  %436 = vdwg.mxu0
  %438 = vset.pattern.permute.xlu0 0
  %439 = vperm.xlu0 %438, %v414
  %v440 = vpop.permute.xlu0 %439
  %443 = vset.pattern.permute.xlu0 0
  %444 = vperm.xlu0 %443, %v417
  %v445 = vpop.permute.xlu0 %444
  %448 = vset.pattern.permute.xlu0 0
  %449 = vperm.xlu0 %448, %v420
  %v450 = vpop.permute.xlu0 %449
  %453 = vset.pattern.permute.xlu0 0
  %454 = vperm.xlu0 %453, %v423
  %v455 = vpop.permute.xlu0 %454
  %458 = vset.pattern.permute.xlu0 0
  %459 = vperm.xlu0 %458, %v426
  %v460 = vpop.permute.xlu0 %459
  %463 = vset.pattern.permute.xlu0 0
  %464 = vperm.xlu0 %463, %v429
  %v465 = vpop.permute.xlu0 %464
  %468 = vset.pattern.permute.xlu0 0
  %469 = vperm.xlu0 %468, %v432
  %v470 = vpop.permute.xlu0 %469
  %473 = vset.pattern.permute.xlu0 0
  %474 = vperm.xlu0 %473, %v435
  %v475 = vpop.permute.xlu0 %474
  %v477 = vsub.f32 %v331, %v440
  %v478 = vsub.f32 %v332, %v445
  %v479 = vsub.f32 %v333, %v450
  %v480 = vsub.f32 %v334, %v455
  %v481 = vsub.f32 %v335, %v460
  %v482 = vsub.f32 %v336, %v465
  %v483 = vsub.f32 %v337, %v470
  %v484 = vsub.f32 %v338, %v475
  %v485 = vmul.f32 %v477, %v477
  %v486 = vmul.f32 %v478, %v478
  %v487 = vmul.f32 %v479, %v479
  %v488 = vmul.f32 %v480, %v480
  %v489 = vmul.f32 %v481, %v481
  %v490 = vmul.f32 %v482, %v482
  %v491 = vmul.f32 %v483, %v483
  %v492 = vmul.f32 %v484, %v484
  %v493 = vsel %vm347, %v485, 0.0
  %494 = vadd.xlane.f32.xlu0 %v493
  %v495 = vpop.xlane.xlu0 %494
  %v496 = vsel %vm347, %v486, 0.0
  %497 = vadd.xlane.f32.xlu0 %v496
  %v498 = vpop.xlane.xlu0 %497
  %v499 = vsel %vm347, %v487, 0.0
  %500 = vadd.xlane.f32.xlu0 %v499
  %v501 = vpop.xlane.xlu0 %500
  %v502 = vsel %vm347, %v488, 0.0
  %503 = vadd.xlane.f32.xlu0 %v502
  %v504 = vpop.xlane.xlu0 %503
  %v505 = vsel %vm347, %v489, 0.0
  %506 = vadd.xlane.f32.xlu0 %v505
  %v507 = vpop.xlane.xlu0 %506
  %v508 = vsel %vm347, %v490, 0.0
  %509 = vadd.xlane.f32.xlu0 %v508
  %v510 = vpop.xlane.xlu0 %509
  %v511 = vsel %vm347, %v491, 0.0
  %512 = vadd.xlane.f32.xlu0 %v511
  %v513 = vpop.xlane.xlu0 %512
  %v514 = vsel %vm347, %v492, 0.0
  %515 = vadd.xlane.f32.xlu0 %v514
  %v516 = vpop.xlane.xlu0 %515
  %517 = vmatpush.msra.mxu0 0.0
  %518 = vmatpush.msra.mxu0 0.0
  %519 = vmatpush.msra.mxu0 0.0
  %520 = vmatpush.msra.mxu0 0.0
  %521 = vmatpush.msra.mxu0 0.0
  %522 = vmatpush.msra.mxu0 0.0
  %523 = vmatpush.msra.mxu0 0.0
  %524 = vmatpush.msra.mxu0 0.0
  %525 = vmatpush.msra.mxu0 %v516
  %526 = vmatpush.msra.mxu0 %v513
  %527 = vmatpush.msra.mxu0 %v510
  %528 = vmatpush.msra.mxu0 %v507
  %529 = vmatpush.msra.mxu0 %v504
  %530 = vmatpush.msra.mxu0 %v501
  %531 = vmatpush.msra.mxu0 %v498
  %532 = vmatpush.msra.mxu0 %v495
  %533 = vmatmul.f32.gmra.mxu0 %v373
  %v534 = vpop.f32.mrf.mxu0
  %v535 = vadd.f32 1e-05, %v534
  %536 = vmatmul.f32.gmra.mxu0 %v376
  %v537 = vpop.f32.mrf.mxu0
  %v538 = vadd.f32 1e-05, %v537
  %539 = vmatmul.f32.gmra.mxu0 %v379
  %v540 = vpop.f32.mrf.mxu0
  %v541 = vadd.f32 1e-05, %v540
  %542 = vmatmul.f32.gmra.mxu0 %v382
  %v543 = vpop.f32.mrf.mxu0
  %v544 = vadd.f32 1e-05, %v543
  %545 = vmatmul.f32.gmra.mxu0 %v385
  %v546 = vpop.f32.mrf.mxu0
  %v547 = vadd.f32 1e-05, %v546
  %548 = vmatmul.f32.gmra.mxu0 %v388
  %v549 = vpop.f32.mrf.mxu0
  %v550 = vadd.f32 1e-05, %v549
  %551 = vmatmul.f32.gmra.mxu0 %v391
  %v552 = vpop.f32.mrf.mxu0
  %v553 = vadd.f32 1e-05, %v552
  %554 = vmatmul.f32.gmra.mxu0 %v394
  %v555 = vpop.f32.mrf.mxu0
  %v556 = vadd.f32 1e-05, %v555
  %557 = vdwg.mxu0
  %v558 = vrsqrt.pop %v535
  %v559 = vmul.f32 %v558, %v535
  %v560 = vmul.f32 %v559, %v558
  %v561 = vmul.f32 0.5, %v560
  %v562 = vsub.f32 1.5, %v561
  %v563 = vmul.f32 %v558, %v562
  %vm564 = vweird.f32 %v535
  %vm565 = vweird.f32 %v558
  %vm566 = vmor %vm564, %vm565
  %v567 = vsel %vm566, %v558, %v563
  %v568 = vrsqrt.pop %v538
  %v569 = vmul.f32 %v568, %v538
  %v570 = vmul.f32 %v569, %v568
  %v571 = vmul.f32 0.5, %v570
  %v572 = vsub.f32 1.5, %v571
  %v573 = vmul.f32 %v568, %v572
  %vm574 = vweird.f32 %v538
  %vm575 = vweird.f32 %v568
  %vm576 = vmor %vm574, %vm575
  %v577 = vsel %vm576, %v568, %v573
  %v578 = vrsqrt.pop %v541
  %v579 = vmul.f32 %v578, %v541
  %v580 = vmul.f32 %v579, %v578
  %v581 = vmul.f32 0.5, %v580
  %v582 = vsub.f32 1.5, %v581
  %v583 = vmul.f32 %v578, %v582
  %vm584 = vweird.f32 %v541
  %vm585 = vweird.f32 %v578
  %vm586 = vmor %vm584, %vm585
  %v587 = vsel %vm586, %v578, %v583
  %v588 = vrsqrt.pop %v544
  %v589 = vmul.f32 %v588, %v544
  %v590 = vmul.f32 %v589, %v588
  %v591 = vmul.f32 0.5, %v590
  %v592 = vsub.f32 1.5, %v591
  %v593 = vmul.f32 %v588, %v592
  %vm594 = vweird.f32 %v544
  %vm595 = vweird.f32 %v588
  %vm596 = vmor %vm594, %vm595
  %v597 = vsel %vm596, %v588, %v593
  %v598 = vrsqrt.pop %v547
  %v599 = vmul.f32 %v598, %v547
  %v600 = vmul.f32 %v599, %v598
  %v601 = vmul.f32 0.5, %v600
  %v602 = vsub.f32 1.5, %v601
  %v603 = vmul.f32 %v598, %v602
  %vm604 = vweird.f32 %v547
  %vm605 = vweird.f32 %v598
  %vm606 = vmor %vm604, %vm605
  %v607 = vsel %vm606, %v598, %v603
  %v608 = vrsqrt.pop %v550
  %v609 = vmul.f32 %v608, %v550
  %v610 = vmul.f32 %v609, %v608
  %v611 = vmul.f32 0.5, %v610
  %v612 = vsub.f32 1.5, %v611
  %v613 = vmul.f32 %v608, %v612
  %vm614 = vweird.f32 %v550
  %vm615 = vweird.f32 %v608
  %vm616 = vmor %vm614, %vm615
  %v617 = vsel %vm616, %v608, %v613
  %v618 = vrsqrt.pop %v553
  %v619 = vmul.f32 %v618, %v553
  %v620 = vmul.f32 %v619, %v618
  %v621 = vmul.f32 0.5, %v620
  %v622 = vsub.f32 1.5, %v621
  %v623 = vmul.f32 %v618, %v622
  %vm624 = vweird.f32 %v553
  %vm625 = vweird.f32 %v618
  %vm626 = vmor %vm624, %vm625
  %v627 = vsel %vm626, %v618, %v623
  %v628 = vrsqrt.pop %v556
  %v629 = vmul.f32 %v628, %v556
  %v630 = vmul.f32 %v629, %v628
  %v631 = vmul.f32 0.5, %v630
  %v632 = vsub.f32 1.5, %v631
  %v633 = vmul.f32 %v628, %v632
  %vm634 = vweird.f32 %v556
  %vm635 = vweird.f32 %v628
  %vm636 = vmor %vm634, %vm635
  %v637 = vsel %vm636, %v628, %v633
  %639 = vset.pattern.permute.xlu0 0
  %640 = vperm.xlu0 %639, %v567
  %v641 = vpop.permute.xlu0 %640
  %644 = vset.pattern.permute.xlu0 0
  %645 = vperm.xlu0 %644, %v577
  %v646 = vpop.permute.xlu0 %645
  %649 = vset.pattern.permute.xlu0 0
  %650 = vperm.xlu0 %649, %v587
  %v651 = vpop.permute.xlu0 %650
  %654 = vset.pattern.permute.xlu0 0
  %655 = vperm.xlu0 %654, %v597
  %v656 = vpop.permute.xlu0 %655
  %659 = vset.pattern.permute.xlu0 0
  %660 = vperm.xlu0 %659, %v607
  %v661 = vpop.permute.xlu0 %660
  %664 = vset.pattern.permute.xlu0 0
  %665 = vperm.xlu0 %664, %v617
  %v666 = vpop.permute.xlu0 %665
  %669 = vset.pattern.permute.xlu0 0
  %670 = vperm.xlu0 %669, %v627
  %v671 = vpop.permute.xlu0 %670
  %674 = vset.pattern.permute.xlu0 0
  %675 = vperm.xlu0 %674, %v637
  %v676 = vpop.permute.xlu0 %675
  %v678 = vmul.f32 %v477, %v641
  %v679 = vmul.f32 %v478, %v646
  %v680 = vmul.f32 %v479, %v651
  %v681 = vmul.f32 %v480, %v656
  %v682 = vmul.f32 %v481, %v661
  %v683 = vmul.f32 %v482, %v666
  %v684 = vmul.f32 %v483, %v671
  %v685 = vmul.f32 %v484, %v676
  %v686 = vld [vmem:[%s9] sm:$0xff]
  %v687 = vld [vmem:[%s9 + $0x8] sm:$0xff]
  %v688 = vld [vmem:[%s9 + $0x10] sm:$0xff]
  %v689 = vld [vmem:[%s9 + $0x18] sm:$0xff]
  %v690 = vld [vmem:[%s9 + $0x20] sm:$0xff]
  %v691 = vld [vmem:[%s9 + $0x28] sm:$0xff]
  %v692 = vld [vmem:[%s9 + $0x30] sm:$0xff]
  %v693 = vld [vmem:[%s9 + $0x38] sm:$0xff]
  %695 = vset.pattern.permute.xlu0 0
  %696 = vperm.xlu0 %695, %v686
  %v697 = vpop.permute.xlu0 %696
  %700 = vset.pattern.permute.xlu0 0
  %701 = vperm.xlu0 %700, %v687
  %v702 = vpop.permute.xlu0 %701
  %705 = vset.pattern.permute.xlu0 0
  %706 = vperm.xlu0 %705, %v688
  %v707 = vpop.permute.xlu0 %706
  %710 = vset.pattern.permute.xlu0 0
  %711 = vperm.xlu0 %710, %v689
  %v712 = vpop.permute.xlu0 %711
  %715 = vset.pattern.permute.xlu0 0
  %716 = vperm.xlu0 %715, %v690
  %v717 = vpop.permute.xlu0 %716
  %720 = vset.pattern.permute.xlu0 0
  %721 = vperm.xlu0 %720, %v691
  %v722 = vpop.permute.xlu0 %721
  %725 = vset.pattern.permute.xlu0 0
  %726 = vperm.xlu0 %725, %v692
  %v727 = vpop.permute.xlu0 %726
  %730 = vset.pattern.permute.xlu0 0
  %731 = vperm.xlu0 %730, %v693
  %v732 = vpop.permute.xlu0 %731
  %v734 = vmul.f32 %v678, %v697
  %v735 = vmul.f32 %v679, %v702
  %v736 = vmul.f32 %v680, %v707
  %v737 = vmul.f32 %v681, %v712
  %v738 = vmul.f32 %v682, %v717
  %v739 = vmul.f32 %v683, %v722
  %v740 = vmul.f32 %v684, %v727
  %v741 = vmul.f32 %v685, %v732
  %v742 = vld [vmem:[%s11] sm:$0xff]
  %v743 = vld [vmem:[%s11 + $0x8] sm:$0xff]
  %v744 = vld [vmem:[%s11 + $0x10] sm:$0xff]
  %v745 = vld [vmem:[%s11 + $0x18] sm:$0xff]
  %v746 = vld [vmem:[%s11 + $0x20] sm:$0xff]
  %v747 = vld [vmem:[%s11 + $0x28] sm:$0xff]
  %v748 = vld [vmem:[%s11 + $0x30] sm:$0xff]
  %v749 = vld [vmem:[%s11 + $0x38] sm:$0xff]
  %751 = vset.pattern.permute.xlu0 0
  %752 = vperm.xlu0 %751, %v742
  %v753 = vpop.permute.xlu0 %752
  %756 = vset.pattern.permute.xlu0 0
  %757 = vperm.xlu0 %756, %v743
  %v758 = vpop.permute.xlu0 %757
  %761 = vset.pattern.permute.xlu0 0
  %762 = vperm.xlu0 %761, %v744
  %v763 = vpop.permute.xlu0 %762
  %766 = vset.pattern.permute.xlu0 0
  %767 = vperm.xlu0 %766, %v745
  %v768 = vpop.permute.xlu0 %767
  %771 = vset.pattern.permute.xlu0 0
  %772 = vperm.xlu0 %771, %v746
  %v773 = vpop.permute.xlu0 %772
  %776 = vset.pattern.permute.xlu0 0
  %777 = vperm.xlu0 %776, %v747
  %v778 = vpop.permute.xlu0 %777
  %781 = vset.pattern.permute.xlu0 0
  %782 = vperm.xlu0 %781, %v748
  %v783 = vpop.permute.xlu0 %782
  %786 = vset.pattern.permute.xlu0 0
  %787 = vperm.xlu0 %786, %v749
  %v788 = vpop.permute.xlu0 %787
  %v790 = vadd.f32 %v734, %v753
  %v791 = vadd.f32 %v735, %v758
  %v792 = vadd.f32 %v736, %v763
  %v793 = vadd.f32 %v737, %v768
  %v794 = vadd.f32 %v738, %v773
  %v795 = vadd.f32 %v739, %v778
  %v796 = vadd.f32 %v740, %v783
  %v797 = vadd.f32 %v741, %v788
  %v798 = vld [vmem:[%s13] sm:$0xff]
  %v799 = vld [vmem:[%s13 + $0x8] sm:$0xff]
  %v800 = vld [vmem:[%s13 + $0x10] sm:$0xff]
  %v801 = vld [vmem:[%s13 + $0x18] sm:$0xff]
  %v802 = vld [vmem:[%s15] sm:$0xff]
  %v803 = vld [vmem:[%s15 + $0x8] sm:$0xff]
  %v804 = vld [vmem:[%s15 + $0x10] sm:$0xff]
  %v805 = vld [vmem:[%s15 + $0x18] sm:$0xff]
  %807 = vset.pattern.permute.xlu0 0
  %808 = vperm.xlu0 %807, %v802
  %v809 = vpop.permute.xlu0 %808
  %812 = vset.pattern.permute.xlu0 0
  %813 = vperm.xlu0 %812, %v803
  %v814 = vpop.permute.xlu0 %813
  %817 = vset.pattern.permute.xlu0 0
  %818 = vperm.xlu0 %817, %v804
  %v819 = vpop.permute.xlu0 %818
  %822 = vset.pattern.permute.xlu0 0
  %823 = vperm.xlu0 %822, %v805
  %v824 = vpop.permute.xlu0 %823
  %v827 = vsel %vm201, %v798, 0
  %v830 = vsel %vm201, %v799, 0
  %v833 = vsel %vm201, %v800, 0
  %v836 = vsel %vm201, %v801, 0
  %838 = vmatpush.msra.mxu0 0.0
  %839 = vmatpush.msra.mxu0 0.0
  %840 = vmatpush.msra.mxu0 0.0
  %841 = vmatpush.msra.mxu0 0.0
  %842 = vmatpush.msra.mxu0 0.0
  %843 = vmatpush.msra.mxu0 0.0
  %844 = vmatpush.msra.mxu0 0.0
  %845 = vmatpush.msra.mxu0 0.0
  %846 = vmatpush.msra.mxu0 %v797
  %847 = vmatpush.msra.mxu0 %v796
  %848 = vmatpush.msra.mxu0 %v795
  %849 = vmatpush.msra.mxu0 %v794
  %850 = vmatpush.msra.mxu0 %v793
  %851 = vmatpush.msra.mxu0 %v792
  %852 = vmatpush.msra.mxu0 %v791
  %853 = vmatpush.msra.mxu0 %v790
  %854 = vmatmul.f32.gmra.mxu0 %v827
  %v855 = vpop.f32.mrf.mxu0
  %v856 = vadd.f32 %v809, %v855
  %857 = vmatmul.f32.gmra.mxu0 %v830
  %v858 = vpop.f32.mrf.mxu0
  %v859 = vadd.f32 %v814, %v858
  %860 = vmatmul.f32.gmra.mxu0 %v833
  %v861 = vpop.f32.mrf.mxu0
  %v862 = vadd.f32 %v819, %v861
  %863 = vmatmul.f32.gmra.mxu0 %v836
  %v864 = vpop.f32.mrf.mxu0
  %v865 = vadd.f32 %v824, %v864
  %866 = vdwg.mxu0
  %v867 = vmul.f32 %v856, 0.5
  %v868 = vmul.f32 %v859, 0.5
  %v869 = vmul.f32 %v862, 0.5
  %v870 = vmul.f32 %v865, 0.5
  %v871 = vmul.f32 %v856, 0.044715
  %v872 = vmul.f32 %v859, 0.044715
  %v873 = vmul.f32 %v862, 0.044715
  %v874 = vmul.f32 %v865, 0.044715
  %v875 = vmul.f32 %v871, %v856
  %v876 = vmul.f32 %v872, %v859
  %v877 = vmul.f32 %v873, %v862
  %v878 = vmul.f32 %v874, %v865
  %v879 = vmul.f32 %v875, %v856
  %v880 = vmul.f32 %v876, %v859
  %v881 = vmul.f32 %v877, %v862
  %v882 = vmul.f32 %v878, %v865
  %v883 = vadd.f32 %v856, %v879
  %v884 = vadd.f32 %v859, %v880
  %v885 = vadd.f32 %v862, %v881
  %v886 = vadd.f32 %v865, %v882
  %v887 = vmul.f32 %v883, 0.7978846
  %v888 = vmul.f32 %v884, 0.7978846
  %v889 = vmul.f32 %v885, 0.7978846
  %v890 = vmul.f32 %v886, 0.7978846
  %v891 = vtanh.pop %v887
  %v892 = vtanh.pop %v888
  %v893 = vtanh.pop %v889
  %v894 = vtanh.pop %v890
  %v895 = vadd.f32 %v891, 1.0
  %v896 = vadd.f32 %v892, 1.0
  %v897 = vadd.f32 %v893, 1.0
  %v898 = vadd.f32 %v894, 1.0
  %v899 = vmul.f32 %v867, %v895
  %v900 = vmul.f32 %v868, %v896
  %v901 = vmul.f32 %v869, %v897
  %v902 = vmul.f32 %v870, %v898
  %v903 = vld [vmem:[%s17] sm:$0xff]
  %v904 = vld [vmem:[%s17 + $0x8] sm:$0xff]
  %v905 = vld [vmem:[%s17 + $0x10] sm:$0xff]
  %v906 = vld [vmem:[%s17 + $0x18] sm:$0xff]
  %v907 = vsel %vm347, %v899, 0.0
  %908 = vadd.xlane.f32.xlu0 %v907
  %v909 = vpop.xlane.xlu0 %908
  %v910 = vsel %vm347, %v900, 0.0
  %911 = vadd.xlane.f32.xlu0 %v910
  %v912 = vpop.xlane.xlu0 %911
  %v913 = vsel %vm347, %v901, 0.0
  %914 = vadd.xlane.f32.xlu0 %v913
  %v915 = vpop.xlane.xlu0 %914
  %v916 = vsel %vm347, %v902, 0.0
  %917 = vadd.xlane.f32.xlu0 %v916
  %v918 = vpop.xlane.xlu0 %917
  %v920 = vsel %vm347, %v903, 0
  %v923 = vsel %vm347, %v904, 0
  %v926 = vsel %vm347, %v905, 0
  %v929 = vsel %vm347, %v906, 0
  %931 = vmatpush.msra.mxu0 0.0
  %932 = vmatpush.msra.mxu0 0.0
  %933 = vmatpush.msra.mxu0 0.0
  %934 = vmatpush.msra.mxu0 0.0
  %935 = vmatpush.msra.mxu0 0.0
  %936 = vmatpush.msra.mxu0 0.0
  %937 = vmatpush.msra.mxu0 0.0
  %938 = vmatpush.msra.mxu0 0.0
  %939 = vmatpush.msra.mxu0 0.0
  %940 = vmatpush.msra.mxu0 0.0
  %941 = vmatpush.msra.mxu0 0.0
  %942 = vmatpush.msra.mxu0 0.0
  %943 = vmatpush.msra.mxu0 %v918
  %944 = vmatpush.msra.mxu0 %v915
  %945 = vmatpush.msra.mxu0 %v912
  %946 = vmatpush.msra.mxu0 %v909
  %947 = vmatmul.f32.gmra.mxu0 %v920
  %v948 = vpop.f32.mrf.mxu0
  %v949 = vadd.f32 0.0, %v948
  %950 = vmatmul.f32.gmra.mxu0 %v923
  %v951 = vpop.f32.mrf.mxu0
  %v952 = vadd.f32 0.0, %v951
  %953 = vmatmul.f32.gmra.mxu0 %v926
  %v954 = vpop.f32.mrf.mxu0
  %v955 = vadd.f32 0.0, %v954
  %956 = vmatmul.f32.gmra.mxu0 %v929
  %v957 = vpop.f32.mrf.mxu0
  %v958 = vadd.f32 0.0, %v957
  %959 = vdwg.mxu0
  %961 = vset.pattern.permute.xlu0 0
  %962 = vperm.xlu0 %961, %v949
  %v963 = vpop.permute.xlu0 %962
  %966 = vset.pattern.permute.xlu0 0
  %967 = vperm.xlu0 %966, %v952
  %v968 = vpop.permute.xlu0 %967
  %971 = vset.pattern.permute.xlu0 0
  %972 = vperm.xlu0 %971, %v955
  %v973 = vpop.permute.xlu0 %972
  %976 = vset.pattern.permute.xlu0 0
  %977 = vperm.xlu0 %976, %v958
  %v978 = vpop.permute.xlu0 %977
  %v980 = vsub.f32 %v899, %v963
  %v981 = vsub.f32 %v900, %v968
  %v982 = vsub.f32 %v901, %v973
  %v983 = vsub.f32 %v902, %v978
  %v984 = vmul.f32 %v980, %v980
  %v985 = vmul.f32 %v981, %v981
  %v986 = vmul.f32 %v982, %v982
  %v987 = vmul.f32 %v983, %v983
  %v988 = vsel %vm347, %v984, 0.0
  %989 = vadd.xlane.f32.xlu0 %v988
  %v990 = vpop.xlane.xlu0 %989
  %v991 = vsel %vm347, %v985, 0.0
  %992 = vadd.xlane.f32.xlu0 %v991
  %v993 = vpop.xlane.xlu0 %992
  %v994 = vsel %vm347, %v986, 0.0
  %995 = vadd.xlane.f32.xlu0 %v994
  %v996 = vpop.xlane.xlu0 %995
  %v997 = vsel %vm347, %v987, 0.0
  %998 = vadd.xlane.f32.xlu0 %v997
  %v999 = vpop.xlane.xlu0 %998
  %1000 = vmatpush.msra.mxu0 0.0
  %1001 = vmatpush.msra.mxu0 0.0
  %1002 = vmatpush.msra.mxu0 0.0
  %1003 = vmatpush.msra.mxu0 0.0
  %1004 = vmatpush.msra.mxu0 0.0
  %1005 = vmatpush.msra.mxu0 0.0
  %1006 = vmatpush.msra.mxu0 0.0
  %1007 = vmatpush.msra.mxu0 0.0
  %1008 = vmatpush.msra.mxu0 0.0
  %1009 = vmatpush.msra.mxu0 0.0
  %1010 = vmatpush.msra.mxu0 0.0
  %1011 = vmatpush.msra.mxu0 0.0
  %1012 = vmatpush.msra.mxu0 %v999
  %1013 = vmatpush.msra.mxu0 %v996
  %1014 = vmatpush.msra.mxu0 %v993
  %1015 = vmatpush.msra.mxu0 %v990
  %1016 = vmatmul.f32.gmra.mxu0 %v920
  %v1017 = vpop.f32.mrf.mxu0
  %v1018 = vadd.f32 1e-05, %v1017
  %1019 = vmatmul.f32.gmra.mxu0 %v923
  %v1020 = vpop.f32.mrf.mxu0
  %v1021 = vadd.f32 1e-05, %v1020
  %1022 = vmatmul.f32.gmra.mxu0 %v926
  %v1023 = vpop.f32.mrf.mxu0
  %v1024 = vadd.f32 1e-05, %v1023
  %1025 = vmatmul.f32.gmra.mxu0 %v929
  %v1026 = vpop.f32.mrf.mxu0
  %v1027 = vadd.f32 1e-05, %v1026
  %1028 = vdwg.mxu0
  %v1029 = vrsqrt.pop %v1018
  %v1030 = vmul.f32 %v1029, %v1018
  %v1031 = vmul.f32 %v1030, %v1029
  %v1032 = vmul.f32 0.5, %v1031
  %v1033 = vsub.f32 1.5, %v1032
  %v1034 = vmul.f32 %v1029, %v1033
  %vm1035 = vweird.f32 %v1018
  %vm1036 = vweird.f32 %v1029
  %vm1037 = vmor %vm1035, %vm1036
  %v1038 = vsel %vm1037, %v1029, %v1034
  %v1039 = vrsqrt.pop %v1021
  %v1040 = vmul.f32 %v1039, %v1021
  %v1041 = vmul.f32 %v1040, %v1039
  %v1042 = vmul.f32 0.5, %v1041
  %v1043 = vsub.f32 1.5, %v1042
  %v1044 = vmul.f32 %v1039, %v1043
  %vm1045 = vweird.f32 %v1021
  %vm1046 = vweird.f32 %v1039
  %vm1047 = vmor %vm1045, %vm1046
  %v1048 = vsel %vm1047, %v1039, %v1044
  %v1049 = vrsqrt.pop %v1024
  %v1050 = vmul.f32 %v1049, %v1024
  %v1051 = vmul.f32 %v1050, %v1049
  %v1052 = vmul.f32 0.5, %v1051
  %v1053 = vsub.f32 1.5, %v1052
  %v1054 = vmul.f32 %v1049, %v1053
  %vm1055 = vweird.f32 %v1024
  %vm1056 = vweird.f32 %v1049
  %vm1057 = vmor %vm1055, %vm1056
  %v1058 = vsel %vm1057, %v1049, %v1054
  %v1059 = vrsqrt.pop %v1027
  %v1060 = vmul.f32 %v1059, %v1027
  %v1061 = vmul.f32 %v1060, %v1059
  %v1062 = vmul.f32 0.5, %v1061
  %v1063 = vsub.f32 1.5, %v1062
  %v1064 = vmul.f32 %v1059, %v1063
  %vm1065 = vweird.f32 %v1027
  %vm1066 = vweird.f32 %v1059
  %vm1067 = vmor %vm1065, %vm1066
  %v1068 = vsel %vm1067, %v1059, %v1064
  %1070 = vset.pattern.permute.xlu0 0
  %1071 = vperm.xlu0 %1070, %v1038
  %v1072 = vpop.permute.xlu0 %1071
  %1075 = vset.pattern.permute.xlu0 0
  %1076 = vperm.xlu0 %1075, %v1048
  %v1077 = vpop.permute.xlu0 %1076
  %1080 = vset.pattern.permute.xlu0 0
  %1081 = vperm.xlu0 %1080, %v1058
  %v1082 = vpop.permute.xlu0 %1081
  %1085 = vset.pattern.permute.xlu0 0
  %1086 = vperm.xlu0 %1085, %v1068
  %v1087 = vpop.permute.xlu0 %1086
  %v1089 = vmul.f32 %v980, %v1072
  %v1090 = vmul.f32 %v981, %v1077
  %v1091 = vmul.f32 %v982, %v1082
  %v1092 = vmul.f32 %v983, %v1087
  %v1093 = vld [vmem:[%s19] sm:$0xff]
  %v1094 = vld [vmem:[%s19 + $0x8] sm:$0xff]
  %v1095 = vld [vmem:[%s19 + $0x10] sm:$0xff]
  %v1096 = vld [vmem:[%s19 + $0x18] sm:$0xff]
  %1098 = vset.pattern.permute.xlu0 0
  %1099 = vperm.xlu0 %1098, %v1093
  %v1100 = vpop.permute.xlu0 %1099
  %1103 = vset.pattern.permute.xlu0 0
  %1104 = vperm.xlu0 %1103, %v1094
  %v1105 = vpop.permute.xlu0 %1104
  %1108 = vset.pattern.permute.xlu0 0
  %1109 = vperm.xlu0 %1108, %v1095
  %v1110 = vpop.permute.xlu0 %1109
  %1113 = vset.pattern.permute.xlu0 0
  %1114 = vperm.xlu0 %1113, %v1096
  %v1115 = vpop.permute.xlu0 %1114
  %v1117 = vmul.f32 %v1089, %v1100
  %v1118 = vmul.f32 %v1090, %v1105
  %v1119 = vmul.f32 %v1091, %v1110
  %v1120 = vmul.f32 %v1092, %v1115
  %v1121 = vld [vmem:[%s21] sm:$0xff]
  %v1122 = vld [vmem:[%s21 + $0x8] sm:$0xff]
  %v1123 = vld [vmem:[%s21 + $0x10] sm:$0xff]
  %v1124 = vld [vmem:[%s21 + $0x18] sm:$0xff]
  %1126 = vset.pattern.permute.xlu0 0
  %1127 = vperm.xlu0 %1126, %v1121
  %v1128 = vpop.permute.xlu0 %1127
  %1131 = vset.pattern.permute.xlu0 0
  %1132 = vperm.xlu0 %1131, %v1122
  %v1133 = vpop.permute.xlu0 %1132
  %1136 = vset.pattern.permute.xlu0 0
  %1137 = vperm.xlu0 %1136, %v1123
  %v1138 = vpop.permute.xlu0 %1137
  %1141 = vset.pattern.permute.xlu0 0
  %1142 = vperm.xlu0 %1141, %v1124
  %v1143 = vpop.permute.xlu0 %1142
  %v1145 = vadd.f32 %v1117, %v1128
  %v1146 = vadd.f32 %v1118, %v1133
  %v1147 = vadd.f32 %v1119, %v1138
  %v1148 = vadd.f32 %v1120, %v1143
  %v1149 = vld [vmem:[%s23] sm:$0xff]
  %v1150 = vld [vmem:[%s25] sm:$0xff]
  %1152 = vset.pattern.permute.xlu0 0
  %1153 = vperm.xlu0 %1152, %v1150
  %v1154 = vpop.permute.xlu0 %1153
  %v1157 = vsel %vm347, %v1149, 0
  %1159 = vmatpush.msra.mxu0 0.0
  %1160 = vmatpush.msra.mxu0 0.0
  %1161 = vmatpush.msra.mxu0 0.0
  %1162 = vmatpush.msra.mxu0 0.0
  %1163 = vmatpush.msra.mxu0 0.0
  %1164 = vmatpush.msra.mxu0 0.0
  %1165 = vmatpush.msra.mxu0 0.0
  %1166 = vmatpush.msra.mxu0 0.0
  %1167 = vmatpush.msra.mxu0 0.0
  %1168 = vmatpush.msra.mxu0 0.0
  %1169 = vmatpush.msra.mxu0 0.0
  %1170 = vmatpush.msra.mxu0 0.0
  %1171 = vmatpush.msra.mxu0 %v1148
  %1172 = vmatpush.msra.mxu0 %v1147
  %1173 = vmatpush.msra.mxu0 %v1146
  %1174 = vmatpush.msra.mxu0 %v1145
  %1175 = vmatmul.f32.gmra.mxu0 %v1157
  %v1176 = vpop.f32.mrf.mxu0
  %v1177 = vadd.f32 %v1154, %v1176
  %1178 = vdwg.mxu0
  %v1179 = vmul.f32 %v1177, 0.5
  %v1180 = vmul.f32 %v1177, 0.044715
  %v1181 = vmul.f32 %v1180, %v1177
  %v1182 = vmul.f32 %v1181, %v1177
  %v1183 = vadd.f32 %v1177, %v1182
  %v1184 = vmul.f32 %v1183, 0.7978846
  %v1185 = vtanh.pop %v1184
  %v1186 = vadd.f32 %v1185, 1.0
  %v1187 = vmul.f32 %v1179, %v1186
  %v1188 = vld [vmem:[%s27] sm:$0xff]
  %v1189 = vsel %vm347, %v1187, 0.0
  %1190 = vadd.xlane.f32.xlu0 %v1189
  %v1191 = vpop.xlane.xlu0 %1190
  %vm1192 = vcmask 64512
  %v1194 = vsel %vm1192, %v1188, 0
  %1196 = vmatpush.msra.mxu0 0.0
  %1197 = vmatpush.msra.mxu0 0.0
  %1198 = vmatpush.msra.mxu0 0.0
  %1199 = vmatpush.msra.mxu0 0.0
  %1200 = vmatpush.msra.mxu0 0.0
  %1201 = vmatpush.msra.mxu0 0.0
  %1202 = vmatpush.msra.mxu0 0.0
  %1203 = vmatpush.msra.mxu0 0.0
  %1204 = vmatpush.msra.mxu0 0.0
  %1205 = vmatpush.msra.mxu0 0.0
  %1206 = vmatpush.msra.mxu0 0.0
  %1207 = vmatpush.msra.mxu0 0.0
  %1208 = vmatpush.msra.mxu0 0.0
  %1209 = vmatpush.msra.mxu0 0.0
  %1210 = vmatpush.msra.mxu0 0.0
  %1211 = vmatpush.msra.mxu0 %v1191
  %1212 = vmatmul.f32.gmra.mxu0 %v1194
  %v1213 = vpop.f32.mrf.mxu0
  %v1214 = vadd.f32 0.0, %v1213
  %1215 = vdwg.mxu0
  %1217 = vset.pattern.permute.xlu0 0
  %1218 = vperm.xlu0 %1217, %v1214
  %v1219 = vpop.permute.xlu0 %1218
  %v1221 = vsub.f32 %v1187, %v1219
  %v1222 = vmul.f32 %v1221, %v1221
  %v1223 = vsel %vm347, %v1222, 0.0
  %1224 = vadd.xlane.f32.xlu0 %v1223
  %v1225 = vpop.xlane.xlu0 %1224
  %1226 = vmatpush.msra.mxu0 0.0
  %1227 = vmatpush.msra.mxu0 0.0
  %1228 = vmatpush.msra.mxu0 0.0
  %1229 = vmatpush.msra.mxu0 0.0
  %1230 = vmatpush.msra.mxu0 0.0
  %1231 = vmatpush.msra.mxu0 0.0
  %1232 = vmatpush.msra.mxu0 0.0
  %1233 = vmatpush.msra.mxu0 0.0
  %1234 = vmatpush.msra.mxu0 0.0
  %1235 = vmatpush.msra.mxu0 0.0
  %1236 = vmatpush.msra.mxu0 0.0
  %1237 = vmatpush.msra.mxu0 0.0
  %1238 = vmatpush.msra.mxu0 0.0
  %1239 = vmatpush.msra.mxu0 0.0
  %1240 = vmatpush.msra.mxu0 0.0
  %1241 = vmatpush.msra.mxu0 %v1225
  %1242 = vmatmul.f32.gmra.mxu0 %v1194
  %v1243 = vpop.f32.mrf.mxu0
  %v1244 = vadd.f32 1e-05, %v1243
  %1245 = vdwg.mxu0
  %v1246 = vrsqrt.pop %v1244
  %v1247 = vmul.f32 %v1246, %v1244
  %v1248 = vmul.f32 %v1247, %v1246
  %v1249 = vmul.f32 0.5, %v1248
  %v1250 = vsub.f32 1.5, %v1249
  %v1251 = vmul.f32 %v1246, %v1250
  %vm1252 = vweird.f32 %v1244
  %vm1253 = vweird.f32 %v1246
  %vm1254 = vmor %vm1252, %vm1253
  %v1255 = vsel %vm1254, %v1246, %v1251
  %1257 = vset.pattern.permute.xlu0 0
  %1258 = vperm.xlu0 %1257, %v1255
  %v1259 = vpop.permute.xlu0 %1258
  %v1261 = vmul.f32 %v1221, %v1259
  %v1262 = vld [vmem:[%s29] sm:$0xff]
  %1264 = vset.pattern.permute.xlu0 0
  %1265 = vperm.xlu0 %1264, %v1262
  %v1266 = vpop.permute.xlu0 %1265
  %v1268 = vmul.f32 %v1261, %v1266
  %v1269 = vld [vmem:[%s31] sm:$0xff]
  %1271 = vset.pattern.permute.xlu0 0
  %1272 = vperm.xlu0 %1271, %v1269
  %v1273 = vpop.permute.xlu0 %1272
  %v1275 = vadd.f32 %v1268, %v1273
  %v1276 = vld [vmem:[%s33] sm:$0xff]
  %v1277 = vld [vmem:[%s33 + $0x8] sm:$0xff]
  %1280 = vrot.lane.b32.xlu0 %v1276, 120
  %v1281 = vpop.permute.xlu0 %1280
  %1282 = vrot.lane.b32.xlu0 %v1277, 120
  %v1283 = vpop.permute.xlu0 %1282
  %1285 = vrot.lane.b32.xlu0 %v1275, 126
  %v1286 = vpop.permute.xlu0 %1285
  %v1288 = vsel %vm1192, %v1281, 0
  %v1290 = vsel %vm1192, %v1283, 0
  %1292 = vmatpush.msra.mxu0 0.0
  %1293 = vmatpush.msra.mxu0 0.0
  %1294 = vmatpush.msra.mxu0 0.0
  %1295 = vmatpush.msra.mxu0 0.0
  %1296 = vmatpush.msra.mxu0 0.0
  %1297 = vmatpush.msra.mxu0 0.0
  %1298 = vmatpush.msra.mxu0 0.0
  %1299 = vmatpush.msra.mxu0 0.0
  %1300 = vmatpush.msra.mxu0 0.0
  %1301 = vmatpush.msra.mxu0 0.0
  %1302 = vmatpush.msra.mxu0 0.0
  %1303 = vmatpush.msra.mxu0 0.0
  %1304 = vmatpush.msra.mxu0 0.0
  %1305 = vmatpush.msra.mxu0 0.0
  %1306 = vmatpush.msra.mxu0 0.0
  %1307 = vmatpush.msra.mxu0 %v1286
  %1308 = vmatmul.f32.gmra.mxu0 %v1288
  %v1309 = vpop.f32.mrf.mxu0
  %v1310 = vadd.f32 0.0, %v1309
  %1311 = vmatmul.f32.gmra.mxu0 %v1290
  %v1312 = vpop.f32.mrf.mxu0
  %v1313 = vadd.f32 0.0, %v1312
  %1314 = vdwg.mxu0
  %v1315 = vsel %vm1192, %v1276, 0
  %v1317 = vsel %vm1192, %v1277, 0
  %1319 = vmatpush.msra.mxu0 0.0
  %1320 = vmatpush.msra.mxu0 0.0
  %1321 = vmatpush.msra.mxu0 0.0
  %1322 = vmatpush.msra.mxu0 0.0
  %1323 = vmatpush.msra.mxu0 0.0
  %1324 = vmatpush.msra.mxu0 0.0
  %1325 = vmatpush.msra.mxu0 0.0
  %1326 = vmatpush.msra.mxu0 0.0
  %1327 = vmatpush.msra.mxu0 0.0
  %1328 = vmatpush.msra.mxu0 0.0
  %1329 = vmatpush.msra.mxu0 0.0
  %1330 = vmatpush.msra.mxu0 0.0
  %1331 = vmatpush.msra.mxu0 0.0
  %1332 = vmatpush.msra.mxu0 0.0
  %1333 = vmatpush.msra.mxu0 0.0
  %1334 = vmatpush.msra.mxu0 %v1275
  %1335 = vmatmul.f32.gmra.mxu0 %v1315
  %v1336 = vpop.f32.mrf.mxu0
  %v1337 = vadd.f32 %v1310, %v1336
  %1338 = vmatmul.f32.gmra.mxu0 %v1317
  %v1339 = vpop.f32.mrf.mxu0
  %v1340 = vadd.f32 %v1313, %v1339
  %1341 = vdwg.mxu0
  %1342 = vrot.lane.b32.xlu0 %v1276, 112
  %v1343 = vpop.permute.xlu0 %1342
  %1344 = vrot.lane.b32.xlu0 %v1277, 112
  %v1345 = vpop.permute.xlu0 %1344
  %1346 = vrot.lane.b32.xlu0 %v1275, 124
  %v1347 = vpop.permute.xlu0 %1346
  %v1349 = vsel %vm1192, %v1343, 0
  %v1351 = vsel %vm1192, %v1345, 0
  %1353 = vmatpush.msra.mxu0 0.0
  %1354 = vmatpush.msra.mxu0 0.0
  %1355 = vmatpush.msra.mxu0 0.0
  %1356 = vmatpush.msra.mxu0 0.0
  %1357 = vmatpush.msra.mxu0 0.0
  %1358 = vmatpush.msra.mxu0 0.0
  %1359 = vmatpush.msra.mxu0 0.0
  %1360 = vmatpush.msra.mxu0 0.0
  %1361 = vmatpush.msra.mxu0 0.0
  %1362 = vmatpush.msra.mxu0 0.0
  %1363 = vmatpush.msra.mxu0 0.0
  %1364 = vmatpush.msra.mxu0 0.0
  %1365 = vmatpush.msra.mxu0 0.0
  %1366 = vmatpush.msra.mxu0 0.0
  %1367 = vmatpush.msra.mxu0 0.0
  %1368 = vmatpush.msra.mxu0 %v1347
  %1369 = vmatmul.f32.gmra.mxu0 %v1349
  %v1370 = vpop.f32.mrf.mxu0
  %v1371 = vadd.f32 0.0, %v1370
  %1372 = vmatmul.f32.gmra.mxu0 %v1351
  %v1373 = vpop.f32.mrf.mxu0
  %v1374 = vadd.f32 0.0, %v1373
  %1375 = vdwg.mxu0
  %v1376 = vadd.f32 %v1337, %v1371
  %v1377 = vadd.f32 %v1340, %v1374
  %1378 = vrot.lane.b32.xlu0 %v1276, 104
  %v1379 = vpop.permute.xlu0 %1378
  %1380 = vrot.lane.b32.xlu0 %v1277, 104
  %v1381 = vpop.permute.xlu0 %1380
  %1382 = vrot.lane.b32.xlu0 %v1275, 122
  %v1383 = vpop.permute.xlu0 %1382
  %v1385 = vsel %vm1192, %v1379, 0
  %v1387 = vsel %vm1192, %v1381, 0
  %1389 = vmatpush.msra.mxu0 0.0
  %1390 = vmatpush.msra.mxu0 0.0
  %1391 = vmatpush.msra.mxu0 0.0
  %1392 = vmatpush.msra.mxu0 0.0
  %1393 = vmatpush.msra.mxu0 0.0
  %1394 = vmatpush.msra.mxu0 0.0
  %1395 = vmatpush.msra.mxu0 0.0
  %1396 = vmatpush.msra.mxu0 0.0
  %1397 = vmatpush.msra.mxu0 0.0
  %1398 = vmatpush.msra.mxu0 0.0
  %1399 = vmatpush.msra.mxu0 0.0
  %1400 = vmatpush.msra.mxu0 0.0
  %1401 = vmatpush.msra.mxu0 0.0
  %1402 = vmatpush.msra.mxu0 0.0
  %1403 = vmatpush.msra.mxu0 0.0
  %1404 = vmatpush.msra.mxu0 %v1383
  %1405 = vmatmul.f32.gmra.mxu0 %v1385
  %v1406 = vpop.f32.mrf.mxu0
  %v1407 = vadd.f32 0.0, %v1406
  %1408 = vmatmul.f32.gmra.mxu0 %v1387
  %v1409 = vpop.f32.mrf.mxu0
  %v1410 = vadd.f32 0.0, %v1409
  %1411 = vdwg.mxu0
  %v1412 = vadd.f32 %v1376, %v1407
  %v1413 = vadd.f32 %v1377, %v1410
  %1414 = vrot.lane.b32.xlu0 %v1276, 96
  %v1415 = vpop.permute.xlu0 %1414
  %1416 = vrot.lane.b32.xlu0 %v1277, 96
  %v1417 = vpop.permute.xlu0 %1416
  %1418 = vrot.lane.b32.xlu0 %v1275, 120
  %v1419 = vpop.permute.xlu0 %1418
  %v1421 = vsel %vm1192, %v1415, 0
  %v1423 = vsel %vm1192, %v1417, 0
  %1425 = vmatpush.msra.mxu0 0.0
  %1426 = vmatpush.msra.mxu0 0.0
  %1427 = vmatpush.msra.mxu0 0.0
  %1428 = vmatpush.msra.mxu0 0.0
  %1429 = vmatpush.msra.mxu0 0.0
  %1430 = vmatpush.msra.mxu0 0.0
  %1431 = vmatpush.msra.mxu0 0.0
  %1432 = vmatpush.msra.mxu0 0.0
  %1433 = vmatpush.msra.mxu0 0.0
  %1434 = vmatpush.msra.mxu0 0.0
  %1435 = vmatpush.msra.mxu0 0.0
  %1436 = vmatpush.msra.mxu0 0.0
  %1437 = vmatpush.msra.mxu0 0.0
  %1438 = vmatpush.msra.mxu0 0.0
  %1439 = vmatpush.msra.mxu0 0.0
  %1440 = vmatpush.msra.mxu0 %v1419
  %1441 = vmatmul.f32.gmra.mxu0 %v1421
  %v1442 = vpop.f32.mrf.mxu0
  %v1443 = vadd.f32 0.0, %v1442
  %1444 = vmatmul.f32.gmra.mxu0 %v1423
  %v1445 = vpop.f32.mrf.mxu0
  %v1446 = vadd.f32 0.0, %v1445
  %1447 = vdwg.mxu0
  %v1448 = vadd.f32 %v1412, %v1443
  %v1449 = vadd.f32 %v1413, %v1446
  %1450 = vrot.lane.b32.xlu0 %v1276, 88
  %v1451 = vpop.permute.xlu0 %1450
  %1452 = vrot.lane.b32.xlu0 %v1277, 88
  %v1453 = vpop.permute.xlu0 %1452
  %1454 = vrot.lane.b32.xlu0 %v1275, 118
  %v1455 = vpop.permute.xlu0 %1454
  %v1457 = vsel %vm1192, %v1451, 0
  %v1459 = vsel %vm1192, %v1453, 0
  %1461 = vmatpush.msra.mxu0 0.0
  %1462 = vmatpush.msra.mxu0 0.0
  %1463 = vmatpush.msra.mxu0 0.0
  %1464 = vmatpush.msra.mxu0 0.0
  %1465 = vmatpush.msra.mxu0 0.0
  %1466 = vmatpush.msra.mxu0 0.0
  %1467 = vmatpush.msra.mxu0 0.0
  %1468 = vmatpush.msra.mxu0 0.0
  %1469 = vmatpush.msra.mxu0 0.0
  %1470 = vmatpush.msra.mxu0 0.0
  %1471 = vmatpush.msra.mxu0 0.0
  %1472 = vmatpush.msra.mxu0 0.0
  %1473 = vmatpush.msra.mxu0 0.0
  %1474 = vmatpush.msra.mxu0 0.0
  %1475 = vmatpush.msra.mxu0 0.0
  %1476 = vmatpush.msra.mxu0 %v1455
  %1477 = vmatmul.f32.gmra.mxu0 %v1457
  %v1478 = vpop.f32.mrf.mxu0
  %v1479 = vadd.f32 0.0, %v1478
  %1480 = vmatmul.f32.gmra.mxu0 %v1459
  %v1481 = vpop.f32.mrf.mxu0
  %v1482 = vadd.f32 0.0, %v1481
  %1483 = vdwg.mxu0
  %v1484 = vadd.f32 %v1448, %v1479
  %v1485 = vadd.f32 %v1449, %v1482
  %1486 = vrot.lane.b32.xlu0 %v1276, 80
  %v1487 = vpop.permute.xlu0 %1486
  %1488 = vrot.lane.b32.xlu0 %v1277, 80
  %v1489 = vpop.permute.xlu0 %1488
  %1490 = vrot.lane.b32.xlu0 %v1275, 116
  %v1491 = vpop.permute.xlu0 %1490
  %v1493 = vsel %vm1192, %v1487, 0
  %v1495 = vsel %vm1192, %v1489, 0
  %1497 = vmatpush.msra.mxu0 0.0
  %1498 = vmatpush.msra.mxu0 0.0
  %1499 = vmatpush.msra.mxu0 0.0
  %1500 = vmatpush.msra.mxu0 0.0
  %1501 = vmatpush.msra.mxu0 0.0
  %1502 = vmatpush.msra.mxu0 0.0
  %1503 = vmatpush.msra.mxu0 0.0
  %1504 = vmatpush.msra.mxu0 0.0
  %1505 = vmatpush.msra.mxu0 0.0
  %1506 = vmatpush.msra.mxu0 0.0
  %1507 = vmatpush.msra.mxu0 0.0
  %1508 = vmatpush.msra.mxu0 0.0
  %1509 = vmatpush.msra.mxu0 0.0
  %1510 = vmatpush.msra.mxu0 0.0
  %1511 = vmatpush.msra.mxu0 0.0
  %1512 = vmatpush.msra.mxu0 %v1491
  %1513 = vmatmul.f32.gmra.mxu0 %v1493
  %v1514 = vpop.f32.mrf.mxu0
  %v1515 = vadd.f32 0.0, %v1514
  %1516 = vmatmul.f32.gmra.mxu0 %v1495
  %v1517 = vpop.f32.mrf.mxu0
  %v1518 = vadd.f32 0.0, %v1517
  %1519 = vdwg.mxu0
  %v1520 = vadd.f32 %v1484, %v1515
  %v1521 = vadd.f32 %v1485, %v1518
  %1522 = vrot.lane.b32.xlu0 %v1276, 72
  %v1523 = vpop.permute.xlu0 %1522
  %1524 = vrot.lane.b32.xlu0 %v1277, 72
  %v1525 = vpop.permute.xlu0 %1524
  %1526 = vrot.lane.b32.xlu0 %v1275, 114
  %v1527 = vpop.permute.xlu0 %1526
  %v1529 = vsel %vm1192, %v1523, 0
  %v1531 = vsel %vm1192, %v1525, 0
  %1533 = vmatpush.msra.mxu0 0.0
  %1534 = vmatpush.msra.mxu0 0.0
  %1535 = vmatpush.msra.mxu0 0.0
  %1536 = vmatpush.msra.mxu0 0.0
  %1537 = vmatpush.msra.mxu0 0.0
  %1538 = vmatpush.msra.mxu0 0.0
  %1539 = vmatpush.msra.mxu0 0.0
  %1540 = vmatpush.msra.mxu0 0.0
  %1541 = vmatpush.msra.mxu0 0.0
  %1542 = vmatpush.msra.mxu0 0.0
  %1543 = vmatpush.msra.mxu0 0.0
  %1544 = vmatpush.msra.mxu0 0.0
  %1545 = vmatpush.msra.mxu0 0.0
  %1546 = vmatpush.msra.mxu0 0.0
  %1547 = vmatpush.msra.mxu0 0.0
  %1548 = vmatpush.msra.mxu0 %v1527
  %1549 = vmatmul.f32.gmra.mxu0 %v1529
  %v1550 = vpop.f32.mrf.mxu0
  %v1551 = vadd.f32 0.0, %v1550
  %1552 = vmatmul.f32.gmra.mxu0 %v1531
  %v1553 = vpop.f32.mrf.mxu0
  %v1554 = vadd.f32 0.0, %v1553
  %1555 = vdwg.mxu0
  %v1556 = vadd.f32 %v1520, %v1551
  %v1557 = vadd.f32 %v1521, %v1554
  %1558 = vrot.lane.b32.xlu0 %v1276, 64
  %v1559 = vpop.permute.xlu0 %1558
  %1560 = vrot.lane.b32.xlu0 %v1277, 64
  %v1561 = vpop.permute.xlu0 %1560
  %1562 = vrot.lane.b32.xlu0 %v1275, 112
  %v1563 = vpop.permute.xlu0 %1562
  %v1565 = vsel %vm1192, %v1559, 0
  %v1567 = vsel %vm1192, %v1561, 0
  %1569 = vmatpush.msra.mxu0 0.0
  %1570 = vmatpush.msra.mxu0 0.0
  %1571 = vmatpush.msra.mxu0 0.0
  %1572 = vmatpush.msra.mxu0 0.0
  %1573 = vmatpush.msra.mxu0 0.0
  %1574 = vmatpush.msra.mxu0 0.0
  %1575 = vmatpush.msra.mxu0 0.0
  %1576 = vmatpush.msra.mxu0 0.0
  %1577 = vmatpush.msra.mxu0 0.0
  %1578 = vmatpush.msra.mxu0 0.0
  %1579 = vmatpush.msra.mxu0 0.0
  %1580 = vmatpush.msra.mxu0 0.0
  %1581 = vmatpush.msra.mxu0 0.0
  %1582 = vmatpush.msra.mxu0 0.0
  %1583 = vmatpush.msra.mxu0 0.0
  %1584 = vmatpush.msra.mxu0 %v1563
  %1585 = vmatmul.f32.gmra.mxu0 %v1565
  %v1586 = vpop.f32.mrf.mxu0
  %v1587 = vadd.f32 0.0, %v1586
  %1588 = vmatmul.f32.gmra.mxu0 %v1567
  %v1589 = vpop.f32.mrf.mxu0
  %v1590 = vadd.f32 0.0, %v1589
  %1591 = vdwg.mxu0
  %v1592 = vadd.f32 %v1556, %v1587
  %v1593 = vadd.f32 %v1557, %v1590
  %1594 = vrot.lane.b32.xlu0 %v1276, 56
  %v1595 = vpop.permute.xlu0 %1594
  %1596 = vrot.lane.b32.xlu0 %v1277, 56
  %v1597 = vpop.permute.xlu0 %1596
  %1598 = vrot.lane.b32.xlu0 %v1275, 110
  %v1599 = vpop.permute.xlu0 %1598
  %v1601 = vsel %vm1192, %v1595, 0
  %v1603 = vsel %vm1192, %v1597, 0
  %1605 = vmatpush.msra.mxu0 0.0
  %1606 = vmatpush.msra.mxu0 0.0
  %1607 = vmatpush.msra.mxu0 0.0
  %1608 = vmatpush.msra.mxu0 0.0
  %1609 = vmatpush.msra.mxu0 0.0
  %1610 = vmatpush.msra.mxu0 0.0
  %1611 = vmatpush.msra.mxu0 0.0
  %1612 = vmatpush.msra.mxu0 0.0
  %1613 = vmatpush.msra.mxu0 0.0
  %1614 = vmatpush.msra.mxu0 0.0
  %1615 = vmatpush.msra.mxu0 0.0
  %1616 = vmatpush.msra.mxu0 0.0
  %1617 = vmatpush.msra.mxu0 0.0
  %1618 = vmatpush.msra.mxu0 0.0
  %1619 = vmatpush.msra.mxu0 0.0
  %1620 = vmatpush.msra.mxu0 %v1599
  %1621 = vmatmul.f32.gmra.mxu0 %v1601
  %v1622 = vpop.f32.mrf.mxu0
  %v1623 = vadd.f32 0.0, %v1622
  %1624 = vmatmul.f32.gmra.mxu0 %v1603
  %v1625 = vpop.f32.mrf.mxu0
  %v1626 = vadd.f32 0.0, %v1625
  %1627 = vdwg.mxu0
  %v1628 = vadd.f32 %v1592, %v1623
  %v1629 = vadd.f32 %v1593, %v1626
  %1630 = vrot.lane.b32.xlu0 %v1276, 48
  %v1631 = vpop.permute.xlu0 %1630
  %1632 = vrot.lane.b32.xlu0 %v1277, 48
  %v1633 = vpop.permute.xlu0 %1632
  %1634 = vrot.lane.b32.xlu0 %v1275, 108
  %v1635 = vpop.permute.xlu0 %1634
  %v1637 = vsel %vm1192, %v1631, 0
  %v1639 = vsel %vm1192, %v1633, 0
  %1641 = vmatpush.msra.mxu0 0.0
  %1642 = vmatpush.msra.mxu0 0.0
  %1643 = vmatpush.msra.mxu0 0.0
  %1644 = vmatpush.msra.mxu0 0.0
  %1645 = vmatpush.msra.mxu0 0.0
  %1646 = vmatpush.msra.mxu0 0.0
  %1647 = vmatpush.msra.mxu0 0.0
  %1648 = vmatpush.msra.mxu0 0.0
  %1649 = vmatpush.msra.mxu0 0.0
  %1650 = vmatpush.msra.mxu0 0.0
  %1651 = vmatpush.msra.mxu0 0.0
  %1652 = vmatpush.msra.mxu0 0.0
  %1653 = vmatpush.msra.mxu0 0.0
  %1654 = vmatpush.msra.mxu0 0.0
  %1655 = vmatpush.msra.mxu0 0.0
  %1656 = vmatpush.msra.mxu0 %v1635
  %1657 = vmatmul.f32.gmra.mxu0 %v1637
  %v1658 = vpop.f32.mrf.mxu0
  %v1659 = vadd.f32 0.0, %v1658
  %1660 = vmatmul.f32.gmra.mxu0 %v1639
  %v1661 = vpop.f32.mrf.mxu0
  %v1662 = vadd.f32 0.0, %v1661
  %1663 = vdwg.mxu0
  %v1664 = vadd.f32 %v1628, %v1659
  %v1665 = vadd.f32 %v1629, %v1662
  %1666 = vrot.lane.b32.xlu0 %v1276, 40
  %v1667 = vpop.permute.xlu0 %1666
  %1668 = vrot.lane.b32.xlu0 %v1277, 40
  %v1669 = vpop.permute.xlu0 %1668
  %1670 = vrot.lane.b32.xlu0 %v1275, 106
  %v1671 = vpop.permute.xlu0 %1670
  %v1673 = vsel %vm1192, %v1667, 0
  %v1675 = vsel %vm1192, %v1669, 0
  %1677 = vmatpush.msra.mxu0 0.0
  %1678 = vmatpush.msra.mxu0 0.0
  %1679 = vmatpush.msra.mxu0 0.0
  %1680 = vmatpush.msra.mxu0 0.0
  %1681 = vmatpush.msra.mxu0 0.0
  %1682 = vmatpush.msra.mxu0 0.0
  %1683 = vmatpush.msra.mxu0 0.0
  %1684 = vmatpush.msra.mxu0 0.0
  %1685 = vmatpush.msra.mxu0 0.0
  %1686 = vmatpush.msra.mxu0 0.0
  %1687 = vmatpush.msra.mxu0 0.0
  %1688 = vmatpush.msra.mxu0 0.0
  %1689 = vmatpush.msra.mxu0 0.0
  %1690 = vmatpush.msra.mxu0 0.0
  %1691 = vmatpush.msra.mxu0 0.0
  %1692 = vmatpush.msra.mxu0 %v1671
  %1693 = vmatmul.f32.gmra.mxu0 %v1673
  %v1694 = vpop.f32.mrf.mxu0
  %v1695 = vadd.f32 0.0, %v1694
  %1696 = vmatmul.f32.gmra.mxu0 %v1675
  %v1697 = vpop.f32.mrf.mxu0
  %v1698 = vadd.f32 0.0, %v1697
  %1699 = vdwg.mxu0
  %v1700 = vadd.f32 %v1664, %v1695
  %v1701 = vadd.f32 %v1665, %v1698
  %1702 = vrot.lane.b32.xlu0 %v1276, 32
  %v1703 = vpop.permute.xlu0 %1702
  %1704 = vrot.lane.b32.xlu0 %v1277, 32
  %v1705 = vpop.permute.xlu0 %1704
  %1706 = vrot.lane.b32.xlu0 %v1275, 104
  %v1707 = vpop.permute.xlu0 %1706
  %v1709 = vsel %vm1192, %v1703, 0
  %v1711 = vsel %vm1192, %v1705, 0
  %1713 = vmatpush.msra.mxu0 0.0
  %1714 = vmatpush.msra.mxu0 0.0
  %1715 = vmatpush.msra.mxu0 0.0
  %1716 = vmatpush.msra.mxu0 0.0
  %1717 = vmatpush.msra.mxu0 0.0
  %1718 = vmatpush.msra.mxu0 0.0
  %1719 = vmatpush.msra.mxu0 0.0
  %1720 = vmatpush.msra.mxu0 0.0
  %1721 = vmatpush.msra.mxu0 0.0
  %1722 = vmatpush.msra.mxu0 0.0
  %1723 = vmatpush.msra.mxu0 0.0
  %1724 = vmatpush.msra.mxu0 0.0
  %1725 = vmatpush.msra.mxu0 0.0
  %1726 = vmatpush.msra.mxu0 0.0
  %1727 = vmatpush.msra.mxu0 0.0
  %1728 = vmatpush.msra.mxu0 %v1707
  %1729 = vmatmul.f32.gmra.mxu0 %v1709
  %v1730 = vpop.f32.mrf.mxu0
  %v1731 = vadd.f32 0.0, %v1730
  %1732 = vmatmul.f32.gmra.mxu0 %v1711
  %v1733 = vpop.f32.mrf.mxu0
  %v1734 = vadd.f32 0.0, %v1733
  %1735 = vdwg.mxu0
  %v1736 = vadd.f32 %v1700, %v1731
  %v1737 = vadd.f32 %v1701, %v1734
  %1738 = vrot.lane.b32.xlu0 %v1276, 24
  %v1739 = vpop.permute.xlu0 %1738
  %1740 = vrot.lane.b32.xlu0 %v1277, 24
  %v1741 = vpop.permute.xlu0 %1740
  %1742 = vrot.lane.b32.xlu0 %v1275, 102
  %v1743 = vpop.permute.xlu0 %1742
  %v1745 = vsel %vm1192, %v1739, 0
  %v1747 = vsel %vm1192, %v1741, 0
  %1749 = vmatpush.msra.mxu0 0.0
  %1750 = vmatpush.msra.mxu0 0.0
  %1751 = vmatpush.msra.mxu0 0.0
  %1752 = vmatpush.msra.mxu0 0.0
  %1753 = vmatpush.msra.mxu0 0.0
  %1754 = vmatpush.msra.mxu0 0.0
  %1755 = vmatpush.msra.mxu0 0.0
  %1756 = vmatpush.msra.mxu0 0.0
  %1757 = vmatpush.msra.mxu0 0.0
  %1758 = vmatpush.msra.mxu0 0.0
  %1759 = vmatpush.msra.mxu0 0.0
  %1760 = vmatpush.msra.mxu0 0.0
  %1761 = vmatpush.msra.mxu0 0.0
  %1762 = vmatpush.msra.mxu0 0.0
  %1763 = vmatpush.msra.mxu0 0.0
  %1764 = vmatpush.msra.mxu0 %v1743
  %1765 = vmatmul.f32.gmra.mxu0 %v1745
  %v1766 = vpop.f32.mrf.mxu0
  %v1767 = vadd.f32 0.0, %v1766
  %1768 = vmatmul.f32.gmra.mxu0 %v1747
  %v1769 = vpop.f32.mrf.mxu0
  %v1770 = vadd.f32 0.0, %v1769
  %1771 = vdwg.mxu0
  %v1772 = vadd.f32 %v1736, %v1767
  %v1773 = vadd.f32 %v1737, %v1770
  %1774 = vrot.lane.b32.xlu0 %v1276, 16
  %v1775 = vpop.permute.xlu0 %1774
  %1776 = vrot.lane.b32.xlu0 %v1277, 16
  %v1777 = vpop.permute.xlu0 %1776
  %1778 = vrot.lane.b32.xlu0 %v1275, 100
  %v1779 = vpop.permute.xlu0 %1778
  %v1781 = vsel %vm1192, %v1775, 0
  %v1783 = vsel %vm1192, %v1777, 0
  %1785 = vmatpush.msra.mxu0 0.0
  %1786 = vmatpush.msra.mxu0 0.0
  %1787 = vmatpush.msra.mxu0 0.0
  %1788 = vmatpush.msra.mxu0 0.0
  %1789 = vmatpush.msra.mxu0 0.0
  %1790 = vmatpush.msra.mxu0 0.0
  %1791 = vmatpush.msra.mxu0 0.0
  %1792 = vmatpush.msra.mxu0 0.0
  %1793 = vmatpush.msra.mxu0 0.0
  %1794 = vmatpush.msra.mxu0 0.0
  %1795 = vmatpush.msra.mxu0 0.0
  %1796 = vmatpush.msra.mxu0 0.0
  %1797 = vmatpush.msra.mxu0 0.0
  %1798 = vmatpush.msra.mxu0 0.0
  %1799 = vmatpush.msra.mxu0 0.0
  %1800 = vmatpush.msra.mxu0 %v1779
  %1801 = vmatmul.f32.gmra.mxu0 %v1781
  %v1802 = vpop.f32.mrf.mxu0
  %v1803 = vadd.f32 0.0, %v1802
  %1804 = vmatmul.f32.gmra.mxu0 %v1783
  %v1805 = vpop.f32.mrf.mxu0
  %v1806 = vadd.f32 0.0, %v1805
  %1807 = vdwg.mxu0
  %v1808 = vadd.f32 %v1772, %v1803
  %v1809 = vadd.f32 %v1773, %v1806
  %1810 = vrot.lane.b32.xlu0 %v1276, 8
  %v1811 = vpop.permute.xlu0 %1810
  %1812 = vrot.lane.b32.xlu0 %v1277, 8
  %v1813 = vpop.permute.xlu0 %1812
  %1814 = vrot.lane.b32.xlu0 %v1275, 98
  %v1815 = vpop.permute.xlu0 %1814
  %v1817 = vsel %vm1192, %v1811, 0
  %v1819 = vsel %vm1192, %v1813, 0
  %1821 = vmatpush.msra.mxu0 0.0
  %1822 = vmatpush.msra.mxu0 0.0
  %1823 = vmatpush.msra.mxu0 0.0
  %1824 = vmatpush.msra.mxu0 0.0
  %1825 = vmatpush.msra.mxu0 0.0
  %1826 = vmatpush.msra.mxu0 0.0
  %1827 = vmatpush.msra.mxu0 0.0
  %1828 = vmatpush.msra.mxu0 0.0
  %1829 = vmatpush.msra.mxu0 0.0
  %1830 = vmatpush.msra.mxu0 0.0
  %1831 = vmatpush.msra.mxu0 0.0
  %1832 = vmatpush.msra.mxu0 0.0
  %1833 = vmatpush.msra.mxu0 0.0
  %1834 = vmatpush.msra.mxu0 0.0
  %1835 = vmatpush.msra.mxu0 0.0
  %1836 = vmatpush.msra.mxu0 %v1815
  %1837 = vmatmul.f32.gmra.mxu0 %v1817
  %v1838 = vpop.f32.mrf.mxu0
  %v1839 = vadd.f32 0.0, %v1838
  %1840 = vmatmul.f32.gmra.mxu0 %v1819
  %v1841 = vpop.f32.mrf.mxu0
  %v1842 = vadd.f32 0.0, %v1841
  %1843 = vdwg.mxu0
  %v1844 = vadd.f32 %v1808, %v1839
  %v1845 = vadd.f32 %v1809, %v1842
  %v1846 = vld [vmem:[%s35] sm:$0xff]
  %v1847 = vld [vmem:[%s35 + $0x8] sm:$0xff]
  %1849 = vset.pattern.permute.xlu0 0
  %1850 = vperm.xlu0 %1849, %v1846
  %v1851 = vpop.permute.xlu0 %1850
  %1854 = vset.pattern.permute.xlu0 0
  %1855 = vperm.xlu0 %1854, %v1847
  %v1856 = vpop.permute.xlu0 %1855
  %v1858 = vadd.f32 %v1844, %v1851
  %v1859 = vadd.f32 %v1845, %v1856
  %v1860 = vmul.f32 %v1858, 0.5
  %v1861 = vmul.f32 %v1859, 0.5
  %v1862 = vmul.f32 %v1858, 0.044715
  %v1863 = vmul.f32 %v1859, 0.044715
  %v1864 = vmul.f32 %v1862, %v1858
  %v1865 = vmul.f32 %v1863, %v1859
  %v1866 = vmul.f32 %v1864, %v1858
  %v1867 = vmul.f32 %v1865, %v1859
  %v1868 = vadd.f32 %v1858, %v1866
  %v1869 = vadd.f32 %v1859, %v1867
  %v1870 = vmul.f32 %v1868, 0.7978846
  %v1871 = vmul.f32 %v1869, 0.7978846
  %v1872 = vtanh.pop %v1870
  %v1873 = vtanh.pop %v1871
  %v1874 = vadd.f32 %v1872, 1.0
  %v1875 = vadd.f32 %v1873, 1.0
  %v1876 = vmul.f32 %v1860, %v1874
  %v1877 = vmul.f32 %v1861, %v1875
  %vm1878 = vcmask 15360
  %1879 = vst.msk [vmem:[%s67] sm:$0xff] %vm1878, %v1876
  %1880 = vst.msk [vmem:[%s67 + $0x8] sm:$0xff] %vm1878, %v1877
  %v1881 = vld [vmem:[%s37] sm:$0xff]
  %v1882 = vld [vmem:[%s37 + $0x8] sm:$0xff]
  %v1883 = vld [vmem:[%s37 + $0x10] sm:$0xff]
  %v1884 = vld [vmem:[%s37 + $0x18] sm:$0xff]
  %v1885 = vld [vmem:[%s37 + $0x20] sm:$0xff]
  %v1886 = vld [vmem:[%s37 + $0x28] sm:$0xff]
  %v1887 = vld [vmem:[%s37 + $0x30] sm:$0xff]
  %v1888 = vld [vmem:[%s37 + $0x38] sm:$0xff]
  %v1889 = vld [vmem:[%s37 + $0x40] sm:$0xff]
  %v1890 = vld [vmem:[%s37 + $0x48] sm:$0xff]
  %v1891 = vld [vmem:[%s37 + $0x50] sm:$0xff]
  %v1892 = vld [vmem:[%s37 + $0x58] sm:$0xff]
  %v1893 = vld [vmem:[%s37 + $0x60] sm:$0xff]
  %v1894 = vld [vmem:[%s37 + $0x68] sm:$0xff]
  %v1895 = vld [vmem:[%s37 + $0x70] sm:$0xff]
  %v1896 = vld [vmem:[%s37 + $0x78] sm:$0xff]
  %v1897 = vld [vmem:[%s39] sm:$0xff]
  %v1898 = vld [vmem:[%s39 + $0x8] sm:$0xff]
  %v1899 = vld [vmem:[%s39 + $0x10] sm:$0xff]
  %v1900 = vld [vmem:[%s39 + $0x18] sm:$0xff]
  %v1901 = vld [vmem:[%s39 + $0x20] sm:$0xff]
  %v1902 = vld [vmem:[%s39 + $0x28] sm:$0xff]
  %v1903 = vld [vmem:[%s39 + $0x30] sm:$0xff]
  %v1904 = vld [vmem:[%s39 + $0x38] sm:$0xff]
  %v1905 = vld [vmem:[%s39 + $0x40] sm:$0xff]
  %v1906 = vld [vmem:[%s39 + $0x48] sm:$0xff]
  %v1907 = vld [vmem:[%s39 + $0x50] sm:$0xff]
  %v1908 = vld [vmem:[%s39 + $0x58] sm:$0xff]
  %v1909 = vld [vmem:[%s39 + $0x60] sm:$0xff]
  %v1910 = vld [vmem:[%s39 + $0x68] sm:$0xff]
  %v1911 = vld [vmem:[%s39 + $0x70] sm:$0xff]
  %v1912 = vld [vmem:[%s39 + $0x78] sm:$0xff]
  %1914 = vset.pattern.permute.xlu0 0
  %1915 = vperm.xlu0 %1914, %v1897
  %v1916 = vpop.permute.xlu0 %1915
  %1919 = vset.pattern.permute.xlu0 0
  %1920 = vperm.xlu0 %1919, %v1898
  %v1921 = vpop.permute.xlu0 %1920
  %1924 = vset.pattern.permute.xlu0 0
  %1925 = vperm.xlu0 %1924, %v1899
  %v1926 = vpop.permute.xlu0 %1925
  %1929 = vset.pattern.permute.xlu0 0
  %1930 = vperm.xlu0 %1929, %v1900
  %v1931 = vpop.permute.xlu0 %1930
  %1934 = vset.pattern.permute.xlu0 0
  %1935 = vperm.xlu0 %1934, %v1901
  %v1936 = vpop.permute.xlu0 %1935
  %1939 = vset.pattern.permute.xlu0 0
  %1940 = vperm.xlu0 %1939, %v1902
  %v1941 = vpop.permute.xlu0 %1940
  %1944 = vset.pattern.permute.xlu0 0
  %1945 = vperm.xlu0 %1944, %v1903
  %v1946 = vpop.permute.xlu0 %1945
  %1949 = vset.pattern.permute.xlu0 0
  %1950 = vperm.xlu0 %1949, %v1904
  %v1951 = vpop.permute.xlu0 %1950
  %1954 = vset.pattern.permute.xlu0 0
  %1955 = vperm.xlu0 %1954, %v1905
  %v1956 = vpop.permute.xlu0 %1955
  %1959 = vset.pattern.permute.xlu0 0
  %1960 = vperm.xlu0 %1959, %v1906
  %v1961 = vpop.permute.xlu0 %1960
  %1964 = vset.pattern.permute.xlu0 0
  %1965 = vperm.xlu0 %1964, %v1907
  %v1966 = vpop.permute.xlu0 %1965
  %1969 = vset.pattern.permute.xlu0 0
  %1970 = vperm.xlu0 %1969, %v1908
  %v1971 = vpop.permute.xlu0 %1970
  %1974 = vset.pattern.permute.xlu0 0
  %1975 = vperm.xlu0 %1974, %v1909
  %v1976 = vpop.permute.xlu0 %1975
  %1979 = vset.pattern.permute.xlu0 0
  %1980 = vperm.xlu0 %1979, %v1910
  %v1981 = vpop.permute.xlu0 %1980
  %1984 = vset.pattern.permute.xlu0 0
  %1985 = vperm.xlu0 %1984, %v1911
  %v1986 = vpop.permute.xlu0 %1985
  %1989 = vset.pattern.permute.xlu0 0
  %1990 = vperm.xlu0 %1989, %v1912
  %v1991 = vpop.permute.xlu0 %1990
  %vm1993 = vcmask 130048
  %v1995 = vsel %vm1993, %v1881, 0
  %v1998 = vsel %vm1993, %v1882, 0
  %v2001 = vsel %vm1993, %v1883, 0
  %v2004 = vsel %vm1993, %v1884, 0
  %v2007 = vsel %vm1993, %v1885, 0
  %v2010 = vsel %vm1993, %v1886, 0
  %v2013 = vsel %vm1993, %v1887, 0
  %v2016 = vsel %vm1993, %v1888, 0
  %v2019 = vsel %vm1993, %v1889, 0
  %v2022 = vsel %vm1993, %v1890, 0
  %v2025 = vsel %vm1993, %v1891, 0
  %v2028 = vsel %vm1993, %v1892, 0
  %v2031 = vsel %vm1993, %v1893, 0
  %v2034 = vsel %vm1993, %v1894, 0
  %v2037 = vsel %vm1993, %v1895, 0
  %v2040 = vsel %vm1993, %v1896, 0
  %2042 = vmatpush.msra.mxu0 0.0
  %2043 = vmatpush.msra.mxu0 0.0
  %2044 = vmatpush.msra.mxu0 0.0
  %2045 = vmatpush.msra.mxu0 0.0
  %2046 = vmatpush.msra.mxu0 0.0
  %2047 = vmatpush.msra.mxu0 0.0
  %2048 = vmatpush.msra.mxu0 0.0
  %2049 = vmatpush.msra.mxu0 0.0
  %2050 = vmatpush.msra.mxu0 0.0
  %2051 = vmatpush.msra.mxu0 0.0
  %2052 = vmatpush.msra.mxu0 0.0
  %2053 = vmatpush.msra.mxu0 0.0
  %2054 = vmatpush.msra.mxu0 0.0
  %2055 = vmatpush.msra.mxu0 0.0
  %2056 = vmatpush.msra.mxu0 %v1877
  %2057 = vmatpush.msra.mxu0 %v1876
  %2058 = vmatmul.f32.gmra.mxu0 %v1995
  %v2059 = vpop.f32.mrf.mxu0
  %v2060 = vadd.f32 %v1916, %v2059
  %2061 = vmatmul.f32.gmra.mxu0 %v1998
  %v2062 = vpop.f32.mrf.mxu0
  %v2063 = vadd.f32 %v1921, %v2062
  %2064 = vmatmul.f32.gmra.mxu0 %v2001
  %v2065 = vpop.f32.mrf.mxu0
  %v2066 = vadd.f32 %v1926, %v2065
  %2067 = vmatmul.f32.gmra.mxu0 %v2004
  %v2068 = vpop.f32.mrf.mxu0
  %v2069 = vadd.f32 %v1931, %v2068
  %2070 = vmatmul.f32.gmra.mxu0 %v2007
  %v2071 = vpop.f32.mrf.mxu0
  %v2072 = vadd.f32 %v1936, %v2071
  %2073 = vmatmul.f32.gmra.mxu0 %v2010
  %v2074 = vpop.f32.mrf.mxu0
  %v2075 = vadd.f32 %v1941, %v2074
  %2076 = vmatmul.f32.gmra.mxu0 %v2013
  %v2077 = vpop.f32.mrf.mxu0
  %v2078 = vadd.f32 %v1946, %v2077
  %2079 = vmatmul.f32.gmra.mxu0 %v2016
  %v2080 = vpop.f32.mrf.mxu0
  %v2081 = vadd.f32 %v1951, %v2080
  %2082 = vmatmul.f32.gmra.mxu0 %v2019
  %v2083 = vpop.f32.mrf.mxu0
  %v2084 = vadd.f32 %v1956, %v2083
  %2085 = vmatmul.f32.gmra.mxu0 %v2022
  %v2086 = vpop.f32.mrf.mxu0
  %v2087 = vadd.f32 %v1961, %v2086
  %2088 = vmatmul.f32.gmra.mxu0 %v2025
  %v2089 = vpop.f32.mrf.mxu0
  %v2090 = vadd.f32 %v1966, %v2089
  %2091 = vmatmul.f32.gmra.mxu0 %v2028
  %v2092 = vpop.f32.mrf.mxu0
  %v2093 = vadd.f32 %v1971, %v2092
  %2094 = vmatmul.f32.gmra.mxu0 %v2031
  %v2095 = vpop.f32.mrf.mxu0
  %v2096 = vadd.f32 %v1976, %v2095
  %2097 = vmatmul.f32.gmra.mxu0 %v2034
  %v2098 = vpop.f32.mrf.mxu0
  %v2099 = vadd.f32 %v1981, %v2098
  %2100 = vmatmul.f32.gmra.mxu0 %v2037
  %v2101 = vpop.f32.mrf.mxu0
  %v2102 = vadd.f32 %v1986, %v2101
  %2103 = vmatmul.f32.gmra.mxu0 %v2040
  %v2104 = vpop.f32.mrf.mxu0
  %v2105 = vadd.f32 %v1991, %v2104
  %2106 = vdwg.mxu0
  %v2107 = vmul.f32 %v2060, 0.5
  %v2108 = vmul.f32 %v2063, 0.5
  %v2109 = vmul.f32 %v2066, 0.5
  %v2110 = vmul.f32 %v2069, 0.5
  %v2111 = vmul.f32 %v2072, 0.5
  %v2112 = vmul.f32 %v2075, 0.5
  %v2113 = vmul.f32 %v2078, 0.5
  %v2114 = vmul.f32 %v2081, 0.5
  %v2115 = vmul.f32 %v2084, 0.5
  %v2116 = vmul.f32 %v2087, 0.5
  %v2117 = vmul.f32 %v2090, 0.5
  %v2118 = vmul.f32 %v2093, 0.5
  %v2119 = vmul.f32 %v2096, 0.5
  %v2120 = vmul.f32 %v2099, 0.5
  %v2121 = vmul.f32 %v2102, 0.5
  %v2122 = vmul.f32 %v2105, 0.5
  %v2123 = vmul.f32 %v2060, 0.044715
  %v2124 = vmul.f32 %v2063, 0.044715
  %v2125 = vmul.f32 %v2066, 0.044715
  %v2126 = vmul.f32 %v2069, 0.044715
  %v2127 = vmul.f32 %v2072, 0.044715
  %v2128 = vmul.f32 %v2075, 0.044715
  %v2129 = vmul.f32 %v2078, 0.044715
  %v2130 = vmul.f32 %v2081, 0.044715
  %v2131 = vmul.f32 %v2084, 0.044715
  %v2132 = vmul.f32 %v2087, 0.044715
  %v2133 = vmul.f32 %v2090, 0.044715
  %v2134 = vmul.f32 %v2093, 0.044715
  %v2135 = vmul.f32 %v2096, 0.044715
  %v2136 = vmul.f32 %v2099, 0.044715
  %v2137 = vmul.f32 %v2102, 0.044715
  %v2138 = vmul.f32 %v2105, 0.044715
  %v2139 = vmul.f32 %v2123, %v2060
  %v2140 = vmul.f32 %v2124, %v2063
  %v2141 = vmul.f32 %v2125, %v2066
  %v2142 = vmul.f32 %v2126, %v2069
  %v2143 = vmul.f32 %v2127, %v2072
  %v2144 = vmul.f32 %v2128, %v2075
  %v2145 = vmul.f32 %v2129, %v2078
  %v2146 = vmul.f32 %v2130, %v2081
  %v2147 = vmul.f32 %v2131, %v2084
  %v2148 = vmul.f32 %v2132, %v2087
  %v2149 = vmul.f32 %v2133, %v2090
  %v2150 = vmul.f32 %v2134, %v2093
  %v2151 = vmul.f32 %v2135, %v2096
  %v2152 = vmul.f32 %v2136, %v2099
  %v2153 = vmul.f32 %v2137, %v2102
  %v2154 = vmul.f32 %v2138, %v2105
  %v2155 = vmul.f32 %v2139, %v2060
  %v2156 = vmul.f32 %v2140, %v2063
  %v2157 = vmul.f32 %v2141, %v2066
  %v2158 = vmul.f32 %v2142, %v2069
  %v2159 = vmul.f32 %v2143, %v2072
  %v2160 = vmul.f32 %v2144, %v2075
  %v2161 = vmul.f32 %v2145, %v2078
  %v2162 = vmul.f32 %v2146, %v2081
  %v2163 = vmul.f32 %v2147, %v2084
  %v2164 = vmul.f32 %v2148, %v2087
  %v2165 = vmul.f32 %v2149, %v2090
  %v2166 = vmul.f32 %v2150, %v2093
  %v2167 = vmul.f32 %v2151, %v2096
  %v2168 = vmul.f32 %v2152, %v2099
  %v2169 = vmul.f32 %v2153, %v2102
  %v2170 = vmul.f32 %v2154, %v2105
  %v2171 = vadd.f32 %v2060, %v2155
  %v2172 = vadd.f32 %v2063, %v2156
  %v2173 = vadd.f32 %v2066, %v2157
  %v2174 = vadd.f32 %v2069, %v2158
  %v2175 = vadd.f32 %v2072, %v2159
  %v2176 = vadd.f32 %v2075, %v2160
  %v2177 = vadd.f32 %v2078, %v2161
  %v2178 = vadd.f32 %v2081, %v2162
  %v2179 = vadd.f32 %v2084, %v2163
  %v2180 = vadd.f32 %v2087, %v2164
  %v2181 = vadd.f32 %v2090, %v2165
  %v2182 = vadd.f32 %v2093, %v2166
  %v2183 = vadd.f32 %v2096, %v2167
  %v2184 = vadd.f32 %v2099, %v2168
  %v2185 = vadd.f32 %v2102, %v2169
  %v2186 = vadd.f32 %v2105, %v2170
  %v2187 = vmul.f32 %v2171, 0.7978846
  %v2188 = vmul.f32 %v2172, 0.7978846
  %v2189 = vmul.f32 %v2173, 0.7978846
  %v2190 = vmul.f32 %v2174, 0.7978846
  %v2191 = vmul.f32 %v2175, 0.7978846
  %v2192 = vmul.f32 %v2176, 0.7978846
  %v2193 = vmul.f32 %v2177, 0.7978846
  %v2194 = vmul.f32 %v2178, 0.7978846
  %v2195 = vmul.f32 %v2179, 0.7978846
  %v2196 = vmul.f32 %v2180, 0.7978846
  %v2197 = vmul.f32 %v2181, 0.7978846
  %v2198 = vmul.f32 %v2182, 0.7978846
  %v2199 = vmul.f32 %v2183, 0.7978846
  %v2200 = vmul.f32 %v2184, 0.7978846
  %v2201 = vmul.f32 %v2185, 0.7978846
  %v2202 = vmul.f32 %v2186, 0.7978846
  %v2203 = vtanh.pop %v2187
  %v2204 = vtanh.pop %v2188
  %v2205 = vtanh.pop %v2189
  %v2206 = vtanh.pop %v2190
  %v2207 = vtanh.pop %v2191
  %v2208 = vtanh.pop %v2192
  %v2209 = vtanh.pop %v2193
  %v2210 = vtanh.pop %v2194
  %v2211 = vtanh.pop %v2195
  %v2212 = vtanh.pop %v2196
  %v2213 = vtanh.pop %v2197
  %v2214 = vtanh.pop %v2198
  %v2215 = vtanh.pop %v2199
  %v2216 = vtanh.pop %v2200
  %v2217 = vtanh.pop %v2201
  %v2218 = vtanh.pop %v2202
  %v2219 = vadd.f32 %v2203, 1.0
  %v2220 = vadd.f32 %v2204, 1.0
  %v2221 = vadd.f32 %v2205, 1.0
  %v2222 = vadd.f32 %v2206, 1.0
  %v2223 = vadd.f32 %v2207, 1.0
  %v2224 = vadd.f32 %v2208, 1.0
  %v2225 = vadd.f32 %v2209, 1.0
  %v2226 = vadd.f32 %v2210, 1.0
  %v2227 = vadd.f32 %v2211, 1.0
  %v2228 = vadd.f32 %v2212, 1.0
  %v2229 = vadd.f32 %v2213, 1.0
  %v2230 = vadd.f32 %v2214, 1.0
  %v2231 = vadd.f32 %v2215, 1.0
  %v2232 = vadd.f32 %v2216, 1.0
  %v2233 = vadd.f32 %v2217, 1.0
  %v2234 = vadd.f32 %v2218, 1.0
  %v2235 = vmul.f32 %v2107, %v2219
  %v2236 = vmul.f32 %v2108, %v2220
  %v2237 = vmul.f32 %v2109, %v2221
  %v2238 = vmul.f32 %v2110, %v2222
  %v2239 = vmul.f32 %v2111, %v2223
  %v2240 = vmul.f32 %v2112, %v2224
  %v2241 = vmul.f32 %v2113, %v2225
  %v2242 = vmul.f32 %v2114, %v2226
  %v2243 = vmul.f32 %v2115, %v2227
  %v2244 = vmul.f32 %v2116, %v2228
  %v2245 = vmul.f32 %v2117, %v2229
  %v2246 = vmul.f32 %v2118, %v2230
  %v2247 = vmul.f32 %v2119, %v2231
  %v2248 = vmul.f32 %v2120, %v2232
  %v2249 = vmul.f32 %v2121, %v2233
  %v2250 = vmul.f32 %v2122, %v2234
  %2251 = vst.msk [vmem:[#allocation2] sm:$0xff] %vm1878, %v2235
  %2253 = vrot.lane.b32.xlu0 %v2236, 2
  %v2254 = vpop.permute.xlu0 %2253
  %vm2256 = vcmask 31760
  %2257 = vst.msk [vmem:[#allocation2] sm:$0xff] %vm2256, %v2254
  %2259 = vrot.lane.b32.xlu0 %v2237, 4
  %v2260 = vpop.permute.xlu0 %2259
  %vm2262 = vcmask 48160
  %2263 = vst.msk [vmem:[#allocation2] sm:$0xff] %vm2262, %v2260
  %2265 = vrot.lane.b32.xlu0 %v2238, 6
  %v2266 = vpop.permute.xlu0 %2265
  %vm2268 = vcmask 64560
  %2269 = vst.msk [vmem:[#allocation2] sm:$0xff] %vm2268, %v2266
  %2271 = vrot.lane.b32.xlu0 %v2239, 8
  %v2272 = vpop.permute.xlu0 %2271
  %vm2274 = vcmask 80960
  %2275 = vst.msk [vmem:[#allocation2] sm:$0xff] %vm2274, %v2272
  %2277 = vrot.lane.b32.xlu0 %v2240, 10
  %v2278 = vpop.permute.xlu0 %2277
  %vm2280 = vcmask 97360
  %2281 = vst.msk [vmem:[#allocation2] sm:$0xff] %vm2280, %v2278
  %2283 = vrot.lane.b32.xlu0 %v2241, 12
  %v2284 = vpop.permute.xlu0 %2283
  %vm2286 = vcmask 113760
  %2287 = vst.msk [vmem:[#allocation2] sm:$0xff] %vm2286, %v2284
  %2289 = vrot.lane.b32.xlu0 %v2242, 14
  %v2290 = vpop.permute.xlu0 %2289
  %vm2292 = vcmask 130160
  %2293 = vst.msk [vmem:[#allocation2] sm:$0xff] %vm2292, %v2290
  %2295 = vrot.lane.b32.xlu0 %v2243, 16
  %v2296 = vpop.permute.xlu0 %2295
  %vm2298 = vcmask 146560
  %2299 = vst.msk [vmem:[#allocation2] sm:$0xff] %vm2298, %v2296
  %2301 = vrot.lane.b32.xlu0 %v2244, 18
  %v2302 = vpop.permute.xlu0 %2301
  %vm2304 = vcmask 162960
  %2305 = vst.msk [vmem:[#allocation2] sm:$0xff] %vm2304, %v2302
  %2307 = vrot.lane.b32.xlu0 %v2245, 20
  %v2308 = vpop.permute.xlu0 %2307
  %vm2310 = vcmask 179360
  %2311 = vst.msk [vmem:[#allocation2] sm:$0xff] %vm2310, %v2308
  %2313 = vrot.lane.b32.xlu0 %v2246, 22
  %v2314 = vpop.permute.xlu0 %2313
  %vm2316 = vcmask 195760
  %2317 = vst.msk [vmem:[#allocation2] sm:$0xff] %vm2316, %v2314
  %2319 = vrot.lane.b32.xlu0 %v2247, 24
  %v2320 = vpop.permute.xlu0 %2319
  %vm2322 = vcmask 212160
  %2323 = vst.msk [vmem:[#allocation2] sm:$0xff] %vm2322, %v2320
  %2325 = vrot.lane.b32.xlu0 %v2248, 26
  %v2326 = vpop.permute.xlu0 %2325
  %vm2328 = vcmask 228560
  %2329 = vst.msk [vmem:[#allocation2] sm:$0xff] %vm2328, %v2326
  %2331 = vrot.lane.b32.xlu0 %v2249, 28
  %v2332 = vpop.permute.xlu0 %2331
  %vm2334 = vcmask 244960
  %2335 = vst.msk [vmem:[#allocation2] sm:$0xff] %vm2334, %v2332
  %2337 = vrot.lane.b32.xlu0 %v2250, 30
  %v2338 = vpop.permute.xlu0 %2337
  %vm2340 = vcmask 261360
  %2341 = vst.msk [vmem:[#allocation2] sm:$0xff] %vm2340, %v2338
  %v2342 = vld [vmem:[#allocation2] sm:$0xff]
  %v2343 = vld [vmem:[%s41] sm:$0xff]
  %v2344 = vld [vmem:[%s41 + $0x8] sm:$0xff]
  %v2345 = vld [vmem:[%s41 + $0x10] sm:$0xff]
  %v2346 = vld [vmem:[%s41 + $0x18] sm:$0xff]
  %v2347 = vld [vmem:[%s43] sm:$0xff]
  %v2348 = vld [vmem:[%s43 + $0x8] sm:$0xff]
  %v2349 = vld [vmem:[%s43 + $0x10] sm:$0xff]
  %v2350 = vld [vmem:[%s43 + $0x18] sm:$0xff]
  %2352 = vset.pattern.permute.xlu0 0
  %2353 = vperm.xlu0 %2352, %v2347
  %v2354 = vpop.permute.xlu0 %2353
  %2357 = vset.pattern.permute.xlu0 0
  %2358 = vperm.xlu0 %2357, %v2348
  %v2359 = vpop.permute.xlu0 %2358
  %2362 = vset.pattern.permute.xlu0 0
  %2363 = vperm.xlu0 %2362, %v2349
  %v2364 = vpop.permute.xlu0 %2363
  %2367 = vset.pattern.permute.xlu0 0
  %2368 = vperm.xlu0 %2367, %v2350
  %v2369 = vpop.permute.xlu0 %2368
  %v2372 = vsel %vm1192, %v2343, 0
  %v2375 = vsel %vm1192, %v2344, 0
  %v2378 = vsel %vm1192, %v2345, 0
  %v2381 = vsel %vm1192, %v2346, 0
  %2383 = vmatpush.msra.mxu0 0.0
  %2384 = vmatpush.msra.mxu0 0.0
  %2385 = vmatpush.msra.mxu0 0.0
  %2386 = vmatpush.msra.mxu0 0.0
  %2387 = vmatpush.msra.mxu0 0.0
  %2388 = vmatpush.msra.mxu0 0.0
  %2389 = vmatpush.msra.mxu0 0.0
  %2390 = vmatpush.msra.mxu0 0.0
  %2391 = vmatpush.msra.mxu0 0.0
  %2392 = vmatpush.msra.mxu0 0.0
  %2393 = vmatpush.msra.mxu0 0.0
  %2394 = vmatpush.msra.mxu0 0.0
  %2395 = vmatpush.msra.mxu0 0.0
  %2396 = vmatpush.msra.mxu0 0.0
  %2397 = vmatpush.msra.mxu0 0.0
  %2398 = vmatpush.msra.mxu0 %v2342
  %2399 = vmatmul.f32.gmra.mxu0 %v2372
  %v2400 = vpop.f32.mrf.mxu0
  %v2401 = vadd.f32 %v2354, %v2400
  %2402 = vmatmul.f32.gmra.mxu0 %v2375
  %v2403 = vpop.f32.mrf.mxu0
  %v2404 = vadd.f32 %v2359, %v2403
  %2405 = vmatmul.f32.gmra.mxu0 %v2378
  %v2406 = vpop.f32.mrf.mxu0
  %v2407 = vadd.f32 %v2364, %v2406
  %2408 = vmatmul.f32.gmra.mxu0 %v2381
  %v2409 = vpop.f32.mrf.mxu0
  %v2410 = vadd.f32 %v2369, %v2409
  %2411 = vdwg.mxu0
  %v2412 = vmul.f32 %v2401, 0.5
  %v2413 = vmul.f32 %v2404, 0.5
  %v2414 = vmul.f32 %v2407, 0.5
  %v2415 = vmul.f32 %v2410, 0.5
  %v2416 = vmul.f32 %v2401, 0.044715
  %v2417 = vmul.f32 %v2404, 0.044715
  %v2418 = vmul.f32 %v2407, 0.044715
  %v2419 = vmul.f32 %v2410, 0.044715
  %v2420 = vmul.f32 %v2416, %v2401
  %v2421 = vmul.f32 %v2417, %v2404
  %v2422 = vmul.f32 %v2418, %v2407
  %v2423 = vmul.f32 %v2419, %v2410
  %v2424 = vmul.f32 %v2420, %v2401
  %v2425 = vmul.f32 %v2421, %v2404
  %v2426 = vmul.f32 %v2422, %v2407
  %v2427 = vmul.f32 %v2423, %v2410
  %v2428 = vadd.f32 %v2401, %v2424
  %v2429 = vadd.f32 %v2404, %v2425
  %v2430 = vadd.f32 %v2407, %v2426
  %v2431 = vadd.f32 %v2410, %v2427
  %v2432 = vmul.f32 %v2428, 0.7978846
  %v2433 = vmul.f32 %v2429, 0.7978846
  %v2434 = vmul.f32 %v2430, 0.7978846
  %v2435 = vmul.f32 %v2431, 0.7978846
  %v2436 = vtanh.pop %v2432
  %v2437 = vtanh.pop %v2433
  %v2438 = vtanh.pop %v2434
  %v2439 = vtanh.pop %v2435
  %v2440 = vadd.f32 %v2436, 1.0
  %v2441 = vadd.f32 %v2437, 1.0
  %v2442 = vadd.f32 %v2438, 1.0
  %v2443 = vadd.f32 %v2439, 1.0
  %v2444 = vmul.f32 %v2412, %v2440
  %v2445 = vmul.f32 %v2413, %v2441
  %v2446 = vmul.f32 %v2414, %v2442
  %v2447 = vmul.f32 %v2415, %v2443
  %v2448 = vld [vmem:[%s45] sm:$0xff]
  %v2449 = vld [vmem:[%s45 + $0x8] sm:$0xff]
  %v2450 = vld [vmem:[%s45 + $0x10] sm:$0xff]
  %v2451 = vld [vmem:[%s45 + $0x18] sm:$0xff]
  %v2452 = vsel %vm347, %v2444, 0.0
  %2453 = vadd.xlane.f32.xlu0 %v2452
  %v2454 = vpop.xlane.xlu0 %2453
  %v2455 = vsel %vm347, %v2445, 0.0
  %2456 = vadd.xlane.f32.xlu0 %v2455
  %v2457 = vpop.xlane.xlu0 %2456
  %v2458 = vsel %vm347, %v2446, 0.0
  %2459 = vadd.xlane.f32.xlu0 %v2458
  %v2460 = vpop.xlane.xlu0 %2459
  %v2461 = vsel %vm347, %v2447, 0.0
  %2462 = vadd.xlane.f32.xlu0 %v2461
  %v2463 = vpop.xlane.xlu0 %2462
  %v2465 = vsel %vm347, %v2448, 0
  %v2468 = vsel %vm347, %v2449, 0
  %v2471 = vsel %vm347, %v2450, 0
  %v2474 = vsel %vm347, %v2451, 0
  %2476 = vmatpush.msra.mxu0 0.0
  %2477 = vmatpush.msra.mxu0 0.0
  %2478 = vmatpush.msra.mxu0 0.0
  %2479 = vmatpush.msra.mxu0 0.0
  %2480 = vmatpush.msra.mxu0 0.0
  %2481 = vmatpush.msra.mxu0 0.0
  %2482 = vmatpush.msra.mxu0 0.0
  %2483 = vmatpush.msra.mxu0 0.0
  %2484 = vmatpush.msra.mxu0 0.0
  %2485 = vmatpush.msra.mxu0 0.0
  %2486 = vmatpush.msra.mxu0 0.0
  %2487 = vmatpush.msra.mxu0 0.0
  %2488 = vmatpush.msra.mxu0 %v2463
  %2489 = vmatpush.msra.mxu0 %v2460
  %2490 = vmatpush.msra.mxu0 %v2457
  %2491 = vmatpush.msra.mxu0 %v2454
  %2492 = vmatmul.f32.gmra.mxu0 %v2465
  %v2493 = vpop.f32.mrf.mxu0
  %v2494 = vadd.f32 0.0, %v2493
  %2495 = vmatmul.f32.gmra.mxu0 %v2468
  %v2496 = vpop.f32.mrf.mxu0
  %v2497 = vadd.f32 0.0, %v2496
  %2498 = vmatmul.f32.gmra.mxu0 %v2471
  %v2499 = vpop.f32.mrf.mxu0
  %v2500 = vadd.f32 0.0, %v2499
  %2501 = vmatmul.f32.gmra.mxu0 %v2474
  %v2502 = vpop.f32.mrf.mxu0
  %v2503 = vadd.f32 0.0, %v2502
  %2504 = vdwg.mxu0
  %2506 = vset.pattern.permute.xlu0 0
  %2507 = vperm.xlu0 %2506, %v2494
  %v2508 = vpop.permute.xlu0 %2507
  %2511 = vset.pattern.permute.xlu0 0
  %2512 = vperm.xlu0 %2511, %v2497
  %v2513 = vpop.permute.xlu0 %2512
  %2516 = vset.pattern.permute.xlu0 0
  %2517 = vperm.xlu0 %2516, %v2500
  %v2518 = vpop.permute.xlu0 %2517
  %2521 = vset.pattern.permute.xlu0 0
  %2522 = vperm.xlu0 %2521, %v2503
  %v2523 = vpop.permute.xlu0 %2522
  %v2525 = vsub.f32 %v2444, %v2508
  %v2526 = vsub.f32 %v2445, %v2513
  %v2527 = vsub.f32 %v2446, %v2518
  %v2528 = vsub.f32 %v2447, %v2523
  %v2529 = vmul.f32 %v2525, %v2525
  %v2530 = vmul.f32 %v2526, %v2526
  %v2531 = vmul.f32 %v2527, %v2527
  %v2532 = vmul.f32 %v2528, %v2528
  %v2533 = vsel %vm347, %v2529, 0.0
  %2534 = vadd.xlane.f32.xlu0 %v2533
  %v2535 = vpop.xlane.xlu0 %2534
  %v2536 = vsel %vm347, %v2530, 0.0
  %2537 = vadd.xlane.f32.xlu0 %v2536
  %v2538 = vpop.xlane.xlu0 %2537
  %v2539 = vsel %vm347, %v2531, 0.0
  %2540 = vadd.xlane.f32.xlu0 %v2539
  %v2541 = vpop.xlane.xlu0 %2540
  %v2542 = vsel %vm347, %v2532, 0.0
  %2543 = vadd.xlane.f32.xlu0 %v2542
  %v2544 = vpop.xlane.xlu0 %2543
  %2545 = vmatpush.msra.mxu0 0.0
  %2546 = vmatpush.msra.mxu0 0.0
  %2547 = vmatpush.msra.mxu0 0.0
  %2548 = vmatpush.msra.mxu0 0.0
  %2549 = vmatpush.msra.mxu0 0.0
  %2550 = vmatpush.msra.mxu0 0.0
  %2551 = vmatpush.msra.mxu0 0.0
  %2552 = vmatpush.msra.mxu0 0.0
  %2553 = vmatpush.msra.mxu0 0.0
  %2554 = vmatpush.msra.mxu0 0.0
  %2555 = vmatpush.msra.mxu0 0.0
  %2556 = vmatpush.msra.mxu0 0.0
  %2557 = vmatpush.msra.mxu0 %v2544
  %2558 = vmatpush.msra.mxu0 %v2541
  %2559 = vmatpush.msra.mxu0 %v2538
  %2560 = vmatpush.msra.mxu0 %v2535
  %2561 = vmatmul.f32.gmra.mxu0 %v2465
  %v2562 = vpop.f32.mrf.mxu0
  %v2563 = vadd.f32 1e-05, %v2562
  %2564 = vmatmul.f32.gmra.mxu0 %v2468
  %v2565 = vpop.f32.mrf.mxu0
  %v2566 = vadd.f32 1e-05, %v2565
  %2567 = vmatmul.f32.gmra.mxu0 %v2471
  %v2568 = vpop.f32.mrf.mxu0
  %v2569 = vadd.f32 1e-05, %v2568
  %2570 = vmatmul.f32.gmra.mxu0 %v2474
  %v2571 = vpop.f32.mrf.mxu0
  %v2572 = vadd.f32 1e-05, %v2571
  %2573 = vdwg.mxu0
  %v2574 = vrsqrt.pop %v2563
  %v2575 = vmul.f32 %v2574, %v2563
  %v2576 = vmul.f32 %v2575, %v2574
  %v2577 = vmul.f32 0.5, %v2576
  %v2578 = vsub.f32 1.5, %v2577
  %v2579 = vmul.f32 %v2574, %v2578
  %vm2580 = vweird.f32 %v2563
  %vm2581 = vweird.f32 %v2574
  %vm2582 = vmor %vm2580, %vm2581
  %v2583 = vsel %vm2582, %v2574, %v2579
  %v2584 = vrsqrt.pop %v2566
  %v2585 = vmul.f32 %v2584, %v2566
  %v2586 = vmul.f32 %v2585, %v2584
  %v2587 = vmul.f32 0.5, %v2586
  %v2588 = vsub.f32 1.5, %v2587
  %v2589 = vmul.f32 %v2584, %v2588
  %vm2590 = vweird.f32 %v2566
  %vm2591 = vweird.f32 %v2584
  %vm2592 = vmor %vm2590, %vm2591
  %v2593 = vsel %vm2592, %v2584, %v2589
  %v2594 = vrsqrt.pop %v2569
  %v2595 = vmul.f32 %v2594, %v2569
  %v2596 = vmul.f32 %v2595, %v2594
  %v2597 = vmul.f32 0.5, %v2596
  %v2598 = vsub.f32 1.5, %v2597
  %v2599 = vmul.f32 %v2594, %v2598
  %vm2600 = vweird.f32 %v2569
  %vm2601 = vweird.f32 %v2594
  %vm2602 = vmor %vm2600, %vm2601
  %v2603 = vsel %vm2602, %v2594, %v2599
  %v2604 = vrsqrt.pop %v2572
  %v2605 = vmul.f32 %v2604, %v2572
  %v2606 = vmul.f32 %v2605, %v2604
  %v2607 = vmul.f32 0.5, %v2606
  %v2608 = vsub.f32 1.5, %v2607
  %v2609 = vmul.f32 %v2604, %v2608
  %vm2610 = vweird.f32 %v2572
  %vm2611 = vweird.f32 %v2604
  %vm2612 = vmor %vm2610, %vm2611
  %v2613 = vsel %vm2612, %v2604, %v2609
  %2615 = vset.pattern.permute.xlu0 0
  %2616 = vperm.xlu0 %2615, %v2583
  %v2617 = vpop.permute.xlu0 %2616
  %2620 = vset.pattern.permute.xlu0 0
  %2621 = vperm.xlu0 %2620, %v2593
  %v2622 = vpop.permute.xlu0 %2621
  %2625 = vset.pattern.permute.xlu0 0
  %2626 = vperm.xlu0 %2625, %v2603
  %v2627 = vpop.permute.xlu0 %2626
  %2630 = vset.pattern.permute.xlu0 0
  %2631 = vperm.xlu0 %2630, %v2613
  %v2632 = vpop.permute.xlu0 %2631
  %v2634 = vmul.f32 %v2525, %v2617
  %v2635 = vmul.f32 %v2526, %v2622
  %v2636 = vmul.f32 %v2527, %v2627
  %v2637 = vmul.f32 %v2528, %v2632
  %v2638 = vld [vmem:[%s47] sm:$0xff]
  %v2639 = vld [vmem:[%s47 + $0x8] sm:$0xff]
  %v2640 = vld [vmem:[%s47 + $0x10] sm:$0xff]
  %v2641 = vld [vmem:[%s47 + $0x18] sm:$0xff]
  %2643 = vset.pattern.permute.xlu0 0
  %2644 = vperm.xlu0 %2643, %v2638
  %v2645 = vpop.permute.xlu0 %2644
  %2648 = vset.pattern.permute.xlu0 0
  %2649 = vperm.xlu0 %2648, %v2639
  %v2650 = vpop.permute.xlu0 %2649
  %2653 = vset.pattern.permute.xlu0 0
  %2654 = vperm.xlu0 %2653, %v2640
  %v2655 = vpop.permute.xlu0 %2654
  %2658 = vset.pattern.permute.xlu0 0
  %2659 = vperm.xlu0 %2658, %v2641
  %v2660 = vpop.permute.xlu0 %2659
  %v2662 = vmul.f32 %v2634, %v2645
  %v2663 = vmul.f32 %v2635, %v2650
  %v2664 = vmul.f32 %v2636, %v2655
  %v2665 = vmul.f32 %v2637, %v2660
  %v2666 = vld [vmem:[%s49] sm:$0xff]
  %v2667 = vld [vmem:[%s49 + $0x8] sm:$0xff]
  %v2668 = vld [vmem:[%s49 + $0x10] sm:$0xff]
  %v2669 = vld [vmem:[%s49 + $0x18] sm:$0xff]
  %2671 = vset.pattern.permute.xlu0 0
  %2672 = vperm.xlu0 %2671, %v2666
  %v2673 = vpop.permute.xlu0 %2672
  %2676 = vset.pattern.permute.xlu0 0
  %2677 = vperm.xlu0 %2676, %v2667
  %v2678 = vpop.permute.xlu0 %2677
  %2681 = vset.pattern.permute.xlu0 0
  %2682 = vperm.xlu0 %2681, %v2668
  %v2683 = vpop.permute.xlu0 %2682
  %2686 = vset.pattern.permute.xlu0 0
  %2687 = vperm.xlu0 %2686, %v2669
  %v2688 = vpop.permute.xlu0 %2687
  %v2690 = vadd.f32 %v2662, %v2673
  %v2691 = vadd.f32 %v2663, %v2678
  %v2692 = vadd.f32 %v2664, %v2683
  %v2693 = vadd.f32 %v2665, %v2688
  %v2694 = vld [vmem:[%s51] sm:$0xff]
  %v2695 = vld [vmem:[%s51 + $0x8] sm:$0xff]
  %v2696 = vld [vmem:[%s51 + $0x10] sm:$0xff]
  %v2697 = vld [vmem:[%s51 + $0x18] sm:$0xff]
  %v2698 = vld [vmem:[%s51 + $0x20] sm:$0xff]
  %v2699 = vld [vmem:[%s51 + $0x28] sm:$0xff]
  %v2700 = vld [vmem:[%s51 + $0x30] sm:$0xff]
  %v2701 = vld [vmem:[%s51 + $0x38] sm:$0xff]
  %v2702 = vld [vmem:[%s53] sm:$0xff]
  %v2703 = vld [vmem:[%s53 + $0x8] sm:$0xff]
  %v2704 = vld [vmem:[%s53 + $0x10] sm:$0xff]
  %v2705 = vld [vmem:[%s53 + $0x18] sm:$0xff]
  %v2706 = vld [vmem:[%s53 + $0x20] sm:$0xff]
  %v2707 = vld [vmem:[%s53 + $0x28] sm:$0xff]
  %v2708 = vld [vmem:[%s53 + $0x30] sm:$0xff]
  %v2709 = vld [vmem:[%s53 + $0x38] sm:$0xff]
  %2711 = vset.pattern.permute.xlu0 0
  %2712 = vperm.xlu0 %2711, %v2702
  %v2713 = vpop.permute.xlu0 %2712
  %2716 = vset.pattern.permute.xlu0 0
  %2717 = vperm.xlu0 %2716, %v2703
  %v2718 = vpop.permute.xlu0 %2717
  %2721 = vset.pattern.permute.xlu0 0
  %2722 = vperm.xlu0 %2721, %v2704
  %v2723 = vpop.permute.xlu0 %2722
  %2726 = vset.pattern.permute.xlu0 0
  %2727 = vperm.xlu0 %2726, %v2705
  %v2728 = vpop.permute.xlu0 %2727
  %2731 = vset.pattern.permute.xlu0 0
  %2732 = vperm.xlu0 %2731, %v2706
  %v2733 = vpop.permute.xlu0 %2732
  %2736 = vset.pattern.permute.xlu0 0
  %2737 = vperm.xlu0 %2736, %v2707
  %v2738 = vpop.permute.xlu0 %2737
  %2741 = vset.pattern.permute.xlu0 0
  %2742 = vperm.xlu0 %2741, %v2708
  %v2743 = vpop.permute.xlu0 %2742
  %2746 = vset.pattern.permute.xlu0 0
  %2747 = vperm.xlu0 %2746, %v2709
  %v2748 = vpop.permute.xlu0 %2747
  %v2751 = vsel %vm347, %v2694, 0
  %v2754 = vsel %vm347, %v2695, 0
  %v2757 = vsel %vm347, %v2696, 0
  %v2760 = vsel %vm347, %v2697, 0
  %v2763 = vsel %vm347, %v2698, 0
  %v2766 = vsel %vm347, %v2699, 0
  %v2769 = vsel %vm347, %v2700, 0
  %v2772 = vsel %vm347, %v2701, 0
  %2774 = vmatpush.msra.mxu0 0.0
  %2775 = vmatpush.msra.mxu0 0.0
  %2776 = vmatpush.msra.mxu0 0.0
  %2777 = vmatpush.msra.mxu0 0.0
  %2778 = vmatpush.msra.mxu0 0.0
  %2779 = vmatpush.msra.mxu0 0.0
  %2780 = vmatpush.msra.mxu0 0.0
  %2781 = vmatpush.msra.mxu0 0.0
  %2782 = vmatpush.msra.mxu0 0.0
  %2783 = vmatpush.msra.mxu0 0.0
  %2784 = vmatpush.msra.mxu0 0.0
  %2785 = vmatpush.msra.mxu0 0.0
  %2786 = vmatpush.msra.mxu0 %v2693
  %2787 = vmatpush.msra.mxu0 %v2692
  %2788 = vmatpush.msra.mxu0 %v2691
  %2789 = vmatpush.msra.mxu0 %v2690
  %2790 = vmatmul.f32.gmra.mxu0 %v2751
  %v2791 = vpop.f32.mrf.mxu0
  %v2792 = vadd.f32 %v2713, %v2791
  %2793 = vmatmul.f32.gmra.mxu0 %v2754
  %v2794 = vpop.f32.mrf.mxu0
  %v2795 = vadd.f32 %v2718, %v2794
  %2796 = vmatmul.f32.gmra.mxu0 %v2757
  %v2797 = vpop.f32.mrf.mxu0
  %v2798 = vadd.f32 %v2723, %v2797
  %2799 = vmatmul.f32.gmra.mxu0 %v2760
  %v2800 = vpop.f32.mrf.mxu0
  %v2801 = vadd.f32 %v2728, %v2800
  %2802 = vmatmul.f32.gmra.mxu0 %v2763
  %v2803 = vpop.f32.mrf.mxu0
  %v2804 = vadd.f32 %v2733, %v2803
  %2805 = vmatmul.f32.gmra.mxu0 %v2766
  %v2806 = vpop.f32.mrf.mxu0
  %v2807 = vadd.f32 %v2738, %v2806
  %2808 = vmatmul.f32.gmra.mxu0 %v2769
  %v2809 = vpop.f32.mrf.mxu0
  %v2810 = vadd.f32 %v2743, %v2809
  %2811 = vmatmul.f32.gmra.mxu0 %v2772
  %v2812 = vpop.f32.mrf.mxu0
  %v2813 = vadd.f32 %v2748, %v2812
  %2814 = vdwg.mxu0
  %v2815 = vmul.f32 %v2792, 0.5
  %v2816 = vmul.f32 %v2795, 0.5
  %v2817 = vmul.f32 %v2798, 0.5
  %v2818 = vmul.f32 %v2801, 0.5
  %v2819 = vmul.f32 %v2804, 0.5
  %v2820 = vmul.f32 %v2807, 0.5
  %v2821 = vmul.f32 %v2810, 0.5
  %v2822 = vmul.f32 %v2813, 0.5
  %v2823 = vmul.f32 %v2792, 0.044715
  %v2824 = vmul.f32 %v2795, 0.044715
  %v2825 = vmul.f32 %v2798, 0.044715
  %v2826 = vmul.f32 %v2801, 0.044715
  %v2827 = vmul.f32 %v2804, 0.044715
  %v2828 = vmul.f32 %v2807, 0.044715
  %v2829 = vmul.f32 %v2810, 0.044715
  %v2830 = vmul.f32 %v2813, 0.044715
  %v2831 = vmul.f32 %v2823, %v2792
  %v2832 = vmul.f32 %v2824, %v2795
  %v2833 = vmul.f32 %v2825, %v2798
  %v2834 = vmul.f32 %v2826, %v2801
  %v2835 = vmul.f32 %v2827, %v2804
  %v2836 = vmul.f32 %v2828, %v2807
  %v2837 = vmul.f32 %v2829, %v2810
  %v2838 = vmul.f32 %v2830, %v2813
  %v2839 = vmul.f32 %v2831, %v2792
  %v2840 = vmul.f32 %v2832, %v2795
  %v2841 = vmul.f32 %v2833, %v2798
  %v2842 = vmul.f32 %v2834, %v2801
  %v2843 = vmul.f32 %v2835, %v2804
  %v2844 = vmul.f32 %v2836, %v2807
  %v2845 = vmul.f32 %v2837, %v2810
  %v2846 = vmul.f32 %v2838, %v2813
  %v2847 = vadd.f32 %v2792, %v2839
  %v2848 = vadd.f32 %v2795, %v2840
  %v2849 = vadd.f32 %v2798, %v2841
  %v2850 = vadd.f32 %v2801, %v2842
  %v2851 = vadd.f32 %v2804, %v2843
  %v2852 = vadd.f32 %v2807, %v2844
  %v2853 = vadd.f32 %v2810, %v2845
  %v2854 = vadd.f32 %v2813, %v2846
  %v2855 = vmul.f32 %v2847, 0.7978846
  %v2856 = vmul.f32 %v2848, 0.7978846
  %v2857 = vmul.f32 %v2849, 0.7978846
  %v2858 = vmul.f32 %v2850, 0.7978846
  %v2859 = vmul.f32 %v2851, 0.7978846
  %v2860 = vmul.f32 %v2852, 0.7978846
  %v2861 = vmul.f32 %v2853, 0.7978846
  %v2862 = vmul.f32 %v2854, 0.7978846
  %v2863 = vtanh.pop %v2855
  %v2864 = vtanh.pop %v2856
  %v2865 = vtanh.pop %v2857
  %v2866 = vtanh.pop %v2858
  %v2867 = vtanh.pop %v2859
  %v2868 = vtanh.pop %v2860
  %v2869 = vtanh.pop %v2861
  %v2870 = vtanh.pop %v2862
  %v2871 = vadd.f32 %v2863, 1.0
  %v2872 = vadd.f32 %v2864, 1.0
  %v2873 = vadd.f32 %v2865, 1.0
  %v2874 = vadd.f32 %v2866, 1.0
  %v2875 = vadd.f32 %v2867, 1.0
  %v2876 = vadd.f32 %v2868, 1.0
  %v2877 = vadd.f32 %v2869, 1.0
  %v2878 = vadd.f32 %v2870, 1.0
  %v2879 = vmul.f32 %v2815, %v2871
  %v2880 = vmul.f32 %v2816, %v2872
  %v2881 = vmul.f32 %v2817, %v2873
  %v2882 = vmul.f32 %v2818, %v2874
  %v2883 = vmul.f32 %v2819, %v2875
  %v2884 = vmul.f32 %v2820, %v2876
  %v2885 = vmul.f32 %v2821, %v2877
  %v2886 = vmul.f32 %v2822, %v2878
  %v2887 = vld [vmem:[%s55] sm:$0xff]
  %v2888 = vld [vmem:[%s55 + $0x8] sm:$0xff]
  %v2889 = vld [vmem:[%s55 + $0x10] sm:$0xff]
  %v2890 = vld [vmem:[%s55 + $0x18] sm:$0xff]
  %v2891 = vld [vmem:[%s55 + $0x20] sm:$0xff]
  %v2892 = vld [vmem:[%s55 + $0x28] sm:$0xff]
  %v2893 = vld [vmem:[%s55 + $0x30] sm:$0xff]
  %v2894 = vld [vmem:[%s55 + $0x38] sm:$0xff]
  %v2895 = vsel %vm347, %v2879, 0.0
  %2896 = vadd.xlane.f32.xlu0 %v2895
  %v2897 = vpop.xlane.xlu0 %2896
  %v2898 = vsel %vm347, %v2880, 0.0
  %2899 = vadd.xlane.f32.xlu0 %v2898
  %v2900 = vpop.xlane.xlu0 %2899
  %v2901 = vsel %vm347, %v2881, 0.0
  %2902 = vadd.xlane.f32.xlu0 %v2901
  %v2903 = vpop.xlane.xlu0 %2902
  %v2904 = vsel %vm347, %v2882, 0.0
  %2905 = vadd.xlane.f32.xlu0 %v2904
  %v2906 = vpop.xlane.xlu0 %2905
  %v2907 = vsel %vm347, %v2883, 0.0
  %2908 = vadd.xlane.f32.xlu0 %v2907
  %v2909 = vpop.xlane.xlu0 %2908
  %v2910 = vsel %vm347, %v2884, 0.0
  %2911 = vadd.xlane.f32.xlu0 %v2910
  %v2912 = vpop.xlane.xlu0 %2911
  %v2913 = vsel %vm347, %v2885, 0.0
  %2914 = vadd.xlane.f32.xlu0 %v2913
  %v2915 = vpop.xlane.xlu0 %2914
  %v2916 = vsel %vm347, %v2886, 0.0
  %2917 = vadd.xlane.f32.xlu0 %v2916
  %v2918 = vpop.xlane.xlu0 %2917
  %v2920 = vsel %vm201, %v2887, 0
  %v2923 = vsel %vm201, %v2888, 0
  %v2926 = vsel %vm201, %v2889, 0
  %v2929 = vsel %vm201, %v2890, 0
  %v2932 = vsel %vm201, %v2891, 0
  %v2935 = vsel %vm201, %v2892, 0
  %v2938 = vsel %vm201, %v2893, 0
  %v2941 = vsel %vm201, %v2894, 0
  %2943 = vmatpush.msra.mxu0 0.0
  %2944 = vmatpush.msra.mxu0 0.0
  %2945 = vmatpush.msra.mxu0 0.0
  %2946 = vmatpush.msra.mxu0 0.0
  %2947 = vmatpush.msra.mxu0 0.0
  %2948 = vmatpush.msra.mxu0 0.0
  %2949 = vmatpush.msra.mxu0 0.0
  %2950 = vmatpush.msra.mxu0 0.0
  %2951 = vmatpush.msra.mxu0 %v2918
  %2952 = vmatpush.msra.mxu0 %v2915
  %2953 = vmatpush.msra.mxu0 %v2912
  %2954 = vmatpush.msra.mxu0 %v2909
  %2955 = vmatpush.msra.mxu0 %v2906
  %2956 = vmatpush.msra.mxu0 %v2903
  %2957 = vmatpush.msra.mxu0 %v2900
  %2958 = vmatpush.msra.mxu0 %v2897
  %2959 = vmatmul.f32.gmra.mxu0 %v2920
  %v2960 = vpop.f32.mrf.mxu0
  %v2961 = vadd.f32 0.0, %v2960
  %2962 = vmatmul.f32.gmra.mxu0 %v2923
  %v2963 = vpop.f32.mrf.mxu0
  %v2964 = vadd.f32 0.0, %v2963
  %2965 = vmatmul.f32.gmra.mxu0 %v2926
  %v2966 = vpop.f32.mrf.mxu0
  %v2967 = vadd.f32 0.0, %v2966
  %2968 = vmatmul.f32.gmra.mxu0 %v2929
  %v2969 = vpop.f32.mrf.mxu0
  %v2970 = vadd.f32 0.0, %v2969
  %2971 = vmatmul.f32.gmra.mxu0 %v2932
  %v2972 = vpop.f32.mrf.mxu0
  %v2973 = vadd.f32 0.0, %v2972
  %2974 = vmatmul.f32.gmra.mxu0 %v2935
  %v2975 = vpop.f32.mrf.mxu0
  %v2976 = vadd.f32 0.0, %v2975
  %2977 = vmatmul.f32.gmra.mxu0 %v2938
  %v2978 = vpop.f32.mrf.mxu0
  %v2979 = vadd.f32 0.0, %v2978
  %2980 = vmatmul.f32.gmra.mxu0 %v2941
  %v2981 = vpop.f32.mrf.mxu0
  %v2982 = vadd.f32 0.0, %v2981
  %2983 = vdwg.mxu0
  %2985 = vset.pattern.permute.xlu0 0
  %2986 = vperm.xlu0 %2985, %v2961
  %v2987 = vpop.permute.xlu0 %2986
  %2990 = vset.pattern.permute.xlu0 0
  %2991 = vperm.xlu0 %2990, %v2964
  %v2992 = vpop.permute.xlu0 %2991
  %2995 = vset.pattern.permute.xlu0 0
  %2996 = vperm.xlu0 %2995, %v2967
  %v2997 = vpop.permute.xlu0 %2996
  %3000 = vset.pattern.permute.xlu0 0
  %3001 = vperm.xlu0 %3000, %v2970
  %v3002 = vpop.permute.xlu0 %3001
  %3005 = vset.pattern.permute.xlu0 0
  %3006 = vperm.xlu0 %3005, %v2973
  %v3007 = vpop.permute.xlu0 %3006
  %3010 = vset.pattern.permute.xlu0 0
  %3011 = vperm.xlu0 %3010, %v2976
  %v3012 = vpop.permute.xlu0 %3011
  %3015 = vset.pattern.permute.xlu0 0
  %3016 = vperm.xlu0 %3015, %v2979
  %v3017 = vpop.permute.xlu0 %3016
  %3020 = vset.pattern.permute.xlu0 0
  %3021 = vperm.xlu0 %3020, %v2982
  %v3022 = vpop.permute.xlu0 %3021
  %v3024 = vsub.f32 %v2879, %v2987
  %v3025 = vsub.f32 %v2880, %v2992
  %v3026 = vsub.f32 %v2881, %v2997
  %v3027 = vsub.f32 %v2882, %v3002
  %v3028 = vsub.f32 %v2883, %v3007
  %v3029 = vsub.f32 %v2884, %v3012
  %v3030 = vsub.f32 %v2885, %v3017
  %v3031 = vsub.f32 %v2886, %v3022
  %v3032 = vmul.f32 %v3024, %v3024
  %v3033 = vmul.f32 %v3025, %v3025
  %v3034 = vmul.f32 %v3026, %v3026
  %v3035 = vmul.f32 %v3027, %v3027
  %v3036 = vmul.f32 %v3028, %v3028
  %v3037 = vmul.f32 %v3029, %v3029
  %v3038 = vmul.f32 %v3030, %v3030
  %v3039 = vmul.f32 %v3031, %v3031
  %v3040 = vsel %vm347, %v3032, 0.0
  %3041 = vadd.xlane.f32.xlu0 %v3040
  %v3042 = vpop.xlane.xlu0 %3041
  %v3043 = vsel %vm347, %v3033, 0.0
  %3044 = vadd.xlane.f32.xlu0 %v3043
  %v3045 = vpop.xlane.xlu0 %3044
  %v3046 = vsel %vm347, %v3034, 0.0
  %3047 = vadd.xlane.f32.xlu0 %v3046
  %v3048 = vpop.xlane.xlu0 %3047
  %v3049 = vsel %vm347, %v3035, 0.0
  %3050 = vadd.xlane.f32.xlu0 %v3049
  %v3051 = vpop.xlane.xlu0 %3050
  %v3052 = vsel %vm347, %v3036, 0.0
  %3053 = vadd.xlane.f32.xlu0 %v3052
  %v3054 = vpop.xlane.xlu0 %3053
  %v3055 = vsel %vm347, %v3037, 0.0
  %3056 = vadd.xlane.f32.xlu0 %v3055
  %v3057 = vpop.xlane.xlu0 %3056
  %v3058 = vsel %vm347, %v3038, 0.0
  %3059 = vadd.xlane.f32.xlu0 %v3058
  %v3060 = vpop.xlane.xlu0 %3059
  %v3061 = vsel %vm347, %v3039, 0.0
  %3062 = vadd.xlane.f32.xlu0 %v3061
  %v3063 = vpop.xlane.xlu0 %3062
  %3064 = vmatpush.msra.mxu0 0.0
  %3065 = vmatpush.msra.mxu0 0.0
  %3066 = vmatpush.msra.mxu0 0.0
  %3067 = vmatpush.msra.mxu0 0.0
  %3068 = vmatpush.msra.mxu0 0.0
  %3069 = vmatpush.msra.mxu0 0.0
  %3070 = vmatpush.msra.mxu0 0.0
  %3071 = vmatpush.msra.mxu0 0.0
  %3072 = vmatpush.msra.mxu0 %v3063
  %3073 = vmatpush.msra.mxu0 %v3060
  %3074 = vmatpush.msra.mxu0 %v3057
  %3075 = vmatpush.msra.mxu0 %v3054
  %3076 = vmatpush.msra.mxu0 %v3051
  %3077 = vmatpush.msra.mxu0 %v3048
  %3078 = vmatpush.msra.mxu0 %v3045
  %3079 = vmatpush.msra.mxu0 %v3042
  %3080 = vmatmul.f32.gmra.mxu0 %v2920
  %v3081 = vpop.f32.mrf.mxu0
  %v3082 = vadd.f32 1e-05, %v3081
  %3083 = vmatmul.f32.gmra.mxu0 %v2923
  %v3084 = vpop.f32.mrf.mxu0
  %v3085 = vadd.f32 1e-05, %v3084
  %3086 = vmatmul.f32.gmra.mxu0 %v2926
  %v3087 = vpop.f32.mrf.mxu0
  %v3088 = vadd.f32 1e-05, %v3087
  %3089 = vmatmul.f32.gmra.mxu0 %v2929
  %v3090 = vpop.f32.mrf.mxu0
  %v3091 = vadd.f32 1e-05, %v3090
  %3092 = vmatmul.f32.gmra.mxu0 %v2932
  %v3093 = vpop.f32.mrf.mxu0
  %v3094 = vadd.f32 1e-05, %v3093
  %3095 = vmatmul.f32.gmra.mxu0 %v2935
  %v3096 = vpop.f32.mrf.mxu0
  %v3097 = vadd.f32 1e-05, %v3096
  %3098 = vmatmul.f32.gmra.mxu0 %v2938
  %v3099 = vpop.f32.mrf.mxu0
  %v3100 = vadd.f32 1e-05, %v3099
  %3101 = vmatmul.f32.gmra.mxu0 %v2941
  %v3102 = vpop.f32.mrf.mxu0
  %v3103 = vadd.f32 1e-05, %v3102
  %3104 = vdwg.mxu0
  %v3105 = vrsqrt.pop %v3082
  %v3106 = vmul.f32 %v3105, %v3082
  %v3107 = vmul.f32 %v3106, %v3105
  %v3108 = vmul.f32 0.5, %v3107
  %v3109 = vsub.f32 1.5, %v3108
  %v3110 = vmul.f32 %v3105, %v3109
  %vm3111 = vweird.f32 %v3082
  %vm3112 = vweird.f32 %v3105
  %vm3113 = vmor %vm3111, %vm3112
  %v3114 = vsel %vm3113, %v3105, %v3110
  %v3115 = vrsqrt.pop %v3085
  %v3116 = vmul.f32 %v3115, %v3085
  %v3117 = vmul.f32 %v3116, %v3115
  %v3118 = vmul.f32 0.5, %v3117
  %v3119 = vsub.f32 1.5, %v3118
  %v3120 = vmul.f32 %v3115, %v3119
  %vm3121 = vweird.f32 %v3085
  %vm3122 = vweird.f32 %v3115
  %vm3123 = vmor %vm3121, %vm3122
  %v3124 = vsel %vm3123, %v3115, %v3120
  %v3125 = vrsqrt.pop %v3088
  %v3126 = vmul.f32 %v3125, %v3088
  %v3127 = vmul.f32 %v3126, %v3125
  %v3128 = vmul.f32 0.5, %v3127
  %v3129 = vsub.f32 1.5, %v3128
  %v3130 = vmul.f32 %v3125, %v3129
  %vm3131 = vweird.f32 %v3088
  %vm3132 = vweird.f32 %v3125
  %vm3133 = vmor %vm3131, %vm3132
  %v3134 = vsel %vm3133, %v3125, %v3130
  %v3135 = vrsqrt.pop %v3091
  %v3136 = vmul.f32 %v3135, %v3091
  %v3137 = vmul.f32 %v3136, %v3135
  %v3138 = vmul.f32 0.5, %v3137
  %v3139 = vsub.f32 1.5, %v3138
  %v3140 = vmul.f32 %v3135, %v3139
  %vm3141 = vweird.f32 %v3091
  %vm3142 = vweird.f32 %v3135
  %vm3143 = vmor %vm3141, %vm3142
  %v3144 = vsel %vm3143, %v3135, %v3140
  %v3145 = vrsqrt.pop %v3094
  %v3146 = vmul.f32 %v3145, %v3094
  %v3147 = vmul.f32 %v3146, %v3145
  %v3148 = vmul.f32 0.5, %v3147
  %v3149 = vsub.f32 1.5, %v3148
  %v3150 = vmul.f32 %v3145, %v3149
  %vm3151 = vweird.f32 %v3094
  %vm3152 = vweird.f32 %v3145
  %vm3153 = vmor %vm3151, %vm3152
  %v3154 = vsel %vm3153, %v3145, %v3150
  %v3155 = vrsqrt.pop %v3097
  %v3156 = vmul.f32 %v3155, %v3097
  %v3157 = vmul.f32 %v3156, %v3155
  %v3158 = vmul.f32 0.5, %v3157
  %v3159 = vsub.f32 1.5, %v3158
  %v3160 = vmul.f32 %v3155, %v3159
  %vm3161 = vweird.f32 %v3097
  %vm3162 = vweird.f32 %v3155
  %vm3163 = vmor %vm3161, %vm3162
  %v3164 = vsel %vm3163, %v3155, %v3160
  %v3165 = vrsqrt.pop %v3100
  %v3166 = vmul.f32 %v3165, %v3100
  %v3167 = vmul.f32 %v3166, %v3165
  %v3168 = vmul.f32 0.5, %v3167
  %v3169 = vsub.f32 1.5, %v3168
  %v3170 = vmul.f32 %v3165, %v3169
  %vm3171 = vweird.f32 %v3100
  %vm3172 = vweird.f32 %v3165
  %vm3173 = vmor %vm3171, %vm3172
  %v3174 = vsel %vm3173, %v3165, %v3170
  %v3175 = vrsqrt.pop %v3103
  %v3176 = vmul.f32 %v3175, %v3103
  %v3177 = vmul.f32 %v3176, %v3175
  %v3178 = vmul.f32 0.5, %v3177
  %v3179 = vsub.f32 1.5, %v3178
  %v3180 = vmul.f32 %v3175, %v3179
  %vm3181 = vweird.f32 %v3103
  %vm3182 = vweird.f32 %v3175
  %vm3183 = vmor %vm3181, %vm3182
  %v3184 = vsel %vm3183, %v3175, %v3180
  %3186 = vset.pattern.permute.xlu0 0
  %3187 = vperm.xlu0 %3186, %v3114
  %v3188 = vpop.permute.xlu0 %3187
  %3191 = vset.pattern.permute.xlu0 0
  %3192 = vperm.xlu0 %3191, %v3124
  %v3193 = vpop.permute.xlu0 %3192
  %3196 = vset.pattern.permute.xlu0 0
  %3197 = vperm.xlu0 %3196, %v3134
  %v3198 = vpop.permute.xlu0 %3197
  %3201 = vset.pattern.permute.xlu0 0
  %3202 = vperm.xlu0 %3201, %v3144
  %v3203 = vpop.permute.xlu0 %3202
  %3206 = vset.pattern.permute.xlu0 0
  %3207 = vperm.xlu0 %3206, %v3154
  %v3208 = vpop.permute.xlu0 %3207
  %3211 = vset.pattern.permute.xlu0 0
  %3212 = vperm.xlu0 %3211, %v3164
  %v3213 = vpop.permute.xlu0 %3212
  %3216 = vset.pattern.permute.xlu0 0
  %3217 = vperm.xlu0 %3216, %v3174
  %v3218 = vpop.permute.xlu0 %3217
  %3221 = vset.pattern.permute.xlu0 0
  %3222 = vperm.xlu0 %3221, %v3184
  %v3223 = vpop.permute.xlu0 %3222
  %v3225 = vmul.f32 %v3024, %v3188
  %v3226 = vmul.f32 %v3025, %v3193
  %v3227 = vmul.f32 %v3026, %v3198
  %v3228 = vmul.f32 %v3027, %v3203
  %v3229 = vmul.f32 %v3028, %v3208
  %v3230 = vmul.f32 %v3029, %v3213
  %v3231 = vmul.f32 %v3030, %v3218
  %v3232 = vmul.f32 %v3031, %v3223
  %v3233 = vld [vmem:[%s57] sm:$0xff]
  %v3234 = vld [vmem:[%s57 + $0x8] sm:$0xff]
  %v3235 = vld [vmem:[%s57 + $0x10] sm:$0xff]
  %v3236 = vld [vmem:[%s57 + $0x18] sm:$0xff]
  %v3237 = vld [vmem:[%s57 + $0x20] sm:$0xff]
  %v3238 = vld [vmem:[%s57 + $0x28] sm:$0xff]
  %v3239 = vld [vmem:[%s57 + $0x30] sm:$0xff]
  %v3240 = vld [vmem:[%s57 + $0x38] sm:$0xff]
  %3242 = vset.pattern.permute.xlu0 0
  %3243 = vperm.xlu0 %3242, %v3233
  %v3244 = vpop.permute.xlu0 %3243
  %3247 = vset.pattern.permute.xlu0 0
  %3248 = vperm.xlu0 %3247, %v3234
  %v3249 = vpop.permute.xlu0 %3248
  %3252 = vset.pattern.permute.xlu0 0
  %3253 = vperm.xlu0 %3252, %v3235
  %v3254 = vpop.permute.xlu0 %3253
  %3257 = vset.pattern.permute.xlu0 0
  %3258 = vperm.xlu0 %3257, %v3236
  %v3259 = vpop.permute.xlu0 %3258
  %3262 = vset.pattern.permute.xlu0 0
  %3263 = vperm.xlu0 %3262, %v3237
  %v3264 = vpop.permute.xlu0 %3263
  %3267 = vset.pattern.permute.xlu0 0
  %3268 = vperm.xlu0 %3267, %v3238
  %v3269 = vpop.permute.xlu0 %3268
  %3272 = vset.pattern.permute.xlu0 0
  %3273 = vperm.xlu0 %3272, %v3239
  %v3274 = vpop.permute.xlu0 %3273
  %3277 = vset.pattern.permute.xlu0 0
  %3278 = vperm.xlu0 %3277, %v3240
  %v3279 = vpop.permute.xlu0 %3278
  %v3281 = vmul.f32 %v3225, %v3244
  %v3282 = vmul.f32 %v3226, %v3249
  %v3283 = vmul.f32 %v3227, %v3254
  %v3284 = vmul.f32 %v3228, %v3259
  %v3285 = vmul.f32 %v3229, %v3264
  %v3286 = vmul.f32 %v3230, %v3269
  %v3287 = vmul.f32 %v3231, %v3274
  %v3288 = vmul.f32 %v3232, %v3279
  %v3289 = vld [vmem:[%s59] sm:$0xff]
  %v3290 = vld [vmem:[%s59 + $0x8] sm:$0xff]
  %v3291 = vld [vmem:[%s59 + $0x10] sm:$0xff]
  %v3292 = vld [vmem:[%s59 + $0x18] sm:$0xff]
  %v3293 = vld [vmem:[%s59 + $0x20] sm:$0xff]
  %v3294 = vld [vmem:[%s59 + $0x28] sm:$0xff]
  %v3295 = vld [vmem:[%s59 + $0x30] sm:$0xff]
  %v3296 = vld [vmem:[%s59 + $0x38] sm:$0xff]
  %3298 = vset.pattern.permute.xlu0 0
  %3299 = vperm.xlu0 %3298, %v3289
  %v3300 = vpop.permute.xlu0 %3299
  %3303 = vset.pattern.permute.xlu0 0
  %3304 = vperm.xlu0 %3303, %v3290
  %v3305 = vpop.permute.xlu0 %3304
  %3308 = vset.pattern.permute.xlu0 0
  %3309 = vperm.xlu0 %3308, %v3291
  %v3310 = vpop.permute.xlu0 %3309
  %3313 = vset.pattern.permute.xlu0 0
  %3314 = vperm.xlu0 %3313, %v3292
  %v3315 = vpop.permute.xlu0 %3314
  %3318 = vset.pattern.permute.xlu0 0
  %3319 = vperm.xlu0 %3318, %v3293
  %v3320 = vpop.permute.xlu0 %3319
  %3323 = vset.pattern.permute.xlu0 0
  %3324 = vperm.xlu0 %3323, %v3294
  %v3325 = vpop.permute.xlu0 %3324
  %3328 = vset.pattern.permute.xlu0 0
  %3329 = vperm.xlu0 %3328, %v3295
  %v3330 = vpop.permute.xlu0 %3329
  %3333 = vset.pattern.permute.xlu0 0
  %3334 = vperm.xlu0 %3333, %v3296
  %v3335 = vpop.permute.xlu0 %3334
  %v3337 = vadd.f32 %v3281, %v3300
  %v3338 = vadd.f32 %v3282, %v3305
  %v3339 = vadd.f32 %v3283, %v3310
  %v3340 = vadd.f32 %v3284, %v3315
  %v3341 = vadd.f32 %v3285, %v3320
  %v3342 = vadd.f32 %v3286, %v3325
  %v3343 = vadd.f32 %v3287, %v3330
  %v3344 = vadd.f32 %v3288, %v3335
  %v3345 = vld [vmem:[%s61] sm:$0xff]
  %v3346 = vld [vmem:[%s61 + $0x8] sm:$0xff]
  %v3347 = vld [vmem:[%s61 + $0x10] sm:$0xff]
  %v3348 = vld [vmem:[%s61 + $0x18] sm:$0xff]
  %v3349 = vld [vmem:[%s61 + $0x20] sm:$0xff]
  %v3350 = vld [vmem:[%s61 + $0x28] sm:$0xff]
  %v3351 = vld [vmem:[%s61 + $0x30] sm:$0xff]
  %v3352 = vld [vmem:[%s61 + $0x38] sm:$0xff]
  %v3353 = vld [vmem:[%s63] sm:$0xff]
  %v3354 = vld [vmem:[%s63 + $0x8] sm:$0xff]
  %v3355 = vld [vmem:[%s63 + $0x10] sm:$0xff]
  %v3356 = vld [vmem:[%s63 + $0x18] sm:$0xff]
  %v3357 = vld [vmem:[%s63 + $0x20] sm:$0xff]
  %v3358 = vld [vmem:[%s63 + $0x28] sm:$0xff]
  %v3359 = vld [vmem:[%s63 + $0x30] sm:$0xff]
  %v3360 = vld [vmem:[%s63 + $0x38] sm:$0xff]
  %3362 = vset.pattern.permute.xlu0 0
  %3363 = vperm.xlu0 %3362, %v3353
  %v3364 = vpop.permute.xlu0 %3363
  %3367 = vset.pattern.permute.xlu0 0
  %3368 = vperm.xlu0 %3367, %v3354
  %v3369 = vpop.permute.xlu0 %3368
  %3372 = vset.pattern.permute.xlu0 0
  %3373 = vperm.xlu0 %3372, %v3355
  %v3374 = vpop.permute.xlu0 %3373
  %3377 = vset.pattern.permute.xlu0 0
  %3378 = vperm.xlu0 %3377, %v3356
  %v3379 = vpop.permute.xlu0 %3378
  %3382 = vset.pattern.permute.xlu0 0
  %3383 = vperm.xlu0 %3382, %v3357
  %v3384 = vpop.permute.xlu0 %3383
  %3387 = vset.pattern.permute.xlu0 0
  %3388 = vperm.xlu0 %3387, %v3358
  %v3389 = vpop.permute.xlu0 %3388
  %3392 = vset.pattern.permute.xlu0 0
  %3393 = vperm.xlu0 %3392, %v3359
  %v3394 = vpop.permute.xlu0 %3393
  %3397 = vset.pattern.permute.xlu0 0
  %3398 = vperm.xlu0 %3397, %v3360
  %v3399 = vpop.permute.xlu0 %3398
  %v3402 = vsel %vm201, %v3345, 0
  %v3405 = vsel %vm201, %v3346, 0
  %v3408 = vsel %vm201, %v3347, 0
  %v3411 = vsel %vm201, %v3348, 0
  %v3414 = vsel %vm201, %v3349, 0
  %v3417 = vsel %vm201, %v3350, 0
  %v3420 = vsel %vm201, %v3351, 0
  %v3423 = vsel %vm201, %v3352, 0
  %3425 = vmatpush.msra.mxu0 0.0
  %3426 = vmatpush.msra.mxu0 0.0
  %3427 = vmatpush.msra.mxu0 0.0
  %3428 = vmatpush.msra.mxu0 0.0
  %3429 = vmatpush.msra.mxu0 0.0
  %3430 = vmatpush.msra.mxu0 0.0
  %3431 = vmatpush.msra.mxu0 0.0
  %3432 = vmatpush.msra.mxu0 0.0
  %3433 = vmatpush.msra.mxu0 %v3344
  %3434 = vmatpush.msra.mxu0 %v3343
  %3435 = vmatpush.msra.mxu0 %v3342
  %3436 = vmatpush.msra.mxu0 %v3341
  %3437 = vmatpush.msra.mxu0 %v3340
  %3438 = vmatpush.msra.mxu0 %v3339
  %3439 = vmatpush.msra.mxu0 %v3338
  %3440 = vmatpush.msra.mxu0 %v3337
  %3441 = vmatmul.f32.gmra.mxu0 %v3402
  %v3442 = vpop.f32.mrf.mxu0
  %v3443 = vadd.f32 %v3364, %v3442
  %3444 = vmatmul.f32.gmra.mxu0 %v3405
  %v3445 = vpop.f32.mrf.mxu0
  %v3446 = vadd.f32 %v3369, %v3445
  %3447 = vmatmul.f32.gmra.mxu0 %v3408
  %v3448 = vpop.f32.mrf.mxu0
  %v3449 = vadd.f32 %v3374, %v3448
  %3450 = vmatmul.f32.gmra.mxu0 %v3411
  %v3451 = vpop.f32.mrf.mxu0
  %v3452 = vadd.f32 %v3379, %v3451
  %3453 = vmatmul.f32.gmra.mxu0 %v3414
  %v3454 = vpop.f32.mrf.mxu0
  %v3455 = vadd.f32 %v3384, %v3454
  %3456 = vmatmul.f32.gmra.mxu0 %v3417
  %v3457 = vpop.f32.mrf.mxu0
  %v3458 = vadd.f32 %v3389, %v3457
  %3459 = vmatmul.f32.gmra.mxu0 %v3420
  %v3460 = vpop.f32.mrf.mxu0
  %v3461 = vadd.f32 %v3394, %v3460
  %3462 = vmatmul.f32.gmra.mxu0 %v3423
  %v3463 = vpop.f32.mrf.mxu0
  %v3464 = vadd.f32 %v3399, %v3463
  %3465 = vdwg.mxu0
  %v3466 = vmul.f32 %v3443, 0.5
  %v3467 = vmul.f32 %v3446, 0.5
  %v3468 = vmul.f32 %v3449, 0.5
  %v3469 = vmul.f32 %v3452, 0.5
  %v3470 = vmul.f32 %v3455, 0.5
  %v3471 = vmul.f32 %v3458, 0.5
  %v3472 = vmul.f32 %v3461, 0.5
  %v3473 = vmul.f32 %v3464, 0.5
  %v3474 = vtanh.pop %v3466
  %v3475 = vtanh.pop %v3467
  %v3476 = vtanh.pop %v3468
  %v3477 = vtanh.pop %v3469
  %v3478 = vtanh.pop %v3470
  %v3479 = vtanh.pop %v3471
  %v3480 = vtanh.pop %v3472
  %v3481 = vtanh.pop %v3473
  %v3482 = vadd.f32 %v3474, 1.0
  %v3483 = vadd.f32 %v3475, 1.0
  %v3484 = vadd.f32 %v3476, 1.0
  %v3485 = vadd.f32 %v3477, 1.0
  %v3486 = vadd.f32 %v3478, 1.0
  %v3487 = vadd.f32 %v3479, 1.0
  %v3488 = vadd.f32 %v3480, 1.0
  %v3489 = vadd.f32 %v3481, 1.0
  %v3490 = vmul.f32 %v3482, 0.5
  %v3491 = vmul.f32 %v3483, 0.5
  %v3492 = vmul.f32 %v3484, 0.5
  %v3493 = vmul.f32 %v3485, 0.5
  %v3494 = vmul.f32 %v3486, 0.5
  %v3495 = vmul.f32 %v3487, 0.5
  %v3496 = vmul.f32 %v3488, 0.5
  %v3497 = vmul.f32 %v3489, 0.5
  %3498 = vst.msk [vmem:[%s65] sm:$0xff] %vm347, %v3490
  %3499 = vst.msk [vmem:[%s65 + $0x8] sm:$0xff] %vm347, %v3491
  %3500 = vst.msk [vmem:[%s65 + $0x10] sm:$0xff] %vm347, %v3492
  %3501 = vst.msk [vmem:[%s65 + $0x18] sm:$0xff] %vm347, %v3493
  %3502 = vst.msk [vmem:[%s65 + $0x20] sm:$0xff] %vm347, %v3494
  %3503 = vst.msk [vmem:[%s65 + $0x28] sm:$0xff] %vm347, %v3495
  %3504 = vst.msk [vmem:[%s65 + $0x30] sm:$0xff] %vm347, %v3496
  %3505 = vst.msk [vmem:[%s65 + $0x38] sm:$0xff] %vm347, %v3497
  // Predicated region
  $region130: #{vae_forward.1} parent=0 // pred_check
    _
  $region131: #{vae_forward.1} parent=0 // pred_check_branch
    %3507 = sbr.rel (0) target = $region133
  $region132: #{vae_forward.1} parent=0 // pred_region
    _
  $region133: #{vae_forward.1} parent=0 // pred_fallthru
    _
  // Predicated region
  $region134: #{vae_forward.1} parent=0 // pred_check
    _
  $region135: #{vae_forward.1} parent=0 // pred_check_branch
    %3509 = sbr.rel (0) target = $region137
  $region136: #{vae_forward.1} parent=0 // pred_region
    _
  $region137: #{vae_forward.1} parent=0 // pred_fallthru
    _
  // Predicated region
  $region138: #{vae_forward.1} parent=0 // pred_check
    _
  $region139: #{vae_forward.1} parent=0 // pred_check_branch
    %3511 = sbr.rel (0) target = $region141
  $region140: #{vae_forward.1} parent=0 // pred_region
    _
  $region141: #{vae_forward.1} parent=0 // pred_fallthru
    _
  // Predicated region
  $region142: #{vae_forward.1} parent=0 // pred_check
    _
  $region143: #{vae_forward.1} parent=0 // pred_check_branch
    %3513 = sbr.rel (0) target = $region145
  $region144: #{vae_forward.1} parent=0 // pred_region
    _
  $region145: #{vae_forward.1} parent=0 // pred_fallthru
    _

</llo_original>
